<compile_context>
chip_gen: v5e
topology: v5e:2x2
jax: 0.10.0
libtpu: 0.0.40
codegen_flags: <defaults>
</compile_context>

<pallas_src>
import functools

import jax
import jax.numpy as jnp
from jax import lax
from jax.experimental import pallas as pl
from jax.experimental.pallas import tpu as pltpu


def _bottleneck_kernel(x_ref, w1_ref, b1_ref, w2_ref, b2_ref, w3_ref, b3_ref,
                       o_ref, pad_ref, patch_ref, *, H, W, Cin, Cw, Cout):
    # ---- conv1x1 (BN1 scale folded into w1) + bias + ReLU -------------------
    # bf16 operands -> MXU, f32 accumulate; bias/ReLU stay f32 on the VPU.
    h1 = jnp.dot(x_ref[...].reshape(H * W, Cin).astype(jnp.bfloat16),
                 w1_ref[...], preferred_element_type=jnp.float32)
    h1 = jnp.maximum(h1 + b1_ref[...], 0.0)                       # (H*W, Cw) f32

    # ---- stage h1 into the padded scratch -----------------------------------
    # Zero only the halo strips; the interior is fully overwritten every step.
    zero_row = jnp.zeros((1, W + 2, Cw), jnp.float32)
    zero_col = jnp.zeros((H, 1, Cw), jnp.float32)
    pad_ref[0:1, :, :] = zero_row
    pad_ref[H + 1:H + 2, :, :] = zero_row
    pad_ref[1:H + 1, 0:1, :] = zero_col
    pad_ref[1:H + 1, W + 1:W + 2, :] = zero_col
    pad_ref[1:H + 1, 1:W + 1, :] = h1.reshape(H, W, Cw)

    # ---- conv3x3 (padding=1, stride=1) via im2col ---------------------------
    # Build a (H*W, 9*Cw) bf16 patch buffer, then ONE big-K MXU matmul against
    # w2 pre-reshaped to (9*Cw, Cw) in the wrapper (BN2 scale already folded).
    for tap in range(9):
        dy, dx = divmod(tap, 3)
        patch_ref[:, tap * Cw:(tap + 1) * Cw] = (
            pad_ref[dy:dy + H, dx:dx + W, :]
            .reshape(H * W, Cw).astype(jnp.bfloat16))
    h2 = jnp.dot(patch_ref[...], w2_ref[...], preferred_element_type=jnp.float32)
    h2 = jnp.maximum(h2 + b2_ref[...], 0.0)                       # (H*W, Cw) f32

    # ---- conv1x1 (BN3 scale folded into w3) + bias --------------------------
    h3 = jnp.dot(h2.astype(jnp.bfloat16), w3_ref[...],
                 preferred_element_type=jnp.float32)
    h3 = h3 + b3_ref[...]                                         # (H*W, Cout) f32

    # ---- residual add (re-read the resident f32 input block) + ReLU ---------
    out = jnp.maximum(h3 + x_ref[...].reshape(H * W, Cout), 0.0)
    o_ref[...] = out.reshape(1, H, W, Cout).astype(o_ref.dtype)


def bottleneck_pallas(x_nchw, params):
    """x_nchw: (N, Cin, H, W) float32.  Returns (N, Cout, H, W) float32."""
    N, Cin, H, W = x_nchw.shape
    Cw = params["w1"].shape[1]
    Cout = params["w3"].shape[1]
    assert Cin == Cout, "identity path requires inplanes == planes * expansion"

    x = jnp.transpose(x_nchw, (0, 2, 3, 1))  # -> NHWC

    kern = functools.partial(_bottleneck_kernel, H=H, W=W, Cin=Cin, Cw=Cw, Cout=Cout)
    full = lambda shape: pl.BlockSpec(shape, lambda n: (0,) * len(shape))

    out_nhwc = pl.pallas_call(
        kern,
        out_shape=jax.ShapeDtypeStruct((N, H, W, Cout), x.dtype),
        grid=(N,),
        in_specs=[
            pl.BlockSpec((1, H, W, Cin), lambda n: (n, 0, 0, 0)),  # x (per-batch)
            full((Cin, Cw)),        # w1  bf16, BN1 scale folded
            full((1, Cw)),          # b1  f32
            full((9 * Cw, Cw)),     # w2  bf16, BN2 scale folded, im2col layout
            full((1, Cw)),          # b2  f32
            full((Cw, Cout)),       # w3  bf16, BN3 scale folded
            full((1, Cout)),        # b3  f32
        ],
        out_specs=pl.BlockSpec((1, H, W, Cout), lambda n: (n, 0, 0, 0)),
        scratch_shapes=[
            pltpu.VMEM((H + 2, W + 2, Cw), jnp.float32),    # zero-padded h1
            pltpu.VMEM((H * W, 9 * Cw), jnp.bfloat16),      # im2col patches
        ],
        compiler_params=pltpu.CompilerParams(dimension_semantics=("parallel",)),
    )(x, params["w1"], params["b1"],
      params["w2"], params["b2"],
      params["w3"], params["b3"])

    return jnp.transpose(out_nhwc, (0, 3, 1, 2))  # back to NCHW


# ----------------------------- parameter setup ------------------------------
def make_params(key, inplanes, planes, base_width=64, groups=1, eps=1e-5):
    expansion = 4
    width = int(planes * (base_width / 64.0)) * groups
    cout = planes * expansion
    ks = jax.random.split(key, 15)

    # Synthetic conv weights (matmul-friendly layouts).
    w1 = jax.random.normal(ks[0], (inplanes, width), jnp.float32) * 0.1
    w2_hwio = jax.random.normal(ks[1], (3, 3, width, width), jnp.float32) * 0.1
    w3 = jax.random.normal(ks[2], (width, cout), jnp.float32) * 0.1

    # Eval-mode BN running stats (independent keys for every tensor).
    def bn_stats(kg, kb, km, kv, c):
        g = 1.0 + 0.1 * jax.random.normal(kg, (c,))
        b = 0.1 * jax.random.normal(kb, (c,))
        m = 0.1 * jax.random.normal(km, (c,))
        v = 1.0 + 0.1 * jax.random.uniform(kv, (c,))
        return g, b, m, v

    bn1 = bn_stats(ks[3], ks[4], ks[5], ks[6], width)
    bn2 = bn_stats(ks[7], ks[8], ks[9], ks[10], width)
    bn3 = bn_stats(ks[11], ks[12], ks[13], ks[14], cout)

    def fold(g, b, m, v):
        scale = g / jnp.sqrt(v + eps)
        bias = b - m * scale
        return scale, bias

    s1, bb1 = fold(*bn1)
    s2, bb2 = fold(*bn2)
    s3, bb3 = fold(*bn3)

    params = {
        # BN scale folded into the weights in f32, then cast to bf16 for the MXU.
        "w1": (w1 * s1[None, :]).astype(jnp.bfloat16),
        "b1": bb1.reshape(1, -1),
        "w2": (w2_hwio * s2[None, None, None, :]).reshape(9 * width, width)
                 .astype(jnp.bfloat16),
        "b2": bb2.reshape(1, -1),
        "w3": (w3 * s3[None, :]).astype(jnp.bfloat16),
        "b3": bb3.reshape(1, -1),
    }
    ref_params = {"w1": w1, "w2_hwio": w2_hwio, "w3": w3,
                  "bn1": bn1, "bn2": bn2, "bn3": bn3, "eps": eps}
    return params, ref_params


# ----------------------------- pure-JAX reference ---------------------------
def bottleneck_ref(x_nchw, rp):
    """PyTorch-semantics reference (conv -> BN -> ReLU ...), with conv operands
    cast to bf16 / f32 accumulation to mirror the kernel's MXU precision."""
    eps = rp["eps"]
    dn = ("NHWC", "HWIO", "NHWC")

    def bn(y, p):
        g, b, m, v = p
        return (y - m) / jnp.sqrt(v + eps) * g + b

    def conv(h, w_hwio, padding):
        return lax.conv_general_dilated(
            h.astype(jnp.bfloat16), w_hwio.astype(jnp.bfloat16), (1, 1), padding,
            dimension_numbers=dn, preferred_element_type=jnp.float32)

    x = jnp.transpose(x_nchw, (0, 2, 3, 1))
    cin, cw = rp["w1"].shape
    cout = rp["w3"].shape[1]
    h = jax.nn.relu(bn(conv(x, rp["w1"].reshape(1, 1, cin, cw), "VALID"), rp["bn1"]))
    h = jax.nn.relu(bn(conv(h, rp["w2_hwio"], ((1, 1), (1, 1))), rp["bn2"]))
    h = bn(conv(h, rp["w3"].reshape(1, 1, cw, cout), "VALID"), rp["bn3"])
    out = jax.nn.relu(h + x)
    return jnp.transpose(out, (0, 3, 1, 2))


if __name__ == "__main__":
    key = jax.random.PRNGKey(0)
    k_x, k_p = jax.random.split(key)

    # Identity residual path requires inplanes == planes * expansion.
    N, planes, H, W = 2, 4, 16, 16
    inplanes = planes * 4          # 16
    x = jax.random.normal(k_x, (N, inplanes, H, W), jnp.float32)

    params, ref_params = make_params(k_p, inplanes, planes)

    out = jax.block_until_ready(bottleneck_pallas(x, params))
    ref = jax.block_until_ready(bottleneck_ref(x, ref_params))

    assert out.shape == ref.shape == (N, inplanes, H, W)
    max_err = float(jnp.max(jnp.abs(out - ref)))
    # Tolerance covers bf16 operand quantization + BN-scale-folding rounding.
    assert jnp.allclose(out, ref, atol=2e-2, rtol=2e-2), max_err

    print("KERNEL_OK")
</pallas_src>

<mosaic_0001>
module attributes {stable_mosaic.version = 11 : i64} {
  func.func @_bottleneck_kernel(%arg0: i32, %arg1: memref<1x16x16x16xf32, #tpu.memory_space<vmem>>, %arg2: memref<16x4xbf16, #tpu.memory_space<vmem>>, %arg3: memref<1x4xf32, #tpu.memory_space<vmem>>, %arg4: memref<36x4xbf16, #tpu.memory_space<vmem>>, %arg5: memref<1x4xf32, #tpu.memory_space<vmem>>, %arg6: memref<4x16xbf16, #tpu.memory_space<vmem>>, %arg7: memref<1x16xf32, #tpu.memory_space<vmem>>, %arg8: memref<1x16x16x16xf32, #tpu.memory_space<vmem>>, %arg9: memref<18x18x4xf32, #tpu.memory_space<vmem>>, %arg10: memref<256x36xbf16, #tpu.memory_space<vmem>>) attributes {dimension_semantics = [#tpu.dimension_semantics<parallel>], iteration_bounds = array<i64: 2>, scalar_prefetch = 0 : i64, scratch_operands = 2 : i64, tpu.core_type = #tpu.core_type<tc>, window_params = [{transform_indices = @transform_0, window_bounds = array<i64: 1, 16, 16, 16>}, {pipeline_mode = #tpu.pipeline_mode<synchronous>, transform_indices = @transform_1, window_bounds = array<i64: 16, 4>}, {pipeline_mode = #tpu.pipeline_mode<synchronous>, transform_indices = @transform_2, window_bounds = array<i64: 1, 4>}, {pipeline_mode = #tpu.pipeline_mode<synchronous>, transform_indices = @transform_3, window_bounds = array<i64: 36, 4>}, {pipeline_mode = #tpu.pipeline_mode<synchronous>, transform_indices = @transform_4, window_bounds = array<i64: 1, 4>}, {pipeline_mode = #tpu.pipeline_mode<synchronous>, transform_indices = @transform_5, window_bounds = array<i64: 4, 16>}, {pipeline_mode = #tpu.pipeline_mode<synchronous>, transform_indices = @transform_6, window_bounds = array<i64: 1, 16>}, {transform_indices = @transform_7, window_bounds = array<i64: 1, 16, 16, 16>}]} {
    %c0 = arith.constant 0 : index
    %c0_0 = arith.constant 0 : index
    %c0_1 = arith.constant 0 : index
    %c0_2 = arith.constant 0 : index
    %0 = vector.load %arg1[%c0, %c0_0, %c0_1, %c0_2] : memref<1x16x16x16xf32, #tpu.memory_space<vmem>>, vector<1x16x16x16xf32>
    %1 = vector.shape_cast %0 : vector<1x16x16x16xf32> to vector<256x16xf32>
    %2 = arith.truncf %1 : vector<256x16xf32> to vector<256x16xbf16>
    %c0_3 = arith.constant 0 : index
    %c0_4 = arith.constant 0 : index
    %3 = vector.load %arg2[%c0_3, %c0_4] : memref<16x4xbf16, #tpu.memory_space<vmem>>, vector<16x4xbf16>
    %cst = arith.constant dense<0.000000e+00> : vector<256x4xf32>
    %4 = tpu.matmul %2, %3, %cst {dimension_numbers = #tpu.dot_dimension_numbers<[1], [0], [0], [1], [0, 0, 1, 1], [], []>} : vector<256x16xbf16>, vector<16x4xbf16>, vector<256x4xf32> -> vector<256x4xf32>
    %c0_5 = arith.constant 0 : index
    %c0_6 = arith.constant 0 : index
    %5 = vector.load %arg3[%c0_5, %c0_6] : memref<1x4xf32, #tpu.memory_space<vmem>>, vector<1x4xf32>
    %6 = vector.broadcast %5 : vector<1x4xf32> to vector<256x4xf32>
    %7 = arith.addf %4, %6 : vector<256x4xf32>
    %cst_7 = arith.constant 0.000000e+00 : f32
    %8 = vector.broadcast %cst_7 : f32 to vector<256x4xf32>
    %9 = arith.maximumf %7, %8 : vector<256x4xf32>
    %cst_8 = arith.constant 0.000000e+00 : f32
    %10 = vector.broadcast %cst_8 : f32 to vector<1x18x4xf32>
    %cst_9 = arith.constant 0.000000e+00 : f32
    %11 = vector.broadcast %cst_9 : f32 to vector<16x1x4xf32>
    %c0_10 = arith.constant 0 : index
    %c0_11 = arith.constant 0 : index
    %c0_12 = arith.constant 0 : index
    %12 = vector.load %arg9[%c0_10, %c0_11, %c0_12] : memref<18x18x4xf32, #tpu.memory_space<vmem>>, vector<1x18x4xf32>
    tpu.vector_store %arg9[%c0_10, %c0_11, %c0_12], %10 {strides = array<i32>} : memref<18x18x4xf32, #tpu.memory_space<vmem>>, vector<1x18x4xf32>,
    %c17 = arith.constant 17 : index
    %c0_13 = arith.constant 0 : index
    %c0_14 = arith.constant 0 : index
    %13 = vector.load %arg9[%c17, %c0_13, %c0_14] : memref<18x18x4xf32, #tpu.memory_space<vmem>>, vector<1x18x4xf32>
    tpu.vector_store %arg9[%c17, %c0_13, %c0_14], %10 {strides = array<i32>} : memref<18x18x4xf32, #tpu.memory_space<vmem>>, vector<1x18x4xf32>,
    %c1 = arith.constant 1 : index
    %c0_15 = arith.constant 0 : index
    %c0_16 = arith.constant 0 : index
    %14 = vector.load %arg9[%c1, %c0_15, %c0_16] : memref<18x18x4xf32, #tpu.memory_space<vmem>>, vector<16x1x4xf32>
    tpu.vector_store %arg9[%c1, %c0_15, %c0_16], %11 {strides = array<i32>} : memref<18x18x4xf32, #tpu.memory_space<vmem>>, vector<16x1x4xf32>,
    %c1_17 = arith.constant 1 : index
    %c17_18 = arith.constant 17 : index
    %c0_19 = arith.constant 0 : index
    %15 = vector.load %arg9[%c1_17, %c17_18, %c0_19] : memref<18x18x4xf32, #tpu.memory_space<vmem>>, vector<16x1x4xf32>
    tpu.vector_store %arg9[%c1_17, %c17_18, %c0_19], %11 {strides = array<i32>} : memref<18x18x4xf32, #tpu.memory_space<vmem>>, vector<16x1x4xf32>,
    %16 = vector.shape_cast %9 : vector<256x4xf32> to vector<16x16x4xf32>
    %c1_20 = arith.constant 1 : index
    %c1_21 = arith.constant 1 : index
    %c0_22 = arith.constant 0 : index
    %17 = vector.load %arg9[%c1_20, %c1_21, %c0_22] : memref<18x18x4xf32, #tpu.memory_space<vmem>>, vector<16x16x4xf32>
    tpu.vector_store %arg9[%c1_20, %c1_21, %c0_22], %16 {strides = array<i32>} : memref<18x18x4xf32, #tpu.memory_space<vmem>>, vector<16x16x4xf32>,
    %c0_23 = arith.constant 0 : index
    %c0_24 = arith.constant 0 : index
    %c0_25 = arith.constant 0 : index
    %18 = vector.load %arg9[%c0_23, %c0_24, %c0_25] : memref<18x18x4xf32, #tpu.memory_space<vmem>>, vector<16x16x4xf32>
    %19 = vector.shape_cast %18 : vector<16x16x4xf32> to vector<256x4xf32>
    %20 = arith.truncf %19 : vector<256x4xf32> to vector<256x4xbf16>
    %c0_26 = arith.constant 0 : index
    %c0_27 = arith.constant 0 : index
    %21 = vector.load %arg10[%c0_26, %c0_27] : memref<256x36xbf16, #tpu.memory_space<vmem>>, vector<256x4xbf16>
    tpu.vector_store %arg10[%c0_26, %c0_27], %20 {strides = array<i32>} : memref<256x36xbf16, #tpu.memory_space<vmem>>, vector<256x4xbf16>,
    %c0_28 = arith.constant 0 : index
    %c1_29 = arith.constant 1 : index
    %c0_30 = arith.constant 0 : index
    %22 = vector.load %arg9[%c0_28, %c1_29, %c0_30] : memref<18x18x4xf32, #tpu.memory_space<vmem>>, vector<16x16x4xf32>
    %23 = vector.shape_cast %22 : vector<16x16x4xf32> to vector<256x4xf32>
    %24 = arith.truncf %23 : vector<256x4xf32> to vector<256x4xbf16>
    %c0_31 = arith.constant 0 : index
    %c4 = arith.constant 4 : index
    %25 = vector.load %arg10[%c0_31, %c4] : memref<256x36xbf16, #tpu.memory_space<vmem>>, vector<256x4xbf16>
    tpu.vector_store %arg10[%c0_31, %c4], %24 {strides = array<i32>} : memref<256x36xbf16, #tpu.memory_space<vmem>>, vector<256x4xbf16>,
    %c0_32 = arith.constant 0 : index
    %c2 = arith.constant 2 : index
    %c0_33 = arith.constant 0 : index
    %26 = vector.load %arg9[%c0_32, %c2, %c0_33] : memref<18x18x4xf32, #tpu.memory_space<vmem>>, vector<16x16x4xf32>
    %27 = vector.shape_cast %26 : vector<16x16x4xf32> to vector<256x4xf32>
    %28 = arith.truncf %27 : vector<256x4xf32> to vector<256x4xbf16>
    %c0_34 = arith.constant 0 : index
    %c8 = arith.constant 8 : index
    %29 = vector.load %arg10[%c0_34, %c8] : memref<256x36xbf16, #tpu.memory_space<vmem>>, vector<256x4xbf16>
    tpu.vector_store %arg10[%c0_34, %c8], %28 {strides = array<i32>} : memref<256x36xbf16, #tpu.memory_space<vmem>>, vector<256x4xbf16>,
    %c1_35 = arith.constant 1 : index
    %c0_36 = arith.constant 0 : index
    %c0_37 = arith.constant 0 : index
    %30 = vector.load %arg9[%c1_35, %c0_36, %c0_37] : memref<18x18x4xf32, #tpu.memory_space<vmem>>, vector<16x16x4xf32>
    %31 = vector.shape_cast %30 : vector<16x16x4xf32> to vector<256x4xf32>
    %32 = arith.truncf %31 : vector<256x4xf32> to vector<256x4xbf16>
    %c0_38 = arith.constant 0 : index
    %c12 = arith.constant 12 : index
    %33 = vector.load %arg10[%c0_38, %c12] : memref<256x36xbf16, #tpu.memory_space<vmem>>, vector<256x4xbf16>
    tpu.vector_store %arg10[%c0_38, %c12], %32 {strides = array<i32>} : memref<256x36xbf16, #tpu.memory_space<vmem>>, vector<256x4xbf16>,
    %c1_39 = arith.constant 1 : index
    %c1_40 = arith.constant 1 : index
    %c0_41 = arith.constant 0 : index
    %34 = vector.load %arg9[%c1_39, %c1_40, %c0_41] : memref<18x18x4xf32, #tpu.memory_space<vmem>>, vector<16x16x4xf32>
    %35 = vector.shape_cast %34 : vector<16x16x4xf32> to vector<256x4xf32>
    %36 = arith.truncf %35 : vector<256x4xf32> to vector<256x4xbf16>
    %c0_42 = arith.constant 0 : index
    %c16 = arith.constant 16 : index
    %37 = vector.load %arg10[%c0_42, %c16] : memref<256x36xbf16, #tpu.memory_space<vmem>>, vector<256x4xbf16>
    tpu.vector_store %arg10[%c0_42, %c16], %36 {strides = array<i32>} : memref<256x36xbf16, #tpu.memory_space<vmem>>, vector<256x4xbf16>,
    %c1_43 = arith.constant 1 : index
    %c2_44 = arith.constant 2 : index
    %c0_45 = arith.constant 0 : index
    %38 = vector.load %arg9[%c1_43, %c2_44, %c0_45] : memref<18x18x4xf32, #tpu.memory_space<vmem>>, vector<16x16x4xf32>
    %39 = vector.shape_cast %38 : vector<16x16x4xf32> to vector<256x4xf32>
    %40 = arith.truncf %39 : vector<256x4xf32> to vector<256x4xbf16>
    %c0_46 = arith.constant 0 : index
    %c20 = arith.constant 20 : index
    %41 = vector.load %arg10[%c0_46, %c20] : memref<256x36xbf16, #tpu.memory_space<vmem>>, vector<256x4xbf16>
    tpu.vector_store %arg10[%c0_46, %c20], %40 {strides = array<i32>} : memref<256x36xbf16, #tpu.memory_space<vmem>>, vector<256x4xbf16>,
    %c2_47 = arith.constant 2 : index
    %c0_48 = arith.constant 0 : index
    %c0_49 = arith.constant 0 : index
    %42 = vector.load %arg9[%c2_47, %c0_48, %c0_49] : memref<18x18x4xf32, #tpu.memory_space<vmem>>, vector<16x16x4xf32>
    %43 = vector.shape_cast %42 : vector<16x16x4xf32> to vector<256x4xf32>
    %44 = arith.truncf %43 : vector<256x4xf32> to vector<256x4xbf16>
    %c0_50 = arith.constant 0 : index
    %c24 = arith.constant 24 : index
    %45 = vector.load %arg10[%c0_50, %c24] : memref<256x36xbf16, #tpu.memory_space<vmem>>, vector<256x4xbf16>
    tpu.vector_store %arg10[%c0_50, %c24], %44 {strides = array<i32>} : memref<256x36xbf16, #tpu.memory_space<vmem>>, vector<256x4xbf16>,
    %c2_51 = arith.constant 2 : index
    %c1_52 = arith.constant 1 : index
    %c0_53 = arith.constant 0 : index
    %46 = vector.load %arg9[%c2_51, %c1_52, %c0_53] : memref<18x18x4xf32, #tpu.memory_space<vmem>>, vector<16x16x4xf32>
    %47 = vector.shape_cast %46 : vector<16x16x4xf32> to vector<256x4xf32>
    %48 = arith.truncf %47 : vector<256x4xf32> to vector<256x4xbf16>
    %c0_54 = arith.constant 0 : index
    %c28 = arith.constant 28 : index
    %49 = vector.load %arg10[%c0_54, %c28] : memref<256x36xbf16, #tpu.memory_space<vmem>>, vector<256x4xbf16>
    tpu.vector_store %arg10[%c0_54, %c28], %48 {strides = array<i32>} : memref<256x36xbf16, #tpu.memory_space<vmem>>, vector<256x4xbf16>,
    %c2_55 = arith.constant 2 : index
    %c2_56 = arith.constant 2 : index
    %c0_57 = arith.constant 0 : index
    %50 = vector.load %arg9[%c2_55, %c2_56, %c0_57] : memref<18x18x4xf32, #tpu.memory_space<vmem>>, vector<16x16x4xf32>
    %51 = vector.shape_cast %50 : vector<16x16x4xf32> to vector<256x4xf32>
    %52 = arith.truncf %51 : vector<256x4xf32> to vector<256x4xbf16>
    %c0_58 = arith.constant 0 : index
    %c32 = arith.constant 32 : index
    %53 = vector.load %arg10[%c0_58, %c32] : memref<256x36xbf16, #tpu.memory_space<vmem>>, vector<256x4xbf16>
    tpu.vector_store %arg10[%c0_58, %c32], %52 {strides = array<i32>} : memref<256x36xbf16, #tpu.memory_space<vmem>>, vector<256x4xbf16>,
    %c0_59 = arith.constant 0 : index
    %c0_60 = arith.constant 0 : index
    %54 = vector.load %arg10[%c0_59, %c0_60] : memref<256x36xbf16, #tpu.memory_space<vmem>>, vector<256x36xbf16>
    %c0_61 = arith.constant 0 : index
    %c0_62 = arith.constant 0 : index
    %55 = vector.load %arg4[%c0_61, %c0_62] : memref<36x4xbf16, #tpu.memory_space<vmem>>, vector<36x4xbf16>
    %cst_63 = arith.constant dense<0.000000e+00> : vector<256x4xf32>
    %56 = tpu.matmul %54, %55, %cst_63 {dimension_numbers = #tpu.dot_dimension_numbers<[1], [0], [0], [1], [0, 0, 1, 1], [], []>} : vector<256x36xbf16>, vector<36x4xbf16>, vector<256x4xf32> -> vector<256x4xf32>
    %c0_64 = arith.constant 0 : index
    %c0_65 = arith.constant 0 : index
    %57 = vector.load %arg5[%c0_64, %c0_65] : memref<1x4xf32, #tpu.memory_space<vmem>>, vector<1x4xf32>
    %58 = vector.broadcast %57 : vector<1x4xf32> to vector<256x4xf32>
    %59 = arith.addf %56, %58 : vector<256x4xf32>
    %cst_66 = arith.constant 0.000000e+00 : f32
    %60 = vector.broadcast %cst_66 : f32 to vector<256x4xf32>
    %61 = arith.maximumf %59, %60 : vector<256x4xf32>
    %62 = arith.truncf %61 : vector<256x4xf32> to vector<256x4xbf16>
    %c0_67 = arith.constant 0 : index
    %c0_68 = arith.constant 0 : index
    %63 = vector.load %arg6[%c0_67, %c0_68] : memref<4x16xbf16, #tpu.memory_space<vmem>>, vector<4x16xbf16>
    %cst_69 = arith.constant dense<0.000000e+00> : vector<256x16xf32>
    %64 = tpu.matmul %62, %63, %cst_69 {dimension_numbers = #tpu.dot_dimension_numbers<[1], [0], [0], [1], [0, 0, 1, 1], [], []>} : vector<256x4xbf16>, vector<4x16xbf16>, vector<256x16xf32> -> vector<256x16xf32>
    %c0_70 = arith.constant 0 : index
    %c0_71 = arith.constant 0 : index
    %65 = vector.load %arg7[%c0_70, %c0_71] : memref<1x16xf32, #tpu.memory_space<vmem>>, vector<1x16xf32>
    %66 = vector.broadcast %65 : vector<1x16xf32> to vector<256x16xf32>
    %67 = arith.addf %64, %66 : vector<256x16xf32>
    %c0_72 = arith.constant 0 : index
    %c0_73 = arith.constant 0 : index
    %c0_74 = arith.constant 0 : index
    %c0_75 = arith.constant 0 : index
    %68 = vector.load %arg1[%c0_72, %c0_73, %c0_74, %c0_75] : memref<1x16x16x16xf32, #tpu.memory_space<vmem>>, vector<1x16x16x16xf32>
    %69 = vector.shape_cast %68 : vector<1x16x16x16xf32> to vector<256x16xf32>
    %70 = arith.addf %67, %69 : vector<256x16xf32>
    %cst_76 = arith.constant 0.000000e+00 : f32
    %71 = vector.broadcast %cst_76 : f32 to vector<256x16xf32>
    %72 = arith.maximumf %70, %71 : vector<256x16xf32>
    %73 = vector.shape_cast %72 : vector<256x16xf32> to vector<1x16x16x16xf32>
    %c0_77 = arith.constant 0 : index
    %c0_78 = arith.constant 0 : index
    %c0_79 = arith.constant 0 : index
    %c0_80 = arith.constant 0 : index
    %74 = vector.load %arg8[%c0_77, %c0_78, %c0_79, %c0_80] : memref<1x16x16x16xf32, #tpu.memory_space<vmem>>, vector<1x16x16x16xf32>
    tpu.vector_store %arg8[%c0_77, %c0_78, %c0_79, %c0_80], %73 {strides = array<i32>} : memref<1x16x16x16xf32, #tpu.memory_space<vmem>>, vector<1x16x16x16xf32>,
    return
  }
  func.func @transform_0(%arg0: i32) -> (i32, i32, i32, i32) {
    %c0_i32 = arith.constant 0 : i32
    %c0_i32_0 = arith.constant 0 : i32
    %c0_i32_1 = arith.constant 0 : i32
    %c0_i32_2 = arith.constant 0 : i32
    return %arg0, %c0_i32, %c0_i32_0, %c0_i32_1 : i32, i32, i32, i32
  }
  func.func @transform_1(%arg0: i32) -> (i32, i32) {
    %c0_i32 = arith.constant 0 : i32
    %c0_i32_0 = arith.constant 0 : i32
    %c0_i32_1 = arith.constant 0 : i32
    return %c0_i32, %c0_i32_0 : i32, i32
  }
  func.func @transform_2(%arg0: i32) -> (i32, i32) {
    %c0_i32 = arith.constant 0 : i32
    %c0_i32_0 = arith.constant 0 : i32
    %c0_i32_1 = arith.constant 0 : i32
    return %c0_i32, %c0_i32_0 : i32, i32
  }
  func.func @transform_3(%arg0: i32) -> (i32, i32) {
    %c0_i32 = arith.constant 0 : i32
    %c0_i32_0 = arith.constant 0 : i32
    %c0_i32_1 = arith.constant 0 : i32
    return %c0_i32, %c0_i32_0 : i32, i32
  }
  func.func @transform_4(%arg0: i32) -> (i32, i32) {
    %c0_i32 = arith.constant 0 : i32
    %c0_i32_0 = arith.constant 0 : i32
    %c0_i32_1 = arith.constant 0 : i32
    return %c0_i32, %c0_i32_0 : i32, i32
  }
  func.func @transform_5(%arg0: i32) -> (i32, i32) {
    %c0_i32 = arith.constant 0 : i32
    %c0_i32_0 = arith.constant 0 : i32
    %c0_i32_1 = arith.constant 0 : i32
    return %c0_i32, %c0_i32_0 : i32, i32
  }
  func.func @transform_6(%arg0: i32) -> (i32, i32) {
    %c0_i32 = arith.constant 0 : i32
    %c0_i32_0 = arith.constant 0 : i32
    %c0_i32_1 = arith.constant 0 : i32
    return %c0_i32, %c0_i32_0 : i32, i32
  }
  func.func @transform_7(%arg0: i32) -> (i32, i32, i32, i32) {
    %c0_i32 = arith.constant 0 : i32
    %c0_i32_0 = arith.constant 0 : i32
    %c0_i32_1 = arith.constant 0 : i32
    %c0_i32_2 = arith.constant 0 : i32
    return %arg0, %c0_i32, %c0_i32_0, %c0_i32_1 : i32, i32, i32, i32
  }
}

</mosaic_0001>

<llo_original>
// kernel: tpu_custom_call.1
$region0: #{tpu_custom_call.1}
  #allocation0 [shape = 'u32[]', space=smem, size = 0x4, offset = 0x4, fixed_abs, tag = 'smem constant byte address 0x4 - core index']
  #allocation1 [shape = 'u32[72,128]{1,0:T(1,128)}', space=vmem, size = 0x9000, scoped, tag = 'internal scratch']
  #allocation2 [shape = 'f32[18,18,4]{2,1,0:T(8,128)}', space=vmem, size = 0x36000, scoped, tag = 'scratch operand']
  #allocation3 [shape = 'bf16[256,36]{1,0:T(8,128)(2,1)}', space=vmem, size = 0x10000, scoped, tag = 'scratch operand']
  %s0 = inlined_call_operand.hbm [shape: f32[2,16,16,16], index: 0, kind: input, shape index: {}]
  %s1 = inlined_call_operand.vmem [shape: bf16[16,4], index: 1, kind: input, shape index: {}]
  %s2 = inlined_call_operand.vmem [shape: f32[1,4], index: 2, kind: input, shape index: {}]
  %s3 = inlined_call_operand.vmem [shape: bf16[36,4], index: 3, kind: input, shape index: {}]
  %s4 = inlined_call_operand.vmem [shape: f32[1,4], index: 4, kind: input, shape index: {}]
  %s5 = inlined_call_operand.vmem [shape: bf16[4,16], index: 5, kind: input, shape index: {}]
  %s6 = inlined_call_operand.vmem [shape: f32[1,16], index: 6, kind: input, shape index: {}]
  %s7 = inlined_call_operand.hbm [shape: f32[2,16,16,16], index: 7, kind: output, shape index: {}]
  %s8 = sld [smem:[#allocation0]]
  $region65: #{tpu_custom_call.1} parent=0
    _
  %s10 = ssub.s32 1, %s8
  %s11 = scalar_select 0, %s10, %s8
  $region1: #{tpu_custom_call.1} parent=0
    #allocation4 [shape = 'u8[262144]{0}', space=vmem, size = 0x40000, scoped, tag = 'input window, operand 0']
    #allocation5 [shape = 's32[2]{0}', space=sflag, size = 0x8, scoped, tag = 'scoped memory for tpu_custom_call.1']
    #allocation6 [shape = 's32[2]{0}', space=sflag, size = 0x8, scoped, tag = 'scoped memory for tpu_custom_call.1']
    #allocation7 [shape = 'u8[262144]{0}', space=vmem, size = 0x40000, scoped, tag = 'output window, operand 0']
    %12 = vsyncpa [#allocation5], 0
    %s13 = scalar_lea.sflag [#allocation5], 1
    %14 = vsyncpa %s13, 0
    %15 = vsyncpa [#allocation6], 0
    %s16 = scalar_lea.sflag [#allocation6], 1
    %17 = vsyncpa %s16, 0
    loop: start=0, step=1, limit=4
    $region2: #{tpu_custom_call.1} parent=1 // loop_pre_header
      _
    $region3: #{tpu_custom_call.1} parent=1 // loop_header
      %s19 = sphi 0, %s23
      %p20 = scmp.ge.s32.totalorder %s19, 4
      %s29 = sphi 0, %s31
      %s32 = sphi 0, %s29
      %s33 = sphi 0, %s32
      %s49 = sphi 0, %s33
      %s53 = sphi 0, %s53
      %s55 = sphi 0, %s53
      %s56 = sphi 0, %s55
      %s70 = sphi 0, %s56
      %s74 = sphi 0, %s74
      %s76 = sphi 0, %s74
      %s77 = sphi 0, %s76
      %s91 = sphi 0, %s77
      %s95 = sphi 0, %s95
      %s97 = sphi 0, %s95
      %s98 = sphi 0, %s97
      %s112 = sphi 0, %s98
      %s116 = sphi 0, %s116
      %s118 = sphi 0, %s116
      %s119 = sphi 0, %s118
      %s133 = sphi 0, %s119
      %s137 = sphi 0, %s137
      %s139 = sphi 0, %s137
      %s140 = sphi 0, %s139
      %s154 = sphi 0, %s140
      %s158 = sphi 0, %s158
      %s160 = sphi 0, %s158
      %s161 = sphi 0, %s160
      %s175 = sphi 0, %s161
      %s181 = sphi 0, %s183
      %s184 = sphi 0, %s181
      %s185 = sphi 0, %s184
      %s201 = sphi 0, %s185
    $region4: #{tpu_custom_call.1} parent=1 // loop_header_branch
      %22 = sbr.rel (%p20) target = $region8
    $region5: #{tpu_custom_call.1} parent=1 // loop_body
      %s24 = ssub.s32 %s19, 1
      %s25 = ssub.s32 %s19, 2
      %s26 = sadd.s32 %s19, 1
      %s27 = ssub.s32 %s19, %s26
      %p28 = scmp.eq.s32.totalorder %s27, 0
      %s30 = sadd.s32 %s29, 1
      %s31 = scalar_select %p28, %s29, %s30
      %p34 = pneg %p28
      %p35 = scmp.eq.s32.totalorder %s19, 1
      %p36 = por %p34, %p35
      %p37 = scmp.ne.s32.totalorder %s29, %s32
      %p38 = scmp.eq.s32.totalorder %s19, 0
      %p39 = por %p37, %p38
      %p40 = scmp.ne.s32.totalorder %s29, %s32
      %p41 = scmp.eq.s32.totalorder %s24, 1
      %p42 = por %p40, %p41
      %p43 = scmp.ne.s32.totalorder %s32, %s33
      %p44 = scmp.eq.s32.totalorder %s24, 0
      %p45 = por %p43, %p44
      %p46 = scmp.ne.s32.totalorder %s32, %s33
      %p47 = scmp.eq.s32.totalorder %s25, 1
      %p48 = por %p46, %p47
      %p50 = scmp.ne.s32.totalorder %s33, %s49
      %p51 = scmp.eq.s32.totalorder %s25, 0
      %p52 = por %p50, %p51
      %s54 = sadd.s32 %s53, 1
      %p57 = scmp.eq.s32.totalorder %s19, 1
      %p58 = scmp.ne.s32.totalorder %s53, %s55
      %p59 = scmp.eq.s32.totalorder %s19, 0
      %p60 = por %p58, %p59
      %p61 = scmp.ne.s32.totalorder %s53, %s55
      %p62 = scmp.eq.s32.totalorder %s24, 1
      %p63 = por %p61, %p62
      %p64 = scmp.ne.s32.totalorder %s55, %s56
      %p65 = scmp.eq.s32.totalorder %s24, 0
      %p66 = por %p64, %p65
      %p67 = scmp.ne.s32.totalorder %s55, %s56
      %p68 = scmp.eq.s32.totalorder %s25, 1
      %p69 = por %p67, %p68
      %p71 = scmp.ne.s32.totalorder %s56, %s70
      %p72 = scmp.eq.s32.totalorder %s25, 0
      %p73 = por %p71, %p72
      %s75 = sadd.s32 %s74, 1
      %p78 = scmp.eq.s32.totalorder %s19, 1
      %p79 = scmp.ne.s32.totalorder %s74, %s76
      %p80 = scmp.eq.s32.totalorder %s19, 0
      %p81 = por %p79, %p80
      %p82 = scmp.ne.s32.totalorder %s74, %s76
      %p83 = scmp.eq.s32.totalorder %s24, 1
      %p84 = por %p82, %p83
      %p85 = scmp.ne.s32.totalorder %s76, %s77
      %p86 = scmp.eq.s32.totalorder %s24, 0
      %p87 = por %p85, %p86
      %p88 = scmp.ne.s32.totalorder %s76, %s77
      %p89 = scmp.eq.s32.totalorder %s25, 1
      %p90 = por %p88, %p89
      %p92 = scmp.ne.s32.totalorder %s77, %s91
      %p93 = scmp.eq.s32.totalorder %s25, 0
      %p94 = por %p92, %p93
      %s96 = sadd.s32 %s95, 1
      %p99 = scmp.eq.s32.totalorder %s19, 1
      %p100 = scmp.ne.s32.totalorder %s95, %s97
      %p101 = scmp.eq.s32.totalorder %s19, 0
      %p102 = por %p100, %p101
      %p103 = scmp.ne.s32.totalorder %s95, %s97
      %p104 = scmp.eq.s32.totalorder %s24, 1
      %p105 = por %p103, %p104
      %p106 = scmp.ne.s32.totalorder %s97, %s98
      %p107 = scmp.eq.s32.totalorder %s24, 0
      %p108 = por %p106, %p107
      %p109 = scmp.ne.s32.totalorder %s97, %s98
      %p110 = scmp.eq.s32.totalorder %s25, 1
      %p111 = por %p109, %p110
      %p113 = scmp.ne.s32.totalorder %s98, %s112
      %p114 = scmp.eq.s32.totalorder %s25, 0
      %p115 = por %p113, %p114
      %s117 = sadd.s32 %s116, 1
      %p120 = scmp.eq.s32.totalorder %s19, 1
      %p121 = scmp.ne.s32.totalorder %s116, %s118
      %p122 = scmp.eq.s32.totalorder %s19, 0
      %p123 = por %p121, %p122
      %p124 = scmp.ne.s32.totalorder %s116, %s118
      %p125 = scmp.eq.s32.totalorder %s24, 1
      %p126 = por %p124, %p125
      %p127 = scmp.ne.s32.totalorder %s118, %s119
      %p128 = scmp.eq.s32.totalorder %s24, 0
      %p129 = por %p127, %p128
      %p130 = scmp.ne.s32.totalorder %s118, %s119
      %p131 = scmp.eq.s32.totalorder %s25, 1
      %p132 = por %p130, %p131
      %p134 = scmp.ne.s32.totalorder %s119, %s133
      %p135 = scmp.eq.s32.totalorder %s25, 0
      %p136 = por %p134, %p135
      %s138 = sadd.s32 %s137, 1
      %p141 = scmp.eq.s32.totalorder %s19, 1
      %p142 = scmp.ne.s32.totalorder %s137, %s139
      %p143 = scmp.eq.s32.totalorder %s19, 0
      %p144 = por %p142, %p143
      %p145 = scmp.ne.s32.totalorder %s137, %s139
      %p146 = scmp.eq.s32.totalorder %s24, 1
      %p147 = por %p145, %p146
      %p148 = scmp.ne.s32.totalorder %s139, %s140
      %p149 = scmp.eq.s32.totalorder %s24, 0
      %p150 = por %p148, %p149
      %p151 = scmp.ne.s32.totalorder %s139, %s140
      %p152 = scmp.eq.s32.totalorder %s25, 1
      %p153 = por %p151, %p152
      %p155 = scmp.ne.s32.totalorder %s140, %s154
      %p156 = scmp.eq.s32.totalorder %s25, 0
      %p157 = por %p155, %p156
      %s159 = sadd.s32 %s158, 1
      %p162 = scmp.eq.s32.totalorder %s19, 1
      %p163 = scmp.ne.s32.totalorder %s158, %s160
      %p164 = scmp.eq.s32.totalorder %s19, 0
      %p165 = por %p163, %p164
      %p166 = scmp.ne.s32.totalorder %s158, %s160
      %p167 = scmp.eq.s32.totalorder %s24, 1
      %p168 = por %p166, %p167
      %p169 = scmp.ne.s32.totalorder %s160, %s161
      %p170 = scmp.eq.s32.totalorder %s24, 0
      %p171 = por %p169, %p170
      %p172 = scmp.ne.s32.totalorder %s160, %s161
      %p173 = scmp.eq.s32.totalorder %s25, 1
      %p174 = por %p172, %p173
      %p176 = scmp.ne.s32.totalorder %s161, %s175
      %p177 = scmp.eq.s32.totalorder %s25, 0
      %p178 = por %p176, %p177
      %s179 = ssub.s32 %s19, %s26
      %p180 = scmp.eq.s32.totalorder %s179, 0
      %s182 = sadd.s32 %s181, 1
      %s183 = scalar_select %p180, %s181, %s182
      %p186 = pneg %p180
      %p187 = scmp.eq.s32.totalorder %s19, 1
      %p188 = por %p186, %p187
      %p189 = scmp.ne.s32.totalorder %s181, %s184
      %p190 = scmp.eq.s32.totalorder %s19, 0
      %p191 = por %p189, %p190
      %p192 = scmp.ne.s32.totalorder %s181, %s184
      %p193 = scmp.eq.s32.totalorder %s24, 1
      %p194 = por %p192, %p193
      %p195 = scmp.ne.s32.totalorder %s184, %s185
      %p196 = scmp.eq.s32.totalorder %s24, 0
      %p197 = por %p195, %p196
      %p198 = scmp.ne.s32.totalorder %s184, %s185
      %p199 = scmp.eq.s32.totalorder %s25, 1
      %p200 = por %p198, %p199
      %p202 = scmp.ne.s32.totalorder %s185, %s201
      %p203 = scmp.eq.s32.totalorder %s25, 0
      %p204 = por %p202, %p203
      %p205 = scmp.le.s32.totalorder 1, %s19
      %p206 = scmp.lt.s32.totalorder %s19, 3
      %p207 = pnand %p205, %p206
      %p208 = pneg %p207
      // Predicated region
      $region9: #{tpu_custom_call.1} parent=5 // pred_check
        _
      $region10: #{tpu_custom_call.1} parent=5 // pred_check_branch
        %210 = sbr.rel (%p207) target = $region12
      $region11: #{tpu_custom_call.1} parent=5 // pred_region
        %s211 = ssub.s32 %s19, 1
        // Predicated region
        $region13: #{tpu_custom_call.1} parent=11 // pred_check
          %p212 = pneg %p66
        $region14: #{tpu_custom_call.1} parent=11 // pred_check_branch
          %214 = sbr.rel (%p212) target = $region16
        $region15: #{tpu_custom_call.1} parent=11 // pred_region
          _
        $region16: #{tpu_custom_call.1} parent=11 // pred_fallthru
          _
        // Predicated region
        $region17: #{tpu_custom_call.1} parent=11 // pred_check
          %p215 = pneg %p87
        $region18: #{tpu_custom_call.1} parent=11 // pred_check_branch
          %217 = sbr.rel (%p215) target = $region20
        $region19: #{tpu_custom_call.1} parent=11 // pred_region
          _
        $region20: #{tpu_custom_call.1} parent=11 // pred_fallthru
          _
        // Predicated region
        $region21: #{tpu_custom_call.1} parent=11 // pred_check
          %p218 = pneg %p108
        $region22: #{tpu_custom_call.1} parent=11 // pred_check_branch
          %220 = sbr.rel (%p218) target = $region24
        $region23: #{tpu_custom_call.1} parent=11 // pred_region
          _
        $region24: #{tpu_custom_call.1} parent=11 // pred_fallthru
          _
        // Predicated region
        $region25: #{tpu_custom_call.1} parent=11 // pred_check
          %p221 = pneg %p129
        $region26: #{tpu_custom_call.1} parent=11 // pred_check_branch
          %223 = sbr.rel (%p221) target = $region28
        $region27: #{tpu_custom_call.1} parent=11 // pred_region
          _
        $region28: #{tpu_custom_call.1} parent=11 // pred_fallthru
          _
        // Predicated region
        $region29: #{tpu_custom_call.1} parent=11 // pred_check
          %p224 = pneg %p150
        $region30: #{tpu_custom_call.1} parent=11 // pred_check_branch
          %226 = sbr.rel (%p224) target = $region32
        $region31: #{tpu_custom_call.1} parent=11 // pred_region
          _
        $region32: #{tpu_custom_call.1} parent=11 // pred_fallthru
          _
        // Predicated region
        $region33: #{tpu_custom_call.1} parent=11 // pred_check
          %p227 = pneg %p171
        $region34: #{tpu_custom_call.1} parent=11 // pred_check_branch
          %229 = sbr.rel (%p227) target = $region36
        $region35: #{tpu_custom_call.1} parent=11 // pred_region
          _
        $region36: #{tpu_custom_call.1} parent=11 // pred_fallthru
          _
      $region12: #{tpu_custom_call.1} parent=5 // pred_fallthru
        _
      %p230 = scmp.lt.s32.totalorder %s19, 2
      // Predicated region
      $region37: #{tpu_custom_call.1} parent=5 // pred_check
        %p231 = pneg %p230
      $region38: #{tpu_custom_call.1} parent=5 // pred_check_branch
        %233 = sbr.rel (%p231) target = $region40
      $region39: #{tpu_custom_call.1} parent=5 // pred_region
        // Predicated region
        $region41: #{tpu_custom_call.1} parent=39 // pred_check
          %p234 = pneg %p39
        $region42: #{tpu_custom_call.1} parent=39 // pred_check_branch
          %236 = sbr.rel (%p234) target = $region44
        $region43: #{tpu_custom_call.1} parent=39 // pred_region
          %s237 = sand.u32 %s29, 1
          %s238 = scalar_lea.sflag [#allocation5], %s237
          %s239 = sand.u32 %s29, 1
          %s240 = smul.addr %s239, 256
          %s241 = scalar_lea.vmem [#allocation4], %s240
          %243 = vsyncadd %s238, 0
          %s244 = smul.addr %s19, 32
          %s245 = smul.addr %s244, 8
          %s246 = scalar_lea.hbm %s0, %s245
          %s247 = sshll.u32 %s246, 4
          %s248 = int_to_ptr.hbm [resolvable:$true] %s247
          %s249 = sshll.u32 %s241, 4
          %s250 = int_to_ptr.vmem [resolvable:$true] %s249
          %255 = dma.hbm_to_vmem [thread:$0]  %s248, 4096, %s250, %s238, 128, 128, 8
        $region44: #{tpu_custom_call.1} parent=39 // pred_fallthru
          _
      $region40: #{tpu_custom_call.1} parent=5 // pred_fallthru
        _
      %p256 = scmp.le.s32.totalorder 1, %s19
      %p257 = scmp.lt.s32.totalorder %s19, 3
      %p258 = pnand %p256, %p257
      %p259 = pneg %p258
      // Predicated region
      $region45: #{tpu_custom_call.1} parent=5 // pred_check
        _
      $region46: #{tpu_custom_call.1} parent=5 // pred_check_branch
        %261 = sbr.rel (%p258) target = $region48
      $region47: #{tpu_custom_call.1} parent=5 // pred_region
        %s262 = ssub.s32 %s19, 1
        %s263 = sand.u32 %s32, 1
        %s264 = scalar_lea.sflag [#allocation5], %s263
        %s265 = sand.u32 %s32, 1
        %s266 = smul.addr %s265, 256
        %s267 = scalar_lea.vmem [#allocation4], %s266
        // Predicated region
        $region49: #{tpu_custom_call.1} parent=47 // pred_check
          %p268 = pneg %p45
        $region50: #{tpu_custom_call.1} parent=47 // pred_check_branch
          %270 = sbr.rel (%p268) target = $region52
        $region51: #{tpu_custom_call.1} parent=47 // pred_region
          %272 = dma.done %s264, 4096
        $region52: #{tpu_custom_call.1} parent=47 // pred_fallthru
          _
        %s273 = sand.u32 %s32, 1
        %s274 = scalar_lea.sflag [#allocation5], %s273
        %s275 = sand.u32 %s32, 1
        %s276 = smul.addr %s275, 256
        %s277 = scalar_lea.vmem [#allocation4], %s276
        %p278 = pneg %p45
        %p279 = pneg %p42
        %p280 = pneg %p66
        %p281 = pneg %p63
        %p282 = pneg %p87
        %p283 = pneg %p84
        %p284 = pneg %p108
        %p285 = pneg %p105
        %p286 = pneg %p129
        %p287 = pneg %p126
        %p288 = pneg %p150
        %p289 = pneg %p147
        %p290 = pneg %p171
        %p291 = pneg %p168
        %p292 = pneg %p197
        %p293 = pneg %p194
        %s294 = sand.u32 %s184, 1
        %s295 = scalar_lea.sflag [#allocation6], %s294
        %s296 = sand.u32 %s184, 1
        %s297 = smul.addr %s296, 256
        %s298 = scalar_lea.vmem [#allocation7], %s297
        %v300 = vld [vmem:[%s267] sm:$0xff]
        %v301 = vld [vmem:[%s267 + $0x8] sm:$0xff]
        %v302 = vld [vmem:[%s267 + $0x10] sm:$0xff]
        %v303 = vld [vmem:[%s267 + $0x18] sm:$0xff]
        %v304 = vld [vmem:[%s267 + $0x20] sm:$0xff]
        %v305 = vld [vmem:[%s267 + $0x28] sm:$0xff]
        %v306 = vld [vmem:[%s267 + $0x30] sm:$0xff]
        %v307 = vld [vmem:[%s267 + $0x38] sm:$0xff]
        %v308 = vld [vmem:[%s267 + $0x40] sm:$0xff]
        %v309 = vld [vmem:[%s267 + $0x48] sm:$0xff]
        %v310 = vld [vmem:[%s267 + $0x50] sm:$0xff]
        %v311 = vld [vmem:[%s267 + $0x58] sm:$0xff]
        %v312 = vld [vmem:[%s267 + $0x60] sm:$0xff]
        %v313 = vld [vmem:[%s267 + $0x68] sm:$0xff]
        %v314 = vld [vmem:[%s267 + $0x70] sm:$0xff]
        %v315 = vld [vmem:[%s267 + $0x78] sm:$0xff]
        %v316 = vld [vmem:[%s267 + $0x80] sm:$0xff]
        %v317 = vld [vmem:[%s267 + $0x88] sm:$0xff]
        %v318 = vld [vmem:[%s267 + $0x90] sm:$0xff]
        %v319 = vld [vmem:[%s267 + $0x98] sm:$0xff]
        %v320 = vld [vmem:[%s267 + $0xa0] sm:$0xff]
        %v321 = vld [vmem:[%s267 + $0xa8] sm:$0xff]
        %v322 = vld [vmem:[%s267 + $0xb0] sm:$0xff]
        %v323 = vld [vmem:[%s267 + $0xb8] sm:$0xff]
        %v324 = vld [vmem:[%s267 + $0xc0] sm:$0xff]
        %v325 = vld [vmem:[%s267 + $0xc8] sm:$0xff]
        %v326 = vld [vmem:[%s267 + $0xd0] sm:$0xff]
        %v327 = vld [vmem:[%s267 + $0xd8] sm:$0xff]
        %v328 = vld [vmem:[%s267 + $0xe0] sm:$0xff]
        %v329 = vld [vmem:[%s267 + $0xe8] sm:$0xff]
        %v330 = vld [vmem:[%s267 + $0xf0] sm:$0xff]
        %v331 = vld [vmem:[%s267 + $0xf8] sm:$0xff]
        %v332 = vpack.c.bf16 %v301, %v300
        %v333 = vpack.c.bf16 %v303, %v302
        %v334 = vpack.c.bf16 %v305, %v304
        %v335 = vpack.c.bf16 %v307, %v306
        %v336 = vpack.c.bf16 %v309, %v308
        %v337 = vpack.c.bf16 %v311, %v310
        %v338 = vpack.c.bf16 %v313, %v312
        %v339 = vpack.c.bf16 %v315, %v314
        %v340 = vpack.c.bf16 %v317, %v316
        %v341 = vpack.c.bf16 %v319, %v318
        %v342 = vpack.c.bf16 %v321, %v320
        %v343 = vpack.c.bf16 %v323, %v322
        %v344 = vpack.c.bf16 %v325, %v324
        %v345 = vpack.c.bf16 %v327, %v326
        %v346 = vpack.c.bf16 %v329, %v328
        %v347 = vpack.c.bf16 %v331, %v330
        %v348 = vld [vmem:[%s1] sm:$0xf]
        %v349 = vld [vmem:[%s1 + $0x4] sm:$0xf]
        %v350 = vld [vmem:[%s2] sm:$0x1]
        %v352 = vperm.slane %v350, 0
        %v356 = vunpack.c.l.b16 %v348
        %v357 = vunpack.c.l.b16 %v349
        %v358 = vpack.c.b16 %v357, %v356
        %vm360 = vcmask 130048
        %v362 = vsel %vm360, %v332, 0
        %v365 = vsel %vm360, %v333, 0
        %v368 = vsel %vm360, %v334, 0
        %v371 = vsel %vm360, %v335, 0
        %v374 = vsel %vm360, %v336, 0
        %v377 = vsel %vm360, %v337, 0
        %v380 = vsel %vm360, %v338, 0
        %v383 = vsel %vm360, %v339, 0
        %v386 = vsel %vm360, %v340, 0
        %v389 = vsel %vm360, %v341, 0
        %v392 = vsel %vm360, %v342, 0
        %v395 = vsel %vm360, %v343, 0
        %v398 = vsel %vm360, %v344, 0
        %v401 = vsel %vm360, %v345, 0
        %v404 = vsel %vm360, %v346, 0
        %v407 = vsel %vm360, %v347, 0
        %409 = vmatpush.bf16.msra.mxu0 0
        %410 = vmatpush.bf16.msra.mxu0 0
        %411 = vmatpush.bf16.msra.mxu0 0
        %412 = vmatpush.bf16.msra.mxu0 0
        %413 = vmatpush.bf16.msra.mxu0 0
        %414 = vmatpush.bf16.msra.mxu0 0
        %415 = vmatpush.bf16.msra.mxu0 0
        %416 = vmatpush.bf16.msra.mxu0 %v358
        %417 = vmatmul.bf16.gmra.mxu0 %v362
        %v418 = vpop.f32.mrf.mxu0
        %v419 = vadd.f32 %v352, %v418
        %v420 = vpop.f32.mrf.mxu0
        %v421 = vadd.f32 %v352, %v420
        %422 = vmatmul.bf16.gmra.mxu0 %v365
        %v423 = vpop.f32.mrf.mxu0
        %v424 = vadd.f32 %v352, %v423
        %v425 = vpop.f32.mrf.mxu0
        %v426 = vadd.f32 %v352, %v425
        %427 = vmatmul.bf16.gmra.mxu0 %v368
        %v428 = vpop.f32.mrf.mxu0
        %v429 = vadd.f32 %v352, %v428
        %v430 = vpop.f32.mrf.mxu0
        %v431 = vadd.f32 %v352, %v430
        %432 = vmatmul.bf16.gmra.mxu0 %v371
        %v433 = vpop.f32.mrf.mxu0
        %v434 = vadd.f32 %v352, %v433
        %v435 = vpop.f32.mrf.mxu0
        %v436 = vadd.f32 %v352, %v435
        %437 = vmatmul.bf16.gmra.mxu0 %v374
        %v438 = vpop.f32.mrf.mxu0
        %v439 = vadd.f32 %v352, %v438
        %v440 = vpop.f32.mrf.mxu0
        %v441 = vadd.f32 %v352, %v440
        %442 = vmatmul.bf16.gmra.mxu0 %v377
        %v443 = vpop.f32.mrf.mxu0
        %v444 = vadd.f32 %v352, %v443
        %v445 = vpop.f32.mrf.mxu0
        %v446 = vadd.f32 %v352, %v445
        %447 = vmatmul.bf16.gmra.mxu0 %v380
        %v448 = vpop.f32.mrf.mxu0
        %v449 = vadd.f32 %v352, %v448
        %v450 = vpop.f32.mrf.mxu0
        %v451 = vadd.f32 %v352, %v450
        %452 = vmatmul.bf16.gmra.mxu0 %v383
        %v453 = vpop.f32.mrf.mxu0
        %v454 = vadd.f32 %v352, %v453
        %v455 = vpop.f32.mrf.mxu0
        %v456 = vadd.f32 %v352, %v455
        %457 = vmatmul.bf16.gmra.mxu0 %v386
        %v458 = vpop.f32.mrf.mxu0
        %v459 = vadd.f32 %v352, %v458
        %v460 = vpop.f32.mrf.mxu0
        %v461 = vadd.f32 %v352, %v460
        %462 = vmatmul.bf16.gmra.mxu0 %v389
        %v463 = vpop.f32.mrf.mxu0
        %v464 = vadd.f32 %v352, %v463
        %v465 = vpop.f32.mrf.mxu0
        %v466 = vadd.f32 %v352, %v465
        %467 = vmatmul.bf16.gmra.mxu0 %v392
        %v468 = vpop.f32.mrf.mxu0
        %v469 = vadd.f32 %v352, %v468
        %v470 = vpop.f32.mrf.mxu0
        %v471 = vadd.f32 %v352, %v470
        %472 = vmatmul.bf16.gmra.mxu0 %v395
        %v473 = vpop.f32.mrf.mxu0
        %v474 = vadd.f32 %v352, %v473
        %v475 = vpop.f32.mrf.mxu0
        %v476 = vadd.f32 %v352, %v475
        %477 = vmatmul.bf16.gmra.mxu0 %v398
        %v478 = vpop.f32.mrf.mxu0
        %v479 = vadd.f32 %v352, %v478
        %v480 = vpop.f32.mrf.mxu0
        %v481 = vadd.f32 %v352, %v480
        %482 = vmatmul.bf16.gmra.mxu0 %v401
        %v483 = vpop.f32.mrf.mxu0
        %v484 = vadd.f32 %v352, %v483
        %v485 = vpop.f32.mrf.mxu0
        %v486 = vadd.f32 %v352, %v485
        %487 = vmatmul.bf16.gmra.mxu0 %v404
        %v488 = vpop.f32.mrf.mxu0
        %v489 = vadd.f32 %v352, %v488
        %v490 = vpop.f32.mrf.mxu0
        %v491 = vadd.f32 %v352, %v490
        %492 = vmatmul.bf16.gmra.mxu0 %v407
        %v493 = vpop.f32.mrf.mxu0
        %v494 = vadd.f32 %v352, %v493
        %v495 = vpop.f32.mrf.mxu0
        %v496 = vadd.f32 %v352, %v495
        %497 = vdwg.mxu0
        %v498 = vmax.f32 %v419, 0.0
        %v499 = vmax.f32 %v421, 0.0
        %v500 = vmax.f32 %v424, 0.0
        %v501 = vmax.f32 %v426, 0.0
        %v502 = vmax.f32 %v429, 0.0
        %v503 = vmax.f32 %v431, 0.0
        %v504 = vmax.f32 %v434, 0.0
        %v505 = vmax.f32 %v436, 0.0
        %v506 = vmax.f32 %v439, 0.0
        %v507 = vmax.f32 %v441, 0.0
        %v508 = vmax.f32 %v444, 0.0
        %v509 = vmax.f32 %v446, 0.0
        %v510 = vmax.f32 %v449, 0.0
        %v511 = vmax.f32 %v451, 0.0
        %v512 = vmax.f32 %v454, 0.0
        %v513 = vmax.f32 %v456, 0.0
        %v514 = vmax.f32 %v459, 0.0
        %v515 = vmax.f32 %v461, 0.0
        %v516 = vmax.f32 %v464, 0.0
        %v517 = vmax.f32 %v466, 0.0
        %v518 = vmax.f32 %v469, 0.0
        %v519 = vmax.f32 %v471, 0.0
        %v520 = vmax.f32 %v474, 0.0
        %v521 = vmax.f32 %v476, 0.0
        %v522 = vmax.f32 %v479, 0.0
        %v523 = vmax.f32 %v481, 0.0
        %v524 = vmax.f32 %v484, 0.0
        %v525 = vmax.f32 %v486, 0.0
        %v526 = vmax.f32 %v489, 0.0
        %v527 = vmax.f32 %v491, 0.0
        %v528 = vmax.f32 %v494, 0.0
        %v529 = vmax.f32 %v496, 0.0
        %vm530 = vcmask 31744
        %531 = vst.msk [vmem:[#allocation2] sm:$0xff] %vm530, 0.0
        %532 = vst.msk [vmem:[#allocation2 + $0x8] sm:$0xff] %vm530, 0.0
        %vm533 = vcmask 25600
        %534 = vst.msk [vmem:[#allocation2 + $0x10] sm:$0x3] %vm533, 0.0
        %s535 = scalar_lea.vmem [#allocation2], 408
        %536 = vst.msk [vmem:[%s535] sm:$0xff] %vm530, 0.0
        %537 = vst.msk [vmem:[%s535 + $0x8] sm:$0xff] %vm530, 0.0
        %538 = vst.msk [vmem:[%s535 + $0x10] sm:$0x3] %vm533, 0.0
        %s539 = scalar_lea.vmem [#allocation2], 24
        %vm540 = vcmask 24576
        %541 = vst.msk [vmem:[%s539] sm:$0x1] %vm540, 0.0
        %542 = vst.msk [vmem:[%s539 + $0x18] sm:$0x1] %vm540, 0.0
        %543 = vst.msk [vmem:[%s539 + $0x30] sm:$0x1] %vm540, 0.0
        %544 = vst.msk [vmem:[%s539 + $0x48] sm:$0x1] %vm540, 0.0
        %545 = vst.msk [vmem:[%s539 + $0x60] sm:$0x1] %vm540, 0.0
        %546 = vst.msk [vmem:[%s539 + $0x78] sm:$0x1] %vm540, 0.0
        %547 = vst.msk [vmem:[%s539 + $0x90] sm:$0x1] %vm540, 0.0
        %548 = vst.msk [vmem:[%s539 + $0xa8] sm:$0x1] %vm540, 0.0
        %549 = vst.msk [vmem:[%s539 + $0xc0] sm:$0x1] %vm540, 0.0
        %550 = vst.msk [vmem:[%s539 + $0xd8] sm:$0x1] %vm540, 0.0
        %551 = vst.msk [vmem:[%s539 + $0xf0] sm:$0x1] %vm540, 0.0
        %552 = vst.msk [vmem:[%s539 + $0x108] sm:$0x1] %vm540, 0.0
        %553 = vst.msk [vmem:[%s539 + $0x120] sm:$0x1] %vm540, 0.0
        %554 = vst.msk [vmem:[%s539 + $0x138] sm:$0x1] %vm540, 0.0
        %555 = vst.msk [vmem:[%s539 + $0x150] sm:$0x1] %vm540, 0.0
        %556 = vst.msk [vmem:[%s539 + $0x168] sm:$0x1] %vm540, 0.0
        %557 = vst.msk [vmem:[%s539 + $0x11] sm:$0x1] %vm540, 0.0
        %558 = vst.msk [vmem:[%s539 + $0x29] sm:$0x1] %vm540, 0.0
        %559 = vst.msk [vmem:[%s539 + $0x41] sm:$0x1] %vm540, 0.0
        %560 = vst.msk [vmem:[%s539 + $0x59] sm:$0x1] %vm540, 0.0
        %561 = vst.msk [vmem:[%s539 + $0x71] sm:$0x1] %vm540, 0.0
        %562 = vst.msk [vmem:[%s539 + $0x89] sm:$0x1] %vm540, 0.0
        %563 = vst.msk [vmem:[%s539 + $0xa1] sm:$0x1] %vm540, 0.0
        %564 = vst.msk [vmem:[%s539 + $0xb9] sm:$0x1] %vm540, 0.0
        %565 = vst.msk [vmem:[%s539 + $0xd1] sm:$0x1] %vm540, 0.0
        %566 = vst.msk [vmem:[%s539 + $0xe9] sm:$0x1] %vm540, 0.0
        %567 = vst.msk [vmem:[%s539 + $0x101] sm:$0x1] %vm540, 0.0
        %568 = vst.msk [vmem:[%s539 + $0x119] sm:$0x1] %vm540, 0.0
        %569 = vst.msk [vmem:[%s539 + $0x131] sm:$0x1] %vm540, 0.0
        %570 = vst.msk [vmem:[%s539 + $0x149] sm:$0x1] %vm540, 0.0
        %571 = vst.msk [vmem:[%s539 + $0x161] sm:$0x1] %vm540, 0.0
        %572 = vst.msk [vmem:[%s539 + $0x179] sm:$0x1] %vm540, 0.0
        %573 = vst.msk [vmem:[%s539 + $0x1] sm:$0xff] %vm530, %v498
        %574 = vst.msk [vmem:[%s539 + $0x9] sm:$0xff] %vm530, %v499
        %575 = vst.msk [vmem:[%s539 + $0x19] sm:$0xff] %vm530, %v500
        %576 = vst.msk [vmem:[%s539 + $0x21] sm:$0xff] %vm530, %v501
        %577 = vst.msk [vmem:[%s539 + $0x31] sm:$0xff] %vm530, %v502
        %578 = vst.msk [vmem:[%s539 + $0x39] sm:$0xff] %vm530, %v503
        %579 = vst.msk [vmem:[%s539 + $0x49] sm:$0xff] %vm530, %v504
        %580 = vst.msk [vmem:[%s539 + $0x51] sm:$0xff] %vm530, %v505
        %581 = vst.msk [vmem:[%s539 + $0x61] sm:$0xff] %vm530, %v506
        %582 = vst.msk [vmem:[%s539 + $0x69] sm:$0xff] %vm530, %v507
        %583 = vst.msk [vmem:[%s539 + $0x79] sm:$0xff] %vm530, %v508
        %584 = vst.msk [vmem:[%s539 + $0x81] sm:$0xff] %vm530, %v509
        %585 = vst.msk [vmem:[%s539 + $0x91] sm:$0xff] %vm530, %v510
        %586 = vst.msk [vmem:[%s539 + $0x99] sm:$0xff] %vm530, %v511
        %587 = vst.msk [vmem:[%s539 + $0xa9] sm:$0xff] %vm530, %v512
        %588 = vst.msk [vmem:[%s539 + $0xb1] sm:$0xff] %vm530, %v513
        %589 = vst.msk [vmem:[%s539 + $0xc1] sm:$0xff] %vm530, %v514
        %590 = vst.msk [vmem:[%s539 + $0xc9] sm:$0xff] %vm530, %v515
        %591 = vst.msk [vmem:[%s539 + $0xd9] sm:$0xff] %vm530, %v516
        %592 = vst.msk [vmem:[%s539 + $0xe1] sm:$0xff] %vm530, %v517
        %593 = vst.msk [vmem:[%s539 + $0xf1] sm:$0xff] %vm530, %v518
        %594 = vst.msk [vmem:[%s539 + $0xf9] sm:$0xff] %vm530, %v519
        %595 = vst.msk [vmem:[%s539 + $0x109] sm:$0xff] %vm530, %v520
        %596 = vst.msk [vmem:[%s539 + $0x111] sm:$0xff] %vm530, %v521
        %597 = vst.msk [vmem:[%s539 + $0x121] sm:$0xff] %vm530, %v522
        %598 = vst.msk [vmem:[%s539 + $0x129] sm:$0xff] %vm530, %v523
        %599 = vst.msk [vmem:[%s539 + $0x139] sm:$0xff] %vm530, %v524
        %600 = vst.msk [vmem:[%s539 + $0x141] sm:$0xff] %vm530, %v525
        %601 = vst.msk [vmem:[%s539 + $0x151] sm:$0xff] %vm530, %v526
        %602 = vst.msk [vmem:[%s539 + $0x159] sm:$0xff] %vm530, %v527
        %603 = vst.msk [vmem:[%s539 + $0x169] sm:$0xff] %vm530, %v528
        %604 = vst.msk [vmem:[%s539 + $0x171] sm:$0xff] %vm530, %v529
        %v605 = vld [vmem:[#allocation2] sm:$0xff]
        %v606 = vld [vmem:[#allocation2 + $0x8] sm:$0xff]
        %v607 = vld [vmem:[#allocation2 + $0x18] sm:$0xff]
        %v608 = vld [vmem:[#allocation2 + $0x20] sm:$0xff]
        %v609 = vld [vmem:[#allocation2 + $0x30] sm:$0xff]
        %v610 = vld [vmem:[#allocation2 + $0x38] sm:$0xff]
        %v611 = vld [vmem:[#allocation2 + $0x48] sm:$0xff]
        %v612 = vld [vmem:[#allocation2 + $0x50] sm:$0xff]
        %v613 = vld [vmem:[#allocation2 + $0x60] sm:$0xff]
        %v614 = vld [vmem:[#allocation2 + $0x68] sm:$0xff]
        %v615 = vld [vmem:[#allocation2 + $0x78] sm:$0xff]
        %v616 = vld [vmem:[#allocation2 + $0x80] sm:$0xff]
        %v617 = vld [vmem:[#allocation2 + $0x90] sm:$0xff]
        %v618 = vld [vmem:[#allocation2 + $0x98] sm:$0xff]
        %v619 = vld [vmem:[#allocation2 + $0xa8] sm:$0xff]
        %v620 = vld [vmem:[#allocation2 + $0xb0] sm:$0xff]
        %v621 = vld [vmem:[#allocation2 + $0xc0] sm:$0xff]
        %v622 = vld [vmem:[#allocation2 + $0xc8] sm:$0xff]
        %v623 = vld [vmem:[#allocation2 + $0xd8] sm:$0xff]
        %v624 = vld [vmem:[#allocation2 + $0xe0] sm:$0xff]
        %v625 = vld [vmem:[#allocation2 + $0xf0] sm:$0xff]
        %v626 = vld [vmem:[#allocation2 + $0xf8] sm:$0xff]
        %v627 = vld [vmem:[#allocation2 + $0x108] sm:$0xff]
        %v628 = vld [vmem:[#allocation2 + $0x110] sm:$0xff]
        %v629 = vld [vmem:[#allocation2 + $0x120] sm:$0xff]
        %v630 = vld [vmem:[#allocation2 + $0x128] sm:$0xff]
        %v631 = vld [vmem:[#allocation2 + $0x138] sm:$0xff]
        %v632 = vld [vmem:[#allocation2 + $0x140] sm:$0xff]
        %v633 = vld [vmem:[#allocation2 + $0x150] sm:$0xff]
        %v634 = vld [vmem:[#allocation2 + $0x158] sm:$0xff]
        %v635 = vld [vmem:[#allocation2 + $0x168] sm:$0xff]
        %v636 = vld [vmem:[#allocation2 + $0x170] sm:$0xff]
        %v637 = vpack.c.bf16 %v605, %v605
        %v638 = vpack.c.bf16 %v606, %v606
        %v639 = vpack.c.bf16 %v607, %v607
        %v640 = vpack.c.bf16 %v608, %v608
        %v641 = vpack.c.bf16 %v609, %v609
        %v642 = vpack.c.bf16 %v610, %v610
        %v643 = vpack.c.bf16 %v611, %v611
        %v644 = vpack.c.bf16 %v612, %v612
        %v645 = vpack.c.bf16 %v613, %v613
        %v646 = vpack.c.bf16 %v614, %v614
        %v647 = vpack.c.bf16 %v615, %v615
        %v648 = vpack.c.bf16 %v616, %v616
        %v649 = vpack.c.bf16 %v617, %v617
        %v650 = vpack.c.bf16 %v618, %v618
        %v651 = vpack.c.bf16 %v619, %v619
        %v652 = vpack.c.bf16 %v620, %v620
        %v653 = vpack.c.bf16 %v621, %v621
        %v654 = vpack.c.bf16 %v622, %v622
        %v655 = vpack.c.bf16 %v623, %v623
        %v656 = vpack.c.bf16 %v624, %v624
        %v657 = vpack.c.bf16 %v625, %v625
        %v658 = vpack.c.bf16 %v626, %v626
        %v659 = vpack.c.bf16 %v627, %v627
        %v660 = vpack.c.bf16 %v628, %v628
        %v661 = vpack.c.bf16 %v629, %v629
        %v662 = vpack.c.bf16 %v630, %v630
        %v663 = vpack.c.bf16 %v631, %v631
        %v664 = vpack.c.bf16 %v632, %v632
        %v665 = vpack.c.bf16 %v633, %v633
        %v666 = vpack.c.bf16 %v634, %v634
        %v667 = vpack.c.bf16 %v635, %v635
        %v668 = vpack.c.bf16 %v636, %v636
        %vm669 = vcmask 27648
        %670 = vst.msk [vmem:[#allocation3] sm:$0xf] %vm669, %v637
        %671 = vst.msk [vmem:[#allocation3 + $0x4] sm:$0xf] %vm669, %v638
        %672 = vst.msk [vmem:[#allocation3 + $0x8] sm:$0xf] %vm669, %v639
        %673 = vst.msk [vmem:[#allocation3 + $0xc] sm:$0xf] %vm669, %v640
        %674 = vst.msk [vmem:[#allocation3 + $0x10] sm:$0xf] %vm669, %v641
        %675 = vst.msk [vmem:[#allocation3 + $0x14] sm:$0xf] %vm669, %v642
        %676 = vst.msk [vmem:[#allocation3 + $0x18] sm:$0xf] %vm669, %v643
        %677 = vst.msk [vmem:[#allocation3 + $0x1c] sm:$0xf] %vm669, %v644
        %678 = vst.msk [vmem:[#allocation3 + $0x20] sm:$0xf] %vm669, %v645
        %679 = vst.msk [vmem:[#allocation3 + $0x24] sm:$0xf] %vm669, %v646
        %680 = vst.msk [vmem:[#allocation3 + $0x28] sm:$0xf] %vm669, %v647
        %681 = vst.msk [vmem:[#allocation3 + $0x2c] sm:$0xf] %vm669, %v648
        %682 = vst.msk [vmem:[#allocation3 + $0x30] sm:$0xf] %vm669, %v649
        %683 = vst.msk [vmem:[#allocation3 + $0x34] sm:$0xf] %vm669, %v650
        %684 = vst.msk [vmem:[#allocation3 + $0x38] sm:$0xf] %vm669, %v651
        %685 = vst.msk [vmem:[#allocation3 + $0x3c] sm:$0xf] %vm669, %v652
        %686 = vst.msk [vmem:[#allocation3 + $0x40] sm:$0xf] %vm669, %v653
        %687 = vst.msk [vmem:[#allocation3 + $0x44] sm:$0xf] %vm669, %v654
        %688 = vst.msk [vmem:[#allocation3 + $0x48] sm:$0xf] %vm669, %v655
        %689 = vst.msk [vmem:[#allocation3 + $0x4c] sm:$0xf] %vm669, %v656
        %690 = vst.msk [vmem:[#allocation3 + $0x50] sm:$0xf] %vm669, %v657
        %691 = vst.msk [vmem:[#allocation3 + $0x54] sm:$0xf] %vm669, %v658
        %692 = vst.msk [vmem:[#allocation3 + $0x58] sm:$0xf] %vm669, %v659
        %693 = vst.msk [vmem:[#allocation3 + $0x5c] sm:$0xf] %vm669, %v660
        %694 = vst.msk [vmem:[#allocation3 + $0x60] sm:$0xf] %vm669, %v661
        %695 = vst.msk [vmem:[#allocation3 + $0x64] sm:$0xf] %vm669, %v662
        %696 = vst.msk [vmem:[#allocation3 + $0x68] sm:$0xf] %vm669, %v663
        %697 = vst.msk [vmem:[#allocation3 + $0x6c] sm:$0xf] %vm669, %v664
        %698 = vst.msk [vmem:[#allocation3 + $0x70] sm:$0xf] %vm669, %v665
        %699 = vst.msk [vmem:[#allocation3 + $0x74] sm:$0xf] %vm669, %v666
        %700 = vst.msk [vmem:[#allocation3 + $0x78] sm:$0xf] %vm669, %v667
        %701 = vst.msk [vmem:[#allocation3 + $0x7c] sm:$0xf] %vm669, %v668
        %v702 = vld [vmem:[#allocation2 + $0x1] sm:$0xff]
        %v703 = vld [vmem:[#allocation2 + $0x9] sm:$0xff]
        %v704 = vld [vmem:[#allocation2 + $0x19] sm:$0xff]
        %v705 = vld [vmem:[#allocation2 + $0x21] sm:$0xff]
        %v706 = vld [vmem:[#allocation2 + $0x31] sm:$0xff]
        %v707 = vld [vmem:[#allocation2 + $0x39] sm:$0xff]
        %v708 = vld [vmem:[#allocation2 + $0x49] sm:$0xff]
        %v709 = vld [vmem:[#allocation2 + $0x51] sm:$0xff]
        %v710 = vld [vmem:[#allocation2 + $0x61] sm:$0xff]
        %v711 = vld [vmem:[#allocation2 + $0x69] sm:$0xff]
        %v712 = vld [vmem:[#allocation2 + $0x79] sm:$0xff]
        %v713 = vld [vmem:[#allocation2 + $0x81] sm:$0xff]
        %v714 = vld [vmem:[#allocation2 + $0x91] sm:$0xff]
        %v715 = vld [vmem:[#allocation2 + $0x99] sm:$0xff]
        %v716 = vld [vmem:[#allocation2 + $0xa9] sm:$0xff]
        %v717 = vld [vmem:[#allocation2 + $0xb1] sm:$0xff]
        %v718 = vld [vmem:[#allocation2 + $0xc1] sm:$0xff]
        %v719 = vld [vmem:[#allocation2 + $0xc9] sm:$0xff]
        %v720 = vld [vmem:[#allocation2 + $0xd9] sm:$0xff]
        %v721 = vld [vmem:[#allocation2 + $0xe1] sm:$0xff]
        %v722 = vld [vmem:[#allocation2 + $0xf1] sm:$0xff]
        %v723 = vld [vmem:[#allocation2 + $0xf9] sm:$0xff]
        %v724 = vld [vmem:[#allocation2 + $0x109] sm:$0xff]
        %v725 = vld [vmem:[#allocation2 + $0x111] sm:$0xff]
        %v726 = vld [vmem:[#allocation2 + $0x121] sm:$0xff]
        %v727 = vld [vmem:[#allocation2 + $0x129] sm:$0xff]
        %v728 = vld [vmem:[#allocation2 + $0x139] sm:$0xff]
        %v729 = vld [vmem:[#allocation2 + $0x141] sm:$0xff]
        %v730 = vld [vmem:[#allocation2 + $0x151] sm:$0xff]
        %v731 = vld [vmem:[#allocation2 + $0x159] sm:$0xff]
        %v732 = vld [vmem:[#allocation2 + $0x169] sm:$0xff]
        %v733 = vld [vmem:[#allocation2 + $0x171] sm:$0xff]
        %v734 = vpack.c.bf16 %v702, %v702
        %v735 = vpack.c.bf16 %v703, %v703
        %v736 = vpack.c.bf16 %v704, %v704
        %v737 = vpack.c.bf16 %v705, %v705
        %v738 = vpack.c.bf16 %v706, %v706
        %v739 = vpack.c.bf16 %v707, %v707
        %v740 = vpack.c.bf16 %v708, %v708
        %v741 = vpack.c.bf16 %v709, %v709
        %v742 = vpack.c.bf16 %v710, %v710
        %v743 = vpack.c.bf16 %v711, %v711
        %v744 = vpack.c.bf16 %v712, %v712
        %v745 = vpack.c.bf16 %v713, %v713
        %v746 = vpack.c.bf16 %v714, %v714
        %v747 = vpack.c.bf16 %v715, %v715
        %v748 = vpack.c.bf16 %v716, %v716
        %v749 = vpack.c.bf16 %v717, %v717
        %v750 = vpack.c.bf16 %v718, %v718
        %v751 = vpack.c.bf16 %v719, %v719
        %v752 = vpack.c.bf16 %v720, %v720
        %v753 = vpack.c.bf16 %v721, %v721
        %v754 = vpack.c.bf16 %v722, %v722
        %v755 = vpack.c.bf16 %v723, %v723
        %v756 = vpack.c.bf16 %v724, %v724
        %v757 = vpack.c.bf16 %v725, %v725
        %v758 = vpack.c.bf16 %v726, %v726
        %v759 = vpack.c.bf16 %v727, %v727
        %v760 = vpack.c.bf16 %v728, %v728
        %v761 = vpack.c.bf16 %v729, %v729
        %v762 = vpack.c.bf16 %v730, %v730
        %v763 = vpack.c.bf16 %v731, %v731
        %v764 = vpack.c.bf16 %v732, %v732
        %v765 = vpack.c.bf16 %v733, %v733
        %798 = vrot.lane.b32.xlu0 %v734, 4
        %v799 = vpop.permute.xlu0 %798
        %800 = vrot.lane.b32.xlu0 %v735, 4
        %v801 = vpop.permute.xlu0 %800
        %802 = vrot.lane.b32.xlu0 %v736, 4
        %v803 = vpop.permute.xlu0 %802
        %804 = vrot.lane.b32.xlu0 %v737, 4
        %v805 = vpop.permute.xlu0 %804
        %806 = vrot.lane.b32.xlu0 %v738, 4
        %v807 = vpop.permute.xlu0 %806
        %808 = vrot.lane.b32.xlu0 %v739, 4
        %v809 = vpop.permute.xlu0 %808
        %810 = vrot.lane.b32.xlu0 %v740, 4
        %v811 = vpop.permute.xlu0 %810
        %812 = vrot.lane.b32.xlu0 %v741, 4
        %v813 = vpop.permute.xlu0 %812
        %814 = vrot.lane.b32.xlu0 %v742, 4
        %v815 = vpop.permute.xlu0 %814
        %816 = vrot.lane.b32.xlu0 %v743, 4
        %v817 = vpop.permute.xlu0 %816
        %818 = vrot.lane.b32.xlu0 %v744, 4
        %v819 = vpop.permute.xlu0 %818
        %820 = vrot.lane.b32.xlu0 %v745, 4
        %v821 = vpop.permute.xlu0 %820
        %822 = vrot.lane.b32.xlu0 %v746, 4
        %v823 = vpop.permute.xlu0 %822
        %824 = vrot.lane.b32.xlu0 %v747, 4
        %v825 = vpop.permute.xlu0 %824
        %826 = vrot.lane.b32.xlu0 %v748, 4
        %v827 = vpop.permute.xlu0 %826
        %828 = vrot.lane.b32.xlu0 %v749, 4
        %v829 = vpop.permute.xlu0 %828
        %830 = vrot.lane.b32.xlu0 %v750, 4
        %v831 = vpop.permute.xlu0 %830
        %832 = vrot.lane.b32.xlu0 %v751, 4
        %v833 = vpop.permute.xlu0 %832
        %834 = vrot.lane.b32.xlu0 %v752, 4
        %v835 = vpop.permute.xlu0 %834
        %836 = vrot.lane.b32.xlu0 %v753, 4
        %v837 = vpop.permute.xlu0 %836
        %838 = vrot.lane.b32.xlu0 %v754, 4
        %v839 = vpop.permute.xlu0 %838
        %840 = vrot.lane.b32.xlu0 %v755, 4
        %v841 = vpop.permute.xlu0 %840
        %842 = vrot.lane.b32.xlu0 %v756, 4
        %v843 = vpop.permute.xlu0 %842
        %844 = vrot.lane.b32.xlu0 %v757, 4
        %v845 = vpop.permute.xlu0 %844
        %846 = vrot.lane.b32.xlu0 %v758, 4
        %v847 = vpop.permute.xlu0 %846
        %848 = vrot.lane.b32.xlu0 %v759, 4
        %v849 = vpop.permute.xlu0 %848
        %850 = vrot.lane.b32.xlu0 %v760, 4
        %v851 = vpop.permute.xlu0 %850
        %852 = vrot.lane.b32.xlu0 %v761, 4
        %v853 = vpop.permute.xlu0 %852
        %854 = vrot.lane.b32.xlu0 %v762, 4
        %v855 = vpop.permute.xlu0 %854
        %856 = vrot.lane.b32.xlu0 %v763, 4
        %v857 = vpop.permute.xlu0 %856
        %858 = vrot.lane.b32.xlu0 %v764, 4
        %v859 = vpop.permute.xlu0 %858
        %860 = vrot.lane.b32.xlu0 %v765, 4
        %v861 = vpop.permute.xlu0 %860
        %vm894 = vcmask 60448
        %895 = vst.msk [vmem:[#allocation3] sm:$0xf] %vm894, %v799
        %896 = vst.msk [vmem:[#allocation3 + $0x4] sm:$0xf] %vm894, %v801
        %897 = vst.msk [vmem:[#allocation3 + $0x8] sm:$0xf] %vm894, %v803
        %898 = vst.msk [vmem:[#allocation3 + $0xc] sm:$0xf] %vm894, %v805
        %899 = vst.msk [vmem:[#allocation3 + $0x10] sm:$0xf] %vm894, %v807
        %900 = vst.msk [vmem:[#allocation3 + $0x14] sm:$0xf] %vm894, %v809
        %901 = vst.msk [vmem:[#allocation3 + $0x18] sm:$0xf] %vm894, %v811
        %902 = vst.msk [vmem:[#allocation3 + $0x1c] sm:$0xf] %vm894, %v813
        %903 = vst.msk [vmem:[#allocation3 + $0x20] sm:$0xf] %vm894, %v815
        %904 = vst.msk [vmem:[#allocation3 + $0x24] sm:$0xf] %vm894, %v817
        %905 = vst.msk [vmem:[#allocation3 + $0x28] sm:$0xf] %vm894, %v819
        %906 = vst.msk [vmem:[#allocation3 + $0x2c] sm:$0xf] %vm894, %v821
        %907 = vst.msk [vmem:[#allocation3 + $0x30] sm:$0xf] %vm894, %v823
        %908 = vst.msk [vmem:[#allocation3 + $0x34] sm:$0xf] %vm894, %v825
        %909 = vst.msk [vmem:[#allocation3 + $0x38] sm:$0xf] %vm894, %v827
        %910 = vst.msk [vmem:[#allocation3 + $0x3c] sm:$0xf] %vm894, %v829
        %911 = vst.msk [vmem:[#allocation3 + $0x40] sm:$0xf] %vm894, %v831
        %912 = vst.msk [vmem:[#allocation3 + $0x44] sm:$0xf] %vm894, %v833
        %913 = vst.msk [vmem:[#allocation3 + $0x48] sm:$0xf] %vm894, %v835
        %914 = vst.msk [vmem:[#allocation3 + $0x4c] sm:$0xf] %vm894, %v837
        %915 = vst.msk [vmem:[#allocation3 + $0x50] sm:$0xf] %vm894, %v839
        %916 = vst.msk [vmem:[#allocation3 + $0x54] sm:$0xf] %vm894, %v841
        %917 = vst.msk [vmem:[#allocation3 + $0x58] sm:$0xf] %vm894, %v843
        %918 = vst.msk [vmem:[#allocation3 + $0x5c] sm:$0xf] %vm894, %v845
        %919 = vst.msk [vmem:[#allocation3 + $0x60] sm:$0xf] %vm894, %v847
        %920 = vst.msk [vmem:[#allocation3 + $0x64] sm:$0xf] %vm894, %v849
        %921 = vst.msk [vmem:[#allocation3 + $0x68] sm:$0xf] %vm894, %v851
        %922 = vst.msk [vmem:[#allocation3 + $0x6c] sm:$0xf] %vm894, %v853
        %923 = vst.msk [vmem:[#allocation3 + $0x70] sm:$0xf] %vm894, %v855
        %924 = vst.msk [vmem:[#allocation3 + $0x74] sm:$0xf] %vm894, %v857
        %925 = vst.msk [vmem:[#allocation3 + $0x78] sm:$0xf] %vm894, %v859
        %926 = vst.msk [vmem:[#allocation3 + $0x7c] sm:$0xf] %vm894, %v861
        %v927 = vld [vmem:[#allocation2 + $0x2] sm:$0xff]
        %v928 = vld [vmem:[#allocation2 + $0xa] sm:$0xff]
        %v929 = vld [vmem:[#allocation2 + $0x1a] sm:$0xff]
        %v930 = vld [vmem:[#allocation2 + $0x22] sm:$0xff]
        %v931 = vld [vmem:[#allocation2 + $0x32] sm:$0xff]
        %v932 = vld [vmem:[#allocation2 + $0x3a] sm:$0xff]
        %v933 = vld [vmem:[#allocation2 + $0x4a] sm:$0xff]
        %v934 = vld [vmem:[#allocation2 + $0x52] sm:$0xff]
        %v935 = vld [vmem:[#allocation2 + $0x62] sm:$0xff]
        %v936 = vld [vmem:[#allocation2 + $0x6a] sm:$0xff]
        %v937 = vld [vmem:[#allocation2 + $0x7a] sm:$0xff]
        %v938 = vld [vmem:[#allocation2 + $0x82] sm:$0xff]
        %v939 = vld [vmem:[#allocation2 + $0x92] sm:$0xff]
        %v940 = vld [vmem:[#allocation2 + $0x9a] sm:$0xff]
        %v941 = vld [vmem:[#allocation2 + $0xaa] sm:$0xff]
        %v942 = vld [vmem:[#allocation2 + $0xb2] sm:$0xff]
        %v943 = vld [vmem:[#allocation2 + $0xc2] sm:$0xff]
        %v944 = vld [vmem:[#allocation2 + $0xca] sm:$0xff]
        %v945 = vld [vmem:[#allocation2 + $0xda] sm:$0xff]
        %v946 = vld [vmem:[#allocation2 + $0xe2] sm:$0xff]
        %v947 = vld [vmem:[#allocation2 + $0xf2] sm:$0xff]
        %v948 = vld [vmem:[#allocation2 + $0xfa] sm:$0xff]
        %v949 = vld [vmem:[#allocation2 + $0x10a] sm:$0xff]
        %v950 = vld [vmem:[#allocation2 + $0x112] sm:$0xff]
        %v951 = vld [vmem:[#allocation2 + $0x122] sm:$0xff]
        %v952 = vld [vmem:[#allocation2 + $0x12a] sm:$0xff]
        %v953 = vld [vmem:[#allocation2 + $0x13a] sm:$0xff]
        %v954 = vld [vmem:[#allocation2 + $0x142] sm:$0xff]
        %v955 = vld [vmem:[#allocation2 + $0x152] sm:$0xff]
        %v956 = vld [vmem:[#allocation2 + $0x15a] sm:$0xff]
        %v957 = vld [vmem:[#allocation2 + $0x16a] sm:$0xff]
        %v958 = vld [vmem:[#allocation2 + $0x172] sm:$0xff]
        %v959 = vpack.c.bf16 %v927, %v927
        %v960 = vpack.c.bf16 %v928, %v928
        %v961 = vpack.c.bf16 %v929, %v929
        %v962 = vpack.c.bf16 %v930, %v930
        %v963 = vpack.c.bf16 %v931, %v931
        %v964 = vpack.c.bf16 %v932, %v932
        %v965 = vpack.c.bf16 %v933, %v933
        %v966 = vpack.c.bf16 %v934, %v934
        %v967 = vpack.c.bf16 %v935, %v935
        %v968 = vpack.c.bf16 %v936, %v936
        %v969 = vpack.c.bf16 %v937, %v937
        %v970 = vpack.c.bf16 %v938, %v938
        %v971 = vpack.c.bf16 %v939, %v939
        %v972 = vpack.c.bf16 %v940, %v940
        %v973 = vpack.c.bf16 %v941, %v941
        %v974 = vpack.c.bf16 %v942, %v942
        %v975 = vpack.c.bf16 %v943, %v943
        %v976 = vpack.c.bf16 %v944, %v944
        %v977 = vpack.c.bf16 %v945, %v945
        %v978 = vpack.c.bf16 %v946, %v946
        %v979 = vpack.c.bf16 %v947, %v947
        %v980 = vpack.c.bf16 %v948, %v948
        %v981 = vpack.c.bf16 %v949, %v949
        %v982 = vpack.c.bf16 %v950, %v950
        %v983 = vpack.c.bf16 %v951, %v951
        %v984 = vpack.c.bf16 %v952, %v952
        %v985 = vpack.c.bf16 %v953, %v953
        %v986 = vpack.c.bf16 %v954, %v954
        %v987 = vpack.c.bf16 %v955, %v955
        %v988 = vpack.c.bf16 %v956, %v956
        %v989 = vpack.c.bf16 %v957, %v957
        %v990 = vpack.c.bf16 %v958, %v958
        %1023 = vrot.lane.b32.xlu0 %v959, 8
        %v1024 = vpop.permute.xlu0 %1023
        %1025 = vrot.lane.b32.xlu0 %v960, 8
        %v1026 = vpop.permute.xlu0 %1025
        %1027 = vrot.lane.b32.xlu0 %v961, 8
        %v1028 = vpop.permute.xlu0 %1027
        %1029 = vrot.lane.b32.xlu0 %v962, 8
        %v1030 = vpop.permute.xlu0 %1029
        %1031 = vrot.lane.b32.xlu0 %v963, 8
        %v1032 = vpop.permute.xlu0 %1031
        %1033 = vrot.lane.b32.xlu0 %v964, 8
        %v1034 = vpop.permute.xlu0 %1033
        %1035 = vrot.lane.b32.xlu0 %v965, 8
        %v1036 = vpop.permute.xlu0 %1035
        %1037 = vrot.lane.b32.xlu0 %v966, 8
        %v1038 = vpop.permute.xlu0 %1037
        %1039 = vrot.lane.b32.xlu0 %v967, 8
        %v1040 = vpop.permute.xlu0 %1039
        %1041 = vrot.lane.b32.xlu0 %v968, 8
        %v1042 = vpop.permute.xlu0 %1041
        %1043 = vrot.lane.b32.xlu0 %v969, 8
        %v1044 = vpop.permute.xlu0 %1043
        %1045 = vrot.lane.b32.xlu0 %v970, 8
        %v1046 = vpop.permute.xlu0 %1045
        %1047 = vrot.lane.b32.xlu0 %v971, 8
        %v1048 = vpop.permute.xlu0 %1047
        %1049 = vrot.lane.b32.xlu0 %v972, 8
        %v1050 = vpop.permute.xlu0 %1049
        %1051 = vrot.lane.b32.xlu0 %v973, 8
        %v1052 = vpop.permute.xlu0 %1051
        %1053 = vrot.lane.b32.xlu0 %v974, 8
        %v1054 = vpop.permute.xlu0 %1053
        %1055 = vrot.lane.b32.xlu0 %v975, 8
        %v1056 = vpop.permute.xlu0 %1055
        %1057 = vrot.lane.b32.xlu0 %v976, 8
        %v1058 = vpop.permute.xlu0 %1057
        %1059 = vrot.lane.b32.xlu0 %v977, 8
        %v1060 = vpop.permute.xlu0 %1059
        %1061 = vrot.lane.b32.xlu0 %v978, 8
        %v1062 = vpop.permute.xlu0 %1061
        %1063 = vrot.lane.b32.xlu0 %v979, 8
        %v1064 = vpop.permute.xlu0 %1063
        %1065 = vrot.lane.b32.xlu0 %v980, 8
        %v1066 = vpop.permute.xlu0 %1065
        %1067 = vrot.lane.b32.xlu0 %v981, 8
        %v1068 = vpop.permute.xlu0 %1067
        %1069 = vrot.lane.b32.xlu0 %v982, 8
        %v1070 = vpop.permute.xlu0 %1069
        %1071 = vrot.lane.b32.xlu0 %v983, 8
        %v1072 = vpop.permute.xlu0 %1071
        %1073 = vrot.lane.b32.xlu0 %v984, 8
        %v1074 = vpop.permute.xlu0 %1073
        %1075 = vrot.lane.b32.xlu0 %v985, 8
        %v1076 = vpop.permute.xlu0 %1075
        %1077 = vrot.lane.b32.xlu0 %v986, 8
        %v1078 = vpop.permute.xlu0 %1077
        %1079 = vrot.lane.b32.xlu0 %v987, 8
        %v1080 = vpop.permute.xlu0 %1079
        %1081 = vrot.lane.b32.xlu0 %v988, 8
        %v1082 = vpop.permute.xlu0 %1081
        %1083 = vrot.lane.b32.xlu0 %v989, 8
        %v1084 = vpop.permute.xlu0 %1083
        %1085 = vrot.lane.b32.xlu0 %v990, 8
        %v1086 = vpop.permute.xlu0 %1085
        %vm1119 = vcmask 93248
        %1120 = vst.msk [vmem:[#allocation3] sm:$0xf] %vm1119, %v1024
        %1121 = vst.msk [vmem:[#allocation3 + $0x4] sm:$0xf] %vm1119, %v1026
        %1122 = vst.msk [vmem:[#allocation3 + $0x8] sm:$0xf] %vm1119, %v1028
        %1123 = vst.msk [vmem:[#allocation3 + $0xc] sm:$0xf] %vm1119, %v1030
        %1124 = vst.msk [vmem:[#allocation3 + $0x10] sm:$0xf] %vm1119, %v1032
        %1125 = vst.msk [vmem:[#allocation3 + $0x14] sm:$0xf] %vm1119, %v1034
        %1126 = vst.msk [vmem:[#allocation3 + $0x18] sm:$0xf] %vm1119, %v1036
        %1127 = vst.msk [vmem:[#allocation3 + $0x1c] sm:$0xf] %vm1119, %v1038
        %1128 = vst.msk [vmem:[#allocation3 + $0x20] sm:$0xf] %vm1119, %v1040
        %1129 = vst.msk [vmem:[#allocation3 + $0x24] sm:$0xf] %vm1119, %v1042
        %1130 = vst.msk [vmem:[#allocation3 + $0x28] sm:$0xf] %vm1119, %v1044
        %1131 = vst.msk [vmem:[#allocation3 + $0x2c] sm:$0xf] %vm1119, %v1046
        %1132 = vst.msk [vmem:[#allocation3 + $0x30] sm:$0xf] %vm1119, %v1048
        %1133 = vst.msk [vmem:[#allocation3 + $0x34] sm:$0xf] %vm1119, %v1050
        %1134 = vst.msk [vmem:[#allocation3 + $0x38] sm:$0xf] %vm1119, %v1052
        %1135 = vst.msk [vmem:[#allocation3 + $0x3c] sm:$0xf] %vm1119, %v1054
        %1136 = vst.msk [vmem:[#allocation3 + $0x40] sm:$0xf] %vm1119, %v1056
        %1137 = vst.msk [vmem:[#allocation3 + $0x44] sm:$0xf] %vm1119, %v1058
        %1138 = vst.msk [vmem:[#allocation3 + $0x48] sm:$0xf] %vm1119, %v1060
        %1139 = vst.msk [vmem:[#allocation3 + $0x4c] sm:$0xf] %vm1119, %v1062
        %1140 = vst.msk [vmem:[#allocation3 + $0x50] sm:$0xf] %vm1119, %v1064
        %1141 = vst.msk [vmem:[#allocation3 + $0x54] sm:$0xf] %vm1119, %v1066
        %1142 = vst.msk [vmem:[#allocation3 + $0x58] sm:$0xf] %vm1119, %v1068
        %1143 = vst.msk [vmem:[#allocation3 + $0x5c] sm:$0xf] %vm1119, %v1070
        %1144 = vst.msk [vmem:[#allocation3 + $0x60] sm:$0xf] %vm1119, %v1072
        %1145 = vst.msk [vmem:[#allocation3 + $0x64] sm:$0xf] %vm1119, %v1074
        %1146 = vst.msk [vmem:[#allocation3 + $0x68] sm:$0xf] %vm1119, %v1076
        %1147 = vst.msk [vmem:[#allocation3 + $0x6c] sm:$0xf] %vm1119, %v1078
        %1148 = vst.msk [vmem:[#allocation3 + $0x70] sm:$0xf] %vm1119, %v1080
        %1149 = vst.msk [vmem:[#allocation3 + $0x74] sm:$0xf] %vm1119, %v1082
        %1150 = vst.msk [vmem:[#allocation3 + $0x78] sm:$0xf] %vm1119, %v1084
        %1151 = vst.msk [vmem:[#allocation3 + $0x7c] sm:$0xf] %vm1119, %v1086
        %v1152 = vld [vmem:[%s539] sm:$0xff]
        %v1153 = vld [vmem:[%s539 + $0x8] sm:$0xff]
        %v1154 = vld [vmem:[%s539 + $0x18] sm:$0xff]
        %v1155 = vld [vmem:[%s539 + $0x20] sm:$0xff]
        %v1156 = vld [vmem:[%s539 + $0x30] sm:$0xff]
        %v1157 = vld [vmem:[%s539 + $0x38] sm:$0xff]
        %v1158 = vld [vmem:[%s539 + $0x48] sm:$0xff]
        %v1159 = vld [vmem:[%s539 + $0x50] sm:$0xff]
        %v1160 = vld [vmem:[%s539 + $0x60] sm:$0xff]
        %v1161 = vld [vmem:[%s539 + $0x68] sm:$0xff]
        %v1162 = vld [vmem:[%s539 + $0x78] sm:$0xff]
        %v1163 = vld [vmem:[%s539 + $0x80] sm:$0xff]
        %v1164 = vld [vmem:[%s539 + $0x90] sm:$0xff]
        %v1165 = vld [vmem:[%s539 + $0x98] sm:$0xff]
        %v1166 = vld [vmem:[%s539 + $0xa8] sm:$0xff]
        %v1167 = vld [vmem:[%s539 + $0xb0] sm:$0xff]
        %v1168 = vld [vmem:[%s539 + $0xc0] sm:$0xff]
        %v1169 = vld [vmem:[%s539 + $0xc8] sm:$0xff]
        %v1170 = vld [vmem:[%s539 + $0xd8] sm:$0xff]
        %v1171 = vld [vmem:[%s539 + $0xe0] sm:$0xff]
        %v1172 = vld [vmem:[%s539 + $0xf0] sm:$0xff]
        %v1173 = vld [vmem:[%s539 + $0xf8] sm:$0xff]
        %v1174 = vld [vmem:[%s539 + $0x108] sm:$0xff]
        %v1175 = vld [vmem:[%s539 + $0x110] sm:$0xff]
        %v1176 = vld [vmem:[%s539 + $0x120] sm:$0xff]
        %v1177 = vld [vmem:[%s539 + $0x128] sm:$0xff]
        %v1178 = vld [vmem:[%s539 + $0x138] sm:$0xff]
        %v1179 = vld [vmem:[%s539 + $0x140] sm:$0xff]
        %v1180 = vld [vmem:[%s539 + $0x150] sm:$0xff]
        %v1181 = vld [vmem:[%s539 + $0x158] sm:$0xff]
        %v1182 = vld [vmem:[%s539 + $0x168] sm:$0xff]
        %v1183 = vld [vmem:[%s539 + $0x170] sm:$0xff]
        %v1184 = vpack.c.bf16 %v1152, %v1152
        %v1185 = vpack.c.bf16 %v1153, %v1153
        %v1186 = vpack.c.bf16 %v1154, %v1154
        %v1187 = vpack.c.bf16 %v1155, %v1155
        %v1188 = vpack.c.bf16 %v1156, %v1156
        %v1189 = vpack.c.bf16 %v1157, %v1157
        %v1190 = vpack.c.bf16 %v1158, %v1158
        %v1191 = vpack.c.bf16 %v1159, %v1159
        %v1192 = vpack.c.bf16 %v1160, %v1160
        %v1193 = vpack.c.bf16 %v1161, %v1161
        %v1194 = vpack.c.bf16 %v1162, %v1162
        %v1195 = vpack.c.bf16 %v1163, %v1163
        %v1196 = vpack.c.bf16 %v1164, %v1164
        %v1197 = vpack.c.bf16 %v1165, %v1165
        %v1198 = vpack.c.bf16 %v1166, %v1166
        %v1199 = vpack.c.bf16 %v1167, %v1167
        %v1200 = vpack.c.bf16 %v1168, %v1168
        %v1201 = vpack.c.bf16 %v1169, %v1169
        %v1202 = vpack.c.bf16 %v1170, %v1170
        %v1203 = vpack.c.bf16 %v1171, %v1171
        %v1204 = vpack.c.bf16 %v1172, %v1172
        %v1205 = vpack.c.bf16 %v1173, %v1173
        %v1206 = vpack.c.bf16 %v1174, %v1174
        %v1207 = vpack.c.bf16 %v1175, %v1175
        %v1208 = vpack.c.bf16 %v1176, %v1176
        %v1209 = vpack.c.bf16 %v1177, %v1177
        %v1210 = vpack.c.bf16 %v1178, %v1178
        %v1211 = vpack.c.bf16 %v1179, %v1179
        %v1212 = vpack.c.bf16 %v1180, %v1180
        %v1213 = vpack.c.bf16 %v1181, %v1181
        %v1214 = vpack.c.bf16 %v1182, %v1182
        %v1215 = vpack.c.bf16 %v1183, %v1183
        %1248 = vrot.lane.b32.xlu0 %v1184, 12
        %v1249 = vpop.permute.xlu0 %1248
        %1250 = vrot.lane.b32.xlu0 %v1185, 12
        %v1251 = vpop.permute.xlu0 %1250
        %1252 = vrot.lane.b32.xlu0 %v1186, 12
        %v1253 = vpop.permute.xlu0 %1252
        %1254 = vrot.lane.b32.xlu0 %v1187, 12
        %v1255 = vpop.permute.xlu0 %1254
        %1256 = vrot.lane.b32.xlu0 %v1188, 12
        %v1257 = vpop.permute.xlu0 %1256
        %1258 = vrot.lane.b32.xlu0 %v1189, 12
        %v1259 = vpop.permute.xlu0 %1258
        %1260 = vrot.lane.b32.xlu0 %v1190, 12
        %v1261 = vpop.permute.xlu0 %1260
        %1262 = vrot.lane.b32.xlu0 %v1191, 12
        %v1263 = vpop.permute.xlu0 %1262
        %1264 = vrot.lane.b32.xlu0 %v1192, 12
        %v1265 = vpop.permute.xlu0 %1264
        %1266 = vrot.lane.b32.xlu0 %v1193, 12
        %v1267 = vpop.permute.xlu0 %1266
        %1268 = vrot.lane.b32.xlu0 %v1194, 12
        %v1269 = vpop.permute.xlu0 %1268
        %1270 = vrot.lane.b32.xlu0 %v1195, 12
        %v1271 = vpop.permute.xlu0 %1270
        %1272 = vrot.lane.b32.xlu0 %v1196, 12
        %v1273 = vpop.permute.xlu0 %1272
        %1274 = vrot.lane.b32.xlu0 %v1197, 12
        %v1275 = vpop.permute.xlu0 %1274
        %1276 = vrot.lane.b32.xlu0 %v1198, 12
        %v1277 = vpop.permute.xlu0 %1276
        %1278 = vrot.lane.b32.xlu0 %v1199, 12
        %v1279 = vpop.permute.xlu0 %1278
        %1280 = vrot.lane.b32.xlu0 %v1200, 12
        %v1281 = vpop.permute.xlu0 %1280
        %1282 = vrot.lane.b32.xlu0 %v1201, 12
        %v1283 = vpop.permute.xlu0 %1282
        %1284 = vrot.lane.b32.xlu0 %v1202, 12
        %v1285 = vpop.permute.xlu0 %1284
        %1286 = vrot.lane.b32.xlu0 %v1203, 12
        %v1287 = vpop.permute.xlu0 %1286
        %1288 = vrot.lane.b32.xlu0 %v1204, 12
        %v1289 = vpop.permute.xlu0 %1288
        %1290 = vrot.lane.b32.xlu0 %v1205, 12
        %v1291 = vpop.permute.xlu0 %1290
        %1292 = vrot.lane.b32.xlu0 %v1206, 12
        %v1293 = vpop.permute.xlu0 %1292
        %1294 = vrot.lane.b32.xlu0 %v1207, 12
        %v1295 = vpop.permute.xlu0 %1294
        %1296 = vrot.lane.b32.xlu0 %v1208, 12
        %v1297 = vpop.permute.xlu0 %1296
        %1298 = vrot.lane.b32.xlu0 %v1209, 12
        %v1299 = vpop.permute.xlu0 %1298
        %1300 = vrot.lane.b32.xlu0 %v1210, 12
        %v1301 = vpop.permute.xlu0 %1300
        %1302 = vrot.lane.b32.xlu0 %v1211, 12
        %v1303 = vpop.permute.xlu0 %1302
        %1304 = vrot.lane.b32.xlu0 %v1212, 12
        %v1305 = vpop.permute.xlu0 %1304
        %1306 = vrot.lane.b32.xlu0 %v1213, 12
        %v1307 = vpop.permute.xlu0 %1306
        %1308 = vrot.lane.b32.xlu0 %v1214, 12
        %v1309 = vpop.permute.xlu0 %1308
        %1310 = vrot.lane.b32.xlu0 %v1215, 12
        %v1311 = vpop.permute.xlu0 %1310
        %vm1344 = vcmask 126048
        %1345 = vst.msk [vmem:[#allocation3] sm:$0xf] %vm1344, %v1249
        %1346 = vst.msk [vmem:[#allocation3 + $0x4] sm:$0xf] %vm1344, %v1251
        %1347 = vst.msk [vmem:[#allocation3 + $0x8] sm:$0xf] %vm1344, %v1253
        %1348 = vst.msk [vmem:[#allocation3 + $0xc] sm:$0xf] %vm1344, %v1255
        %1349 = vst.msk [vmem:[#allocation3 + $0x10] sm:$0xf] %vm1344, %v1257
        %1350 = vst.msk [vmem:[#allocation3 + $0x14] sm:$0xf] %vm1344, %v1259
        %1351 = vst.msk [vmem:[#allocation3 + $0x18] sm:$0xf] %vm1344, %v1261
        %1352 = vst.msk [vmem:[#allocation3 + $0x1c] sm:$0xf] %vm1344, %v1263
        %1353 = vst.msk [vmem:[#allocation3 + $0x20] sm:$0xf] %vm1344, %v1265
        %1354 = vst.msk [vmem:[#allocation3 + $0x24] sm:$0xf] %vm1344, %v1267
        %1355 = vst.msk [vmem:[#allocation3 + $0x28] sm:$0xf] %vm1344, %v1269
        %1356 = vst.msk [vmem:[#allocation3 + $0x2c] sm:$0xf] %vm1344, %v1271
        %1357 = vst.msk [vmem:[#allocation3 + $0x30] sm:$0xf] %vm1344, %v1273
        %1358 = vst.msk [vmem:[#allocation3 + $0x34] sm:$0xf] %vm1344, %v1275
        %1359 = vst.msk [vmem:[#allocation3 + $0x38] sm:$0xf] %vm1344, %v1277
        %1360 = vst.msk [vmem:[#allocation3 + $0x3c] sm:$0xf] %vm1344, %v1279
        %1361 = vst.msk [vmem:[#allocation3 + $0x40] sm:$0xf] %vm1344, %v1281
        %1362 = vst.msk [vmem:[#allocation3 + $0x44] sm:$0xf] %vm1344, %v1283
        %1363 = vst.msk [vmem:[#allocation3 + $0x48] sm:$0xf] %vm1344, %v1285
        %1364 = vst.msk [vmem:[#allocation3 + $0x4c] sm:$0xf] %vm1344, %v1287
        %1365 = vst.msk [vmem:[#allocation3 + $0x50] sm:$0xf] %vm1344, %v1289
        %1366 = vst.msk [vmem:[#allocation3 + $0x54] sm:$0xf] %vm1344, %v1291
        %1367 = vst.msk [vmem:[#allocation3 + $0x58] sm:$0xf] %vm1344, %v1293
        %1368 = vst.msk [vmem:[#allocation3 + $0x5c] sm:$0xf] %vm1344, %v1295
        %1369 = vst.msk [vmem:[#allocation3 + $0x60] sm:$0xf] %vm1344, %v1297
        %1370 = vst.msk [vmem:[#allocation3 + $0x64] sm:$0xf] %vm1344, %v1299
        %1371 = vst.msk [vmem:[#allocation3 + $0x68] sm:$0xf] %vm1344, %v1301
        %1372 = vst.msk [vmem:[#allocation3 + $0x6c] sm:$0xf] %vm1344, %v1303
        %1373 = vst.msk [vmem:[#allocation3 + $0x70] sm:$0xf] %vm1344, %v1305
        %1374 = vst.msk [vmem:[#allocation3 + $0x74] sm:$0xf] %vm1344, %v1307
        %1375 = vst.msk [vmem:[#allocation3 + $0x78] sm:$0xf] %vm1344, %v1309
        %1376 = vst.msk [vmem:[#allocation3 + $0x7c] sm:$0xf] %vm1344, %v1311
        %v1377 = vld [vmem:[%s539 + $0x1] sm:$0xff]
        %v1378 = vld [vmem:[%s539 + $0x9] sm:$0xff]
        %v1379 = vld [vmem:[%s539 + $0x19] sm:$0xff]
        %v1380 = vld [vmem:[%s539 + $0x21] sm:$0xff]
        %v1381 = vld [vmem:[%s539 + $0x31] sm:$0xff]
        %v1382 = vld [vmem:[%s539 + $0x39] sm:$0xff]
        %v1383 = vld [vmem:[%s539 + $0x49] sm:$0xff]
        %v1384 = vld [vmem:[%s539 + $0x51] sm:$0xff]
        %v1385 = vld [vmem:[%s539 + $0x61] sm:$0xff]
        %v1386 = vld [vmem:[%s539 + $0x69] sm:$0xff]
        %v1387 = vld [vmem:[%s539 + $0x79] sm:$0xff]
        %v1388 = vld [vmem:[%s539 + $0x81] sm:$0xff]
        %v1389 = vld [vmem:[%s539 + $0x91] sm:$0xff]
        %v1390 = vld [vmem:[%s539 + $0x99] sm:$0xff]
        %v1391 = vld [vmem:[%s539 + $0xa9] sm:$0xff]
        %v1392 = vld [vmem:[%s539 + $0xb1] sm:$0xff]
        %v1393 = vld [vmem:[%s539 + $0xc1] sm:$0xff]
        %v1394 = vld [vmem:[%s539 + $0xc9] sm:$0xff]
        %v1395 = vld [vmem:[%s539 + $0xd9] sm:$0xff]
        %v1396 = vld [vmem:[%s539 + $0xe1] sm:$0xff]
        %v1397 = vld [vmem:[%s539 + $0xf1] sm:$0xff]
        %v1398 = vld [vmem:[%s539 + $0xf9] sm:$0xff]
        %v1399 = vld [vmem:[%s539 + $0x109] sm:$0xff]
        %v1400 = vld [vmem:[%s539 + $0x111] sm:$0xff]
        %v1401 = vld [vmem:[%s539 + $0x121] sm:$0xff]
        %v1402 = vld [vmem:[%s539 + $0x129] sm:$0xff]
        %v1403 = vld [vmem:[%s539 + $0x139] sm:$0xff]
        %v1404 = vld [vmem:[%s539 + $0x141] sm:$0xff]
        %v1405 = vld [vmem:[%s539 + $0x151] sm:$0xff]
        %v1406 = vld [vmem:[%s539 + $0x159] sm:$0xff]
        %v1407 = vld [vmem:[%s539 + $0x169] sm:$0xff]
        %v1408 = vld [vmem:[%s539 + $0x171] sm:$0xff]
        %v1409 = vpack.c.bf16 %v1377, %v1377
        %v1410 = vpack.c.bf16 %v1378, %v1378
        %v1411 = vpack.c.bf16 %v1379, %v1379
        %v1412 = vpack.c.bf16 %v1380, %v1380
        %v1413 = vpack.c.bf16 %v1381, %v1381
        %v1414 = vpack.c.bf16 %v1382, %v1382
        %v1415 = vpack.c.bf16 %v1383, %v1383
        %v1416 = vpack.c.bf16 %v1384, %v1384
        %v1417 = vpack.c.bf16 %v1385, %v1385
        %v1418 = vpack.c.bf16 %v1386, %v1386
        %v1419 = vpack.c.bf16 %v1387, %v1387
        %v1420 = vpack.c.bf16 %v1388, %v1388
        %v1421 = vpack.c.bf16 %v1389, %v1389
        %v1422 = vpack.c.bf16 %v1390, %v1390
        %v1423 = vpack.c.bf16 %v1391, %v1391
        %v1424 = vpack.c.bf16 %v1392, %v1392
        %v1425 = vpack.c.bf16 %v1393, %v1393
        %v1426 = vpack.c.bf16 %v1394, %v1394
        %v1427 = vpack.c.bf16 %v1395, %v1395
        %v1428 = vpack.c.bf16 %v1396, %v1396
        %v1429 = vpack.c.bf16 %v1397, %v1397
        %v1430 = vpack.c.bf16 %v1398, %v1398
        %v1431 = vpack.c.bf16 %v1399, %v1399
        %v1432 = vpack.c.bf16 %v1400, %v1400
        %v1433 = vpack.c.bf16 %v1401, %v1401
        %v1434 = vpack.c.bf16 %v1402, %v1402
        %v1435 = vpack.c.bf16 %v1403, %v1403
        %v1436 = vpack.c.bf16 %v1404, %v1404
        %v1437 = vpack.c.bf16 %v1405, %v1405
        %v1438 = vpack.c.bf16 %v1406, %v1406
        %v1439 = vpack.c.bf16 %v1407, %v1407
        %v1440 = vpack.c.bf16 %v1408, %v1408
        %1473 = vrot.lane.b32.xlu0 %v1409, 16
        %v1474 = vpop.permute.xlu0 %1473
        %1475 = vrot.lane.b32.xlu0 %v1410, 16
        %v1476 = vpop.permute.xlu0 %1475
        %1477 = vrot.lane.b32.xlu0 %v1411, 16
        %v1478 = vpop.permute.xlu0 %1477
        %1479 = vrot.lane.b32.xlu0 %v1412, 16
        %v1480 = vpop.permute.xlu0 %1479
        %1481 = vrot.lane.b32.xlu0 %v1413, 16
        %v1482 = vpop.permute.xlu0 %1481
        %1483 = vrot.lane.b32.xlu0 %v1414, 16
        %v1484 = vpop.permute.xlu0 %1483
        %1485 = vrot.lane.b32.xlu0 %v1415, 16
        %v1486 = vpop.permute.xlu0 %1485
        %1487 = vrot.lane.b32.xlu0 %v1416, 16
        %v1488 = vpop.permute.xlu0 %1487
        %1489 = vrot.lane.b32.xlu0 %v1417, 16
        %v1490 = vpop.permute.xlu0 %1489
        %1491 = vrot.lane.b32.xlu0 %v1418, 16
        %v1492 = vpop.permute.xlu0 %1491
        %1493 = vrot.lane.b32.xlu0 %v1419, 16
        %v1494 = vpop.permute.xlu0 %1493
        %1495 = vrot.lane.b32.xlu0 %v1420, 16
        %v1496 = vpop.permute.xlu0 %1495
        %1497 = vrot.lane.b32.xlu0 %v1421, 16
        %v1498 = vpop.permute.xlu0 %1497
        %1499 = vrot.lane.b32.xlu0 %v1422, 16
        %v1500 = vpop.permute.xlu0 %1499
        %1501 = vrot.lane.b32.xlu0 %v1423, 16
        %v1502 = vpop.permute.xlu0 %1501
        %1503 = vrot.lane.b32.xlu0 %v1424, 16
        %v1504 = vpop.permute.xlu0 %1503
        %1505 = vrot.lane.b32.xlu0 %v1425, 16
        %v1506 = vpop.permute.xlu0 %1505
        %1507 = vrot.lane.b32.xlu0 %v1426, 16
        %v1508 = vpop.permute.xlu0 %1507
        %1509 = vrot.lane.b32.xlu0 %v1427, 16
        %v1510 = vpop.permute.xlu0 %1509
        %1511 = vrot.lane.b32.xlu0 %v1428, 16
        %v1512 = vpop.permute.xlu0 %1511
        %1513 = vrot.lane.b32.xlu0 %v1429, 16
        %v1514 = vpop.permute.xlu0 %1513
        %1515 = vrot.lane.b32.xlu0 %v1430, 16
        %v1516 = vpop.permute.xlu0 %1515
        %1517 = vrot.lane.b32.xlu0 %v1431, 16
        %v1518 = vpop.permute.xlu0 %1517
        %1519 = vrot.lane.b32.xlu0 %v1432, 16
        %v1520 = vpop.permute.xlu0 %1519
        %1521 = vrot.lane.b32.xlu0 %v1433, 16
        %v1522 = vpop.permute.xlu0 %1521
        %1523 = vrot.lane.b32.xlu0 %v1434, 16
        %v1524 = vpop.permute.xlu0 %1523
        %1525 = vrot.lane.b32.xlu0 %v1435, 16
        %v1526 = vpop.permute.xlu0 %1525
        %1527 = vrot.lane.b32.xlu0 %v1436, 16
        %v1528 = vpop.permute.xlu0 %1527
        %1529 = vrot.lane.b32.xlu0 %v1437, 16
        %v1530 = vpop.permute.xlu0 %1529
        %1531 = vrot.lane.b32.xlu0 %v1438, 16
        %v1532 = vpop.permute.xlu0 %1531
        %1533 = vrot.lane.b32.xlu0 %v1439, 16
        %v1534 = vpop.permute.xlu0 %1533
        %1535 = vrot.lane.b32.xlu0 %v1440, 16
        %v1536 = vpop.permute.xlu0 %1535
        %vm1569 = vcmask 158848
        %1570 = vst.msk [vmem:[#allocation3] sm:$0xf] %vm1569, %v1474
        %1571 = vst.msk [vmem:[#allocation3 + $0x4] sm:$0xf] %vm1569, %v1476
        %1572 = vst.msk [vmem:[#allocation3 + $0x8] sm:$0xf] %vm1569, %v1478
        %1573 = vst.msk [vmem:[#allocation3 + $0xc] sm:$0xf] %vm1569, %v1480
        %1574 = vst.msk [vmem:[#allocation3 + $0x10] sm:$0xf] %vm1569, %v1482
        %1575 = vst.msk [vmem:[#allocation3 + $0x14] sm:$0xf] %vm1569, %v1484
        %1576 = vst.msk [vmem:[#allocation3 + $0x18] sm:$0xf] %vm1569, %v1486
        %1577 = vst.msk [vmem:[#allocation3 + $0x1c] sm:$0xf] %vm1569, %v1488
        %1578 = vst.msk [vmem:[#allocation3 + $0x20] sm:$0xf] %vm1569, %v1490
        %1579 = vst.msk [vmem:[#allocation3 + $0x24] sm:$0xf] %vm1569, %v1492
        %1580 = vst.msk [vmem:[#allocation3 + $0x28] sm:$0xf] %vm1569, %v1494
        %1581 = vst.msk [vmem:[#allocation3 + $0x2c] sm:$0xf] %vm1569, %v1496
        %1582 = vst.msk [vmem:[#allocation3 + $0x30] sm:$0xf] %vm1569, %v1498
        %1583 = vst.msk [vmem:[#allocation3 + $0x34] sm:$0xf] %vm1569, %v1500
        %1584 = vst.msk [vmem:[#allocation3 + $0x38] sm:$0xf] %vm1569, %v1502
        %1585 = vst.msk [vmem:[#allocation3 + $0x3c] sm:$0xf] %vm1569, %v1504
        %1586 = vst.msk [vmem:[#allocation3 + $0x40] sm:$0xf] %vm1569, %v1506
        %1587 = vst.msk [vmem:[#allocation3 + $0x44] sm:$0xf] %vm1569, %v1508
        %1588 = vst.msk [vmem:[#allocation3 + $0x48] sm:$0xf] %vm1569, %v1510
        %1589 = vst.msk [vmem:[#allocation3 + $0x4c] sm:$0xf] %vm1569, %v1512
        %1590 = vst.msk [vmem:[#allocation3 + $0x50] sm:$0xf] %vm1569, %v1514
        %1591 = vst.msk [vmem:[#allocation3 + $0x54] sm:$0xf] %vm1569, %v1516
        %1592 = vst.msk [vmem:[#allocation3 + $0x58] sm:$0xf] %vm1569, %v1518
        %1593 = vst.msk [vmem:[#allocation3 + $0x5c] sm:$0xf] %vm1569, %v1520
        %1594 = vst.msk [vmem:[#allocation3 + $0x60] sm:$0xf] %vm1569, %v1522
        %1595 = vst.msk [vmem:[#allocation3 + $0x64] sm:$0xf] %vm1569, %v1524
        %1596 = vst.msk [vmem:[#allocation3 + $0x68] sm:$0xf] %vm1569, %v1526
        %1597 = vst.msk [vmem:[#allocation3 + $0x6c] sm:$0xf] %vm1569, %v1528
        %1598 = vst.msk [vmem:[#allocation3 + $0x70] sm:$0xf] %vm1569, %v1530
        %1599 = vst.msk [vmem:[#allocation3 + $0x74] sm:$0xf] %vm1569, %v1532
        %1600 = vst.msk [vmem:[#allocation3 + $0x78] sm:$0xf] %vm1569, %v1534
        %1601 = vst.msk [vmem:[#allocation3 + $0x7c] sm:$0xf] %vm1569, %v1536
        %v1602 = vld [vmem:[%s539 + $0x2] sm:$0xff]
        %v1603 = vld [vmem:[%s539 + $0xa] sm:$0xff]
        %v1604 = vld [vmem:[%s539 + $0x1a] sm:$0xff]
        %v1605 = vld [vmem:[%s539 + $0x22] sm:$0xff]
        %v1606 = vld [vmem:[%s539 + $0x32] sm:$0xff]
        %v1607 = vld [vmem:[%s539 + $0x3a] sm:$0xff]
        %v1608 = vld [vmem:[%s539 + $0x4a] sm:$0xff]
        %v1609 = vld [vmem:[%s539 + $0x52] sm:$0xff]
        %v1610 = vld [vmem:[%s539 + $0x62] sm:$0xff]
        %v1611 = vld [vmem:[%s539 + $0x6a] sm:$0xff]
        %v1612 = vld [vmem:[%s539 + $0x7a] sm:$0xff]
        %v1613 = vld [vmem:[%s539 + $0x82] sm:$0xff]
        %v1614 = vld [vmem:[%s539 + $0x92] sm:$0xff]
        %v1615 = vld [vmem:[%s539 + $0x9a] sm:$0xff]
        %v1616 = vld [vmem:[%s539 + $0xaa] sm:$0xff]
        %v1617 = vld [vmem:[%s539 + $0xb2] sm:$0xff]
        %v1618 = vld [vmem:[%s539 + $0xc2] sm:$0xff]
        %v1619 = vld [vmem:[%s539 + $0xca] sm:$0xff]
        %v1620 = vld [vmem:[%s539 + $0xda] sm:$0xff]
        %v1621 = vld [vmem:[%s539 + $0xe2] sm:$0xff]
        %v1622 = vld [vmem:[%s539 + $0xf2] sm:$0xff]
        %v1623 = vld [vmem:[%s539 + $0xfa] sm:$0xff]
        %v1624 = vld [vmem:[%s539 + $0x10a] sm:$0xff]
        %v1625 = vld [vmem:[%s539 + $0x112] sm:$0xff]
        %v1626 = vld [vmem:[%s539 + $0x122] sm:$0xff]
        %v1627 = vld [vmem:[%s539 + $0x12a] sm:$0xff]
        %v1628 = vld [vmem:[%s539 + $0x13a] sm:$0xff]
        %v1629 = vld [vmem:[%s539 + $0x142] sm:$0xff]
        %v1630 = vld [vmem:[%s539 + $0x152] sm:$0xff]
        %v1631 = vld [vmem:[%s539 + $0x15a] sm:$0xff]
        %v1632 = vld [vmem:[%s539 + $0x16a] sm:$0xff]
        %v1633 = vld [vmem:[%s539 + $0x172] sm:$0xff]
        %v1634 = vpack.c.bf16 %v1602, %v1602
        %v1635 = vpack.c.bf16 %v1603, %v1603
        %v1636 = vpack.c.bf16 %v1604, %v1604
        %v1637 = vpack.c.bf16 %v1605, %v1605
        %v1638 = vpack.c.bf16 %v1606, %v1606
        %v1639 = vpack.c.bf16 %v1607, %v1607
        %v1640 = vpack.c.bf16 %v1608, %v1608
        %v1641 = vpack.c.bf16 %v1609, %v1609
        %v1642 = vpack.c.bf16 %v1610, %v1610
        %v1643 = vpack.c.bf16 %v1611, %v1611
        %v1644 = vpack.c.bf16 %v1612, %v1612
        %v1645 = vpack.c.bf16 %v1613, %v1613
        %v1646 = vpack.c.bf16 %v1614, %v1614
        %v1647 = vpack.c.bf16 %v1615, %v1615
        %v1648 = vpack.c.bf16 %v1616, %v1616
        %v1649 = vpack.c.bf16 %v1617, %v1617
        %v1650 = vpack.c.bf16 %v1618, %v1618
        %v1651 = vpack.c.bf16 %v1619, %v1619
        %v1652 = vpack.c.bf16 %v1620, %v1620
        %v1653 = vpack.c.bf16 %v1621, %v1621
        %v1654 = vpack.c.bf16 %v1622, %v1622
        %v1655 = vpack.c.bf16 %v1623, %v1623
        %v1656 = vpack.c.bf16 %v1624, %v1624
        %v1657 = vpack.c.bf16 %v1625, %v1625
        %v1658 = vpack.c.bf16 %v1626, %v1626
        %v1659 = vpack.c.bf16 %v1627, %v1627
        %v1660 = vpack.c.bf16 %v1628, %v1628
        %v1661 = vpack.c.bf16 %v1629, %v1629
        %v1662 = vpack.c.bf16 %v1630, %v1630
        %v1663 = vpack.c.bf16 %v1631, %v1631
        %v1664 = vpack.c.bf16 %v1632, %v1632
        %v1665 = vpack.c.bf16 %v1633, %v1633
        %1698 = vrot.lane.b32.xlu0 %v1634, 20
        %v1699 = vpop.permute.xlu0 %1698
        %1700 = vrot.lane.b32.xlu0 %v1635, 20
        %v1701 = vpop.permute.xlu0 %1700
        %1702 = vrot.lane.b32.xlu0 %v1636, 20
        %v1703 = vpop.permute.xlu0 %1702
        %1704 = vrot.lane.b32.xlu0 %v1637, 20
        %v1705 = vpop.permute.xlu0 %1704
        %1706 = vrot.lane.b32.xlu0 %v1638, 20
        %v1707 = vpop.permute.xlu0 %1706
        %1708 = vrot.lane.b32.xlu0 %v1639, 20
        %v1709 = vpop.permute.xlu0 %1708
        %1710 = vrot.lane.b32.xlu0 %v1640, 20
        %v1711 = vpop.permute.xlu0 %1710
        %1712 = vrot.lane.b32.xlu0 %v1641, 20
        %v1713 = vpop.permute.xlu0 %1712
        %1714 = vrot.lane.b32.xlu0 %v1642, 20
        %v1715 = vpop.permute.xlu0 %1714
        %1716 = vrot.lane.b32.xlu0 %v1643, 20
        %v1717 = vpop.permute.xlu0 %1716
        %1718 = vrot.lane.b32.xlu0 %v1644, 20
        %v1719 = vpop.permute.xlu0 %1718
        %1720 = vrot.lane.b32.xlu0 %v1645, 20
        %v1721 = vpop.permute.xlu0 %1720
        %1722 = vrot.lane.b32.xlu0 %v1646, 20
        %v1723 = vpop.permute.xlu0 %1722
        %1724 = vrot.lane.b32.xlu0 %v1647, 20
        %v1725 = vpop.permute.xlu0 %1724
        %1726 = vrot.lane.b32.xlu0 %v1648, 20
        %v1727 = vpop.permute.xlu0 %1726
        %1728 = vrot.lane.b32.xlu0 %v1649, 20
        %v1729 = vpop.permute.xlu0 %1728
        %1730 = vrot.lane.b32.xlu0 %v1650, 20
        %v1731 = vpop.permute.xlu0 %1730
        %1732 = vrot.lane.b32.xlu0 %v1651, 20
        %v1733 = vpop.permute.xlu0 %1732
        %1734 = vrot.lane.b32.xlu0 %v1652, 20
        %v1735 = vpop.permute.xlu0 %1734
        %1736 = vrot.lane.b32.xlu0 %v1653, 20
        %v1737 = vpop.permute.xlu0 %1736
        %1738 = vrot.lane.b32.xlu0 %v1654, 20
        %v1739 = vpop.permute.xlu0 %1738
        %1740 = vrot.lane.b32.xlu0 %v1655, 20
        %v1741 = vpop.permute.xlu0 %1740
        %1742 = vrot.lane.b32.xlu0 %v1656, 20
        %v1743 = vpop.permute.xlu0 %1742
        %1744 = vrot.lane.b32.xlu0 %v1657, 20
        %v1745 = vpop.permute.xlu0 %1744
        %1746 = vrot.lane.b32.xlu0 %v1658, 20
        %v1747 = vpop.permute.xlu0 %1746
        %1748 = vrot.lane.b32.xlu0 %v1659, 20
        %v1749 = vpop.permute.xlu0 %1748
        %1750 = vrot.lane.b32.xlu0 %v1660, 20
        %v1751 = vpop.permute.xlu0 %1750
        %1752 = vrot.lane.b32.xlu0 %v1661, 20
        %v1753 = vpop.permute.xlu0 %1752
        %1754 = vrot.lane.b32.xlu0 %v1662, 20
        %v1755 = vpop.permute.xlu0 %1754
        %1756 = vrot.lane.b32.xlu0 %v1663, 20
        %v1757 = vpop.permute.xlu0 %1756
        %1758 = vrot.lane.b32.xlu0 %v1664, 20
        %v1759 = vpop.permute.xlu0 %1758
        %1760 = vrot.lane.b32.xlu0 %v1665, 20
        %v1761 = vpop.permute.xlu0 %1760
        %vm1794 = vcmask 191648
        %1795 = vst.msk [vmem:[#allocation3] sm:$0xf] %vm1794, %v1699
        %1796 = vst.msk [vmem:[#allocation3 + $0x4] sm:$0xf] %vm1794, %v1701
        %1797 = vst.msk [vmem:[#allocation3 + $0x8] sm:$0xf] %vm1794, %v1703
        %1798 = vst.msk [vmem:[#allocation3 + $0xc] sm:$0xf] %vm1794, %v1705
        %1799 = vst.msk [vmem:[#allocation3 + $0x10] sm:$0xf] %vm1794, %v1707
        %1800 = vst.msk [vmem:[#allocation3 + $0x14] sm:$0xf] %vm1794, %v1709
        %1801 = vst.msk [vmem:[#allocation3 + $0x18] sm:$0xf] %vm1794, %v1711
        %1802 = vst.msk [vmem:[#allocation3 + $0x1c] sm:$0xf] %vm1794, %v1713
        %1803 = vst.msk [vmem:[#allocation3 + $0x20] sm:$0xf] %vm1794, %v1715
        %1804 = vst.msk [vmem:[#allocation3 + $0x24] sm:$0xf] %vm1794, %v1717
        %1805 = vst.msk [vmem:[#allocation3 + $0x28] sm:$0xf] %vm1794, %v1719
        %1806 = vst.msk [vmem:[#allocation3 + $0x2c] sm:$0xf] %vm1794, %v1721
        %1807 = vst.msk [vmem:[#allocation3 + $0x30] sm:$0xf] %vm1794, %v1723
        %1808 = vst.msk [vmem:[#allocation3 + $0x34] sm:$0xf] %vm1794, %v1725
        %1809 = vst.msk [vmem:[#allocation3 + $0x38] sm:$0xf] %vm1794, %v1727
        %1810 = vst.msk [vmem:[#allocation3 + $0x3c] sm:$0xf] %vm1794, %v1729
        %1811 = vst.msk [vmem:[#allocation3 + $0x40] sm:$0xf] %vm1794, %v1731
        %1812 = vst.msk [vmem:[#allocation3 + $0x44] sm:$0xf] %vm1794, %v1733
        %1813 = vst.msk [vmem:[#allocation3 + $0x48] sm:$0xf] %vm1794, %v1735
        %1814 = vst.msk [vmem:[#allocation3 + $0x4c] sm:$0xf] %vm1794, %v1737
        %1815 = vst.msk [vmem:[#allocation3 + $0x50] sm:$0xf] %vm1794, %v1739
        %1816 = vst.msk [vmem:[#allocation3 + $0x54] sm:$0xf] %vm1794, %v1741
        %1817 = vst.msk [vmem:[#allocation3 + $0x58] sm:$0xf] %vm1794, %v1743
        %1818 = vst.msk [vmem:[#allocation3 + $0x5c] sm:$0xf] %vm1794, %v1745
        %1819 = vst.msk [vmem:[#allocation3 + $0x60] sm:$0xf] %vm1794, %v1747
        %1820 = vst.msk [vmem:[#allocation3 + $0x64] sm:$0xf] %vm1794, %v1749
        %1821 = vst.msk [vmem:[#allocation3 + $0x68] sm:$0xf] %vm1794, %v1751
        %1822 = vst.msk [vmem:[#allocation3 + $0x6c] sm:$0xf] %vm1794, %v1753
        %1823 = vst.msk [vmem:[#allocation3 + $0x70] sm:$0xf] %vm1794, %v1755
        %1824 = vst.msk [vmem:[#allocation3 + $0x74] sm:$0xf] %vm1794, %v1757
        %1825 = vst.msk [vmem:[#allocation3 + $0x78] sm:$0xf] %vm1794, %v1759
        %1826 = vst.msk [vmem:[#allocation3 + $0x7c] sm:$0xf] %vm1794, %v1761
        %s1827 = scalar_lea.vmem [#allocation2], 48
        %v1828 = vld [vmem:[%s1827] sm:$0xff]
        %v1829 = vld [vmem:[%s1827 + $0x8] sm:$0xff]
        %v1830 = vld [vmem:[%s1827 + $0x18] sm:$0xff]
        %v1831 = vld [vmem:[%s1827 + $0x20] sm:$0xff]
        %v1832 = vld [vmem:[%s1827 + $0x30] sm:$0xff]
        %v1833 = vld [vmem:[%s1827 + $0x38] sm:$0xff]
        %v1834 = vld [vmem:[%s1827 + $0x48] sm:$0xff]
        %v1835 = vld [vmem:[%s1827 + $0x50] sm:$0xff]
        %v1836 = vld [vmem:[%s1827 + $0x60] sm:$0xff]
        %v1837 = vld [vmem:[%s1827 + $0x68] sm:$0xff]
        %v1838 = vld [vmem:[%s1827 + $0x78] sm:$0xff]
        %v1839 = vld [vmem:[%s1827 + $0x80] sm:$0xff]
        %v1840 = vld [vmem:[%s1827 + $0x90] sm:$0xff]
        %v1841 = vld [vmem:[%s1827 + $0x98] sm:$0xff]
        %v1842 = vld [vmem:[%s1827 + $0xa8] sm:$0xff]
        %v1843 = vld [vmem:[%s1827 + $0xb0] sm:$0xff]
        %v1844 = vld [vmem:[%s1827 + $0xc0] sm:$0xff]
        %v1845 = vld [vmem:[%s1827 + $0xc8] sm:$0xff]
        %v1846 = vld [vmem:[%s1827 + $0xd8] sm:$0xff]
        %v1847 = vld [vmem:[%s1827 + $0xe0] sm:$0xff]
        %v1848 = vld [vmem:[%s1827 + $0xf0] sm:$0xff]
        %v1849 = vld [vmem:[%s1827 + $0xf8] sm:$0xff]
        %v1850 = vld [vmem:[%s1827 + $0x108] sm:$0xff]
        %v1851 = vld [vmem:[%s1827 + $0x110] sm:$0xff]
        %v1852 = vld [vmem:[%s1827 + $0x120] sm:$0xff]
        %v1853 = vld [vmem:[%s1827 + $0x128] sm:$0xff]
        %v1854 = vld [vmem:[%s1827 + $0x138] sm:$0xff]
        %v1855 = vld [vmem:[%s1827 + $0x140] sm:$0xff]
        %v1856 = vld [vmem:[%s1827 + $0x150] sm:$0xff]
        %v1857 = vld [vmem:[%s1827 + $0x158] sm:$0xff]
        %v1858 = vld [vmem:[%s1827 + $0x168] sm:$0xff]
        %v1859 = vld [vmem:[%s1827 + $0x170] sm:$0xff]
        %v1860 = vpack.c.bf16 %v1828, %v1828
        %v1861 = vpack.c.bf16 %v1829, %v1829
        %v1862 = vpack.c.bf16 %v1830, %v1830
        %v1863 = vpack.c.bf16 %v1831, %v1831
        %v1864 = vpack.c.bf16 %v1832, %v1832
        %v1865 = vpack.c.bf16 %v1833, %v1833
        %v1866 = vpack.c.bf16 %v1834, %v1834
        %v1867 = vpack.c.bf16 %v1835, %v1835
        %v1868 = vpack.c.bf16 %v1836, %v1836
        %v1869 = vpack.c.bf16 %v1837, %v1837
        %v1870 = vpack.c.bf16 %v1838, %v1838
        %v1871 = vpack.c.bf16 %v1839, %v1839
        %v1872 = vpack.c.bf16 %v1840, %v1840
        %v1873 = vpack.c.bf16 %v1841, %v1841
        %v1874 = vpack.c.bf16 %v1842, %v1842
        %v1875 = vpack.c.bf16 %v1843, %v1843
        %v1876 = vpack.c.bf16 %v1844, %v1844
        %v1877 = vpack.c.bf16 %v1845, %v1845
        %v1878 = vpack.c.bf16 %v1846, %v1846
        %v1879 = vpack.c.bf16 %v1847, %v1847
        %v1880 = vpack.c.bf16 %v1848, %v1848
        %v1881 = vpack.c.bf16 %v1849, %v1849
        %v1882 = vpack.c.bf16 %v1850, %v1850
        %v1883 = vpack.c.bf16 %v1851, %v1851
        %v1884 = vpack.c.bf16 %v1852, %v1852
        %v1885 = vpack.c.bf16 %v1853, %v1853
        %v1886 = vpack.c.bf16 %v1854, %v1854
        %v1887 = vpack.c.bf16 %v1855, %v1855
        %v1888 = vpack.c.bf16 %v1856, %v1856
        %v1889 = vpack.c.bf16 %v1857, %v1857
        %v1890 = vpack.c.bf16 %v1858, %v1858
        %v1891 = vpack.c.bf16 %v1859, %v1859
        %1924 = vrot.lane.b32.xlu0 %v1860, 24
        %v1925 = vpop.permute.xlu0 %1924
        %1926 = vrot.lane.b32.xlu0 %v1861, 24
        %v1927 = vpop.permute.xlu0 %1926
        %1928 = vrot.lane.b32.xlu0 %v1862, 24
        %v1929 = vpop.permute.xlu0 %1928
        %1930 = vrot.lane.b32.xlu0 %v1863, 24
        %v1931 = vpop.permute.xlu0 %1930
        %1932 = vrot.lane.b32.xlu0 %v1864, 24
        %v1933 = vpop.permute.xlu0 %1932
        %1934 = vrot.lane.b32.xlu0 %v1865, 24
        %v1935 = vpop.permute.xlu0 %1934
        %1936 = vrot.lane.b32.xlu0 %v1866, 24
        %v1937 = vpop.permute.xlu0 %1936
        %1938 = vrot.lane.b32.xlu0 %v1867, 24
        %v1939 = vpop.permute.xlu0 %1938
        %1940 = vrot.lane.b32.xlu0 %v1868, 24
        %v1941 = vpop.permute.xlu0 %1940
        %1942 = vrot.lane.b32.xlu0 %v1869, 24
        %v1943 = vpop.permute.xlu0 %1942
        %1944 = vrot.lane.b32.xlu0 %v1870, 24
        %v1945 = vpop.permute.xlu0 %1944
        %1946 = vrot.lane.b32.xlu0 %v1871, 24
        %v1947 = vpop.permute.xlu0 %1946
        %1948 = vrot.lane.b32.xlu0 %v1872, 24
        %v1949 = vpop.permute.xlu0 %1948
        %1950 = vrot.lane.b32.xlu0 %v1873, 24
        %v1951 = vpop.permute.xlu0 %1950
        %1952 = vrot.lane.b32.xlu0 %v1874, 24
        %v1953 = vpop.permute.xlu0 %1952
        %1954 = vrot.lane.b32.xlu0 %v1875, 24
        %v1955 = vpop.permute.xlu0 %1954
        %1956 = vrot.lane.b32.xlu0 %v1876, 24
        %v1957 = vpop.permute.xlu0 %1956
        %1958 = vrot.lane.b32.xlu0 %v1877, 24
        %v1959 = vpop.permute.xlu0 %1958
        %1960 = vrot.lane.b32.xlu0 %v1878, 24
        %v1961 = vpop.permute.xlu0 %1960
        %1962 = vrot.lane.b32.xlu0 %v1879, 24
        %v1963 = vpop.permute.xlu0 %1962
        %1964 = vrot.lane.b32.xlu0 %v1880, 24
        %v1965 = vpop.permute.xlu0 %1964
        %1966 = vrot.lane.b32.xlu0 %v1881, 24
        %v1967 = vpop.permute.xlu0 %1966
        %1968 = vrot.lane.b32.xlu0 %v1882, 24
        %v1969 = vpop.permute.xlu0 %1968
        %1970 = vrot.lane.b32.xlu0 %v1883, 24
        %v1971 = vpop.permute.xlu0 %1970
        %1972 = vrot.lane.b32.xlu0 %v1884, 24
        %v1973 = vpop.permute.xlu0 %1972
        %1974 = vrot.lane.b32.xlu0 %v1885, 24
        %v1975 = vpop.permute.xlu0 %1974
        %1976 = vrot.lane.b32.xlu0 %v1886, 24
        %v1977 = vpop.permute.xlu0 %1976
        %1978 = vrot.lane.b32.xlu0 %v1887, 24
        %v1979 = vpop.permute.xlu0 %1978
        %1980 = vrot.lane.b32.xlu0 %v1888, 24
        %v1981 = vpop.permute.xlu0 %1980
        %1982 = vrot.lane.b32.xlu0 %v1889, 24
        %v1983 = vpop.permute.xlu0 %1982
        %1984 = vrot.lane.b32.xlu0 %v1890, 24
        %v1985 = vpop.permute.xlu0 %1984
        %1986 = vrot.lane.b32.xlu0 %v1891, 24
        %v1987 = vpop.permute.xlu0 %1986
        %vm2020 = vcmask 224448
        %2021 = vst.msk [vmem:[#allocation3] sm:$0xf] %vm2020, %v1925
        %2022 = vst.msk [vmem:[#allocation3 + $0x4] sm:$0xf] %vm2020, %v1927
        %2023 = vst.msk [vmem:[#allocation3 + $0x8] sm:$0xf] %vm2020, %v1929
        %2024 = vst.msk [vmem:[#allocation3 + $0xc] sm:$0xf] %vm2020, %v1931
        %2025 = vst.msk [vmem:[#allocation3 + $0x10] sm:$0xf] %vm2020, %v1933
        %2026 = vst.msk [vmem:[#allocation3 + $0x14] sm:$0xf] %vm2020, %v1935
        %2027 = vst.msk [vmem:[#allocation3 + $0x18] sm:$0xf] %vm2020, %v1937
        %2028 = vst.msk [vmem:[#allocation3 + $0x1c] sm:$0xf] %vm2020, %v1939
        %2029 = vst.msk [vmem:[#allocation3 + $0x20] sm:$0xf] %vm2020, %v1941
        %2030 = vst.msk [vmem:[#allocation3 + $0x24] sm:$0xf] %vm2020, %v1943
        %2031 = vst.msk [vmem:[#allocation3 + $0x28] sm:$0xf] %vm2020, %v1945
        %2032 = vst.msk [vmem:[#allocation3 + $0x2c] sm:$0xf] %vm2020, %v1947
        %2033 = vst.msk [vmem:[#allocation3 + $0x30] sm:$0xf] %vm2020, %v1949
        %2034 = vst.msk [vmem:[#allocation3 + $0x34] sm:$0xf] %vm2020, %v1951
        %2035 = vst.msk [vmem:[#allocation3 + $0x38] sm:$0xf] %vm2020, %v1953
        %2036 = vst.msk [vmem:[#allocation3 + $0x3c] sm:$0xf] %vm2020, %v1955
        %2037 = vst.msk [vmem:[#allocation3 + $0x40] sm:$0xf] %vm2020, %v1957
        %2038 = vst.msk [vmem:[#allocation3 + $0x44] sm:$0xf] %vm2020, %v1959
        %2039 = vst.msk [vmem:[#allocation3 + $0x48] sm:$0xf] %vm2020, %v1961
        %2040 = vst.msk [vmem:[#allocation3 + $0x4c] sm:$0xf] %vm2020, %v1963
        %2041 = vst.msk [vmem:[#allocation3 + $0x50] sm:$0xf] %vm2020, %v1965
        %2042 = vst.msk [vmem:[#allocation3 + $0x54] sm:$0xf] %vm2020, %v1967
        %2043 = vst.msk [vmem:[#allocation3 + $0x58] sm:$0xf] %vm2020, %v1969
        %2044 = vst.msk [vmem:[#allocation3 + $0x5c] sm:$0xf] %vm2020, %v1971
        %2045 = vst.msk [vmem:[#allocation3 + $0x60] sm:$0xf] %vm2020, %v1973
        %2046 = vst.msk [vmem:[#allocation3 + $0x64] sm:$0xf] %vm2020, %v1975
        %2047 = vst.msk [vmem:[#allocation3 + $0x68] sm:$0xf] %vm2020, %v1977
        %2048 = vst.msk [vmem:[#allocation3 + $0x6c] sm:$0xf] %vm2020, %v1979
        %2049 = vst.msk [vmem:[#allocation3 + $0x70] sm:$0xf] %vm2020, %v1981
        %2050 = vst.msk [vmem:[#allocation3 + $0x74] sm:$0xf] %vm2020, %v1983
        %2051 = vst.msk [vmem:[#allocation3 + $0x78] sm:$0xf] %vm2020, %v1985
        %2052 = vst.msk [vmem:[#allocation3 + $0x7c] sm:$0xf] %vm2020, %v1987
        %v2053 = vld [vmem:[%s1827 + $0x1] sm:$0xff]
        %v2054 = vld [vmem:[%s1827 + $0x9] sm:$0xff]
        %v2055 = vld [vmem:[%s1827 + $0x19] sm:$0xff]
        %v2056 = vld [vmem:[%s1827 + $0x21] sm:$0xff]
        %v2057 = vld [vmem:[%s1827 + $0x31] sm:$0xff]
        %v2058 = vld [vmem:[%s1827 + $0x39] sm:$0xff]
        %v2059 = vld [vmem:[%s1827 + $0x49] sm:$0xff]
        %v2060 = vld [vmem:[%s1827 + $0x51] sm:$0xff]
        %v2061 = vld [vmem:[%s1827 + $0x61] sm:$0xff]
        %v2062 = vld [vmem:[%s1827 + $0x69] sm:$0xff]
        %v2063 = vld [vmem:[%s1827 + $0x79] sm:$0xff]
        %v2064 = vld [vmem:[%s1827 + $0x81] sm:$0xff]
        %v2065 = vld [vmem:[%s1827 + $0x91] sm:$0xff]
        %v2066 = vld [vmem:[%s1827 + $0x99] sm:$0xff]
        %v2067 = vld [vmem:[%s1827 + $0xa9] sm:$0xff]
        %v2068 = vld [vmem:[%s1827 + $0xb1] sm:$0xff]
        %v2069 = vld [vmem:[%s1827 + $0xc1] sm:$0xff]
        %v2070 = vld [vmem:[%s1827 + $0xc9] sm:$0xff]
        %v2071 = vld [vmem:[%s1827 + $0xd9] sm:$0xff]
        %v2072 = vld [vmem:[%s1827 + $0xe1] sm:$0xff]
        %v2073 = vld [vmem:[%s1827 + $0xf1] sm:$0xff]
        %v2074 = vld [vmem:[%s1827 + $0xf9] sm:$0xff]
        %v2075 = vld [vmem:[%s1827 + $0x109] sm:$0xff]
        %v2076 = vld [vmem:[%s1827 + $0x111] sm:$0xff]
        %v2077 = vld [vmem:[%s1827 + $0x121] sm:$0xff]
        %v2078 = vld [vmem:[%s1827 + $0x129] sm:$0xff]
        %v2079 = vld [vmem:[%s1827 + $0x139] sm:$0xff]
        %v2080 = vld [vmem:[%s1827 + $0x141] sm:$0xff]
        %v2081 = vld [vmem:[%s1827 + $0x151] sm:$0xff]
        %v2082 = vld [vmem:[%s1827 + $0x159] sm:$0xff]
        %v2083 = vld [vmem:[%s1827 + $0x169] sm:$0xff]
        %v2084 = vld [vmem:[%s1827 + $0x171] sm:$0xff]
        %v2085 = vpack.c.bf16 %v2053, %v2053
        %v2086 = vpack.c.bf16 %v2054, %v2054
        %v2087 = vpack.c.bf16 %v2055, %v2055
        %v2088 = vpack.c.bf16 %v2056, %v2056
        %v2089 = vpack.c.bf16 %v2057, %v2057
        %v2090 = vpack.c.bf16 %v2058, %v2058
        %v2091 = vpack.c.bf16 %v2059, %v2059
        %v2092 = vpack.c.bf16 %v2060, %v2060
        %v2093 = vpack.c.bf16 %v2061, %v2061
        %v2094 = vpack.c.bf16 %v2062, %v2062
        %v2095 = vpack.c.bf16 %v2063, %v2063
        %v2096 = vpack.c.bf16 %v2064, %v2064
        %v2097 = vpack.c.bf16 %v2065, %v2065
        %v2098 = vpack.c.bf16 %v2066, %v2066
        %v2099 = vpack.c.bf16 %v2067, %v2067
        %v2100 = vpack.c.bf16 %v2068, %v2068
        %v2101 = vpack.c.bf16 %v2069, %v2069
        %v2102 = vpack.c.bf16 %v2070, %v2070
        %v2103 = vpack.c.bf16 %v2071, %v2071
        %v2104 = vpack.c.bf16 %v2072, %v2072
        %v2105 = vpack.c.bf16 %v2073, %v2073
        %v2106 = vpack.c.bf16 %v2074, %v2074
        %v2107 = vpack.c.bf16 %v2075, %v2075
        %v2108 = vpack.c.bf16 %v2076, %v2076
        %v2109 = vpack.c.bf16 %v2077, %v2077
        %v2110 = vpack.c.bf16 %v2078, %v2078
        %v2111 = vpack.c.bf16 %v2079, %v2079
        %v2112 = vpack.c.bf16 %v2080, %v2080
        %v2113 = vpack.c.bf16 %v2081, %v2081
        %v2114 = vpack.c.bf16 %v2082, %v2082
        %v2115 = vpack.c.bf16 %v2083, %v2083
        %v2116 = vpack.c.bf16 %v2084, %v2084
        %2149 = vrot.lane.b32.xlu0 %v2085, 28
        %v2150 = vpop.permute.xlu0 %2149
        %2151 = vrot.lane.b32.xlu0 %v2086, 28
        %v2152 = vpop.permute.xlu0 %2151
        %2153 = vrot.lane.b32.xlu0 %v2087, 28
        %v2154 = vpop.permute.xlu0 %2153
        %2155 = vrot.lane.b32.xlu0 %v2088, 28
        %v2156 = vpop.permute.xlu0 %2155
        %2157 = vrot.lane.b32.xlu0 %v2089, 28
        %v2158 = vpop.permute.xlu0 %2157
        %2159 = vrot.lane.b32.xlu0 %v2090, 28
        %v2160 = vpop.permute.xlu0 %2159
        %2161 = vrot.lane.b32.xlu0 %v2091, 28
        %v2162 = vpop.permute.xlu0 %2161
        %2163 = vrot.lane.b32.xlu0 %v2092, 28
        %v2164 = vpop.permute.xlu0 %2163
        %2165 = vrot.lane.b32.xlu0 %v2093, 28
        %v2166 = vpop.permute.xlu0 %2165
        %2167 = vrot.lane.b32.xlu0 %v2094, 28
        %v2168 = vpop.permute.xlu0 %2167
        %2169 = vrot.lane.b32.xlu0 %v2095, 28
        %v2170 = vpop.permute.xlu0 %2169
        %2171 = vrot.lane.b32.xlu0 %v2096, 28
        %v2172 = vpop.permute.xlu0 %2171
        %2173 = vrot.lane.b32.xlu0 %v2097, 28
        %v2174 = vpop.permute.xlu0 %2173
        %2175 = vrot.lane.b32.xlu0 %v2098, 28
        %v2176 = vpop.permute.xlu0 %2175
        %2177 = vrot.lane.b32.xlu0 %v2099, 28
        %v2178 = vpop.permute.xlu0 %2177
        %2179 = vrot.lane.b32.xlu0 %v2100, 28
        %v2180 = vpop.permute.xlu0 %2179
        %2181 = vrot.lane.b32.xlu0 %v2101, 28
        %v2182 = vpop.permute.xlu0 %2181
        %2183 = vrot.lane.b32.xlu0 %v2102, 28
        %v2184 = vpop.permute.xlu0 %2183
        %2185 = vrot.lane.b32.xlu0 %v2103, 28
        %v2186 = vpop.permute.xlu0 %2185
        %2187 = vrot.lane.b32.xlu0 %v2104, 28
        %v2188 = vpop.permute.xlu0 %2187
        %2189 = vrot.lane.b32.xlu0 %v2105, 28
        %v2190 = vpop.permute.xlu0 %2189
        %2191 = vrot.lane.b32.xlu0 %v2106, 28
        %v2192 = vpop.permute.xlu0 %2191
        %2193 = vrot.lane.b32.xlu0 %v2107, 28
        %v2194 = vpop.permute.xlu0 %2193
        %2195 = vrot.lane.b32.xlu0 %v2108, 28
        %v2196 = vpop.permute.xlu0 %2195
        %2197 = vrot.lane.b32.xlu0 %v2109, 28
        %v2198 = vpop.permute.xlu0 %2197
        %2199 = vrot.lane.b32.xlu0 %v2110, 28
        %v2200 = vpop.permute.xlu0 %2199
        %2201 = vrot.lane.b32.xlu0 %v2111, 28
        %v2202 = vpop.permute.xlu0 %2201
        %2203 = vrot.lane.b32.xlu0 %v2112, 28
        %v2204 = vpop.permute.xlu0 %2203
        %2205 = vrot.lane.b32.xlu0 %v2113, 28
        %v2206 = vpop.permute.xlu0 %2205
        %2207 = vrot.lane.b32.xlu0 %v2114, 28
        %v2208 = vpop.permute.xlu0 %2207
        %2209 = vrot.lane.b32.xlu0 %v2115, 28
        %v2210 = vpop.permute.xlu0 %2209
        %2211 = vrot.lane.b32.xlu0 %v2116, 28
        %v2212 = vpop.permute.xlu0 %2211
        %vm2245 = vcmask 257248
        %2246 = vst.msk [vmem:[#allocation3] sm:$0xf] %vm2245, %v2150
        %2247 = vst.msk [vmem:[#allocation3 + $0x4] sm:$0xf] %vm2245, %v2152
        %2248 = vst.msk [vmem:[#allocation3 + $0x8] sm:$0xf] %vm2245, %v2154
        %2249 = vst.msk [vmem:[#allocation3 + $0xc] sm:$0xf] %vm2245, %v2156
        %2250 = vst.msk [vmem:[#allocation3 + $0x10] sm:$0xf] %vm2245, %v2158
        %2251 = vst.msk [vmem:[#allocation3 + $0x14] sm:$0xf] %vm2245, %v2160
        %2252 = vst.msk [vmem:[#allocation3 + $0x18] sm:$0xf] %vm2245, %v2162
        %2253 = vst.msk [vmem:[#allocation3 + $0x1c] sm:$0xf] %vm2245, %v2164
        %2254 = vst.msk [vmem:[#allocation3 + $0x20] sm:$0xf] %vm2245, %v2166
        %2255 = vst.msk [vmem:[#allocation3 + $0x24] sm:$0xf] %vm2245, %v2168
        %2256 = vst.msk [vmem:[#allocation3 + $0x28] sm:$0xf] %vm2245, %v2170
        %2257 = vst.msk [vmem:[#allocation3 + $0x2c] sm:$0xf] %vm2245, %v2172
        %2258 = vst.msk [vmem:[#allocation3 + $0x30] sm:$0xf] %vm2245, %v2174
        %2259 = vst.msk [vmem:[#allocation3 + $0x34] sm:$0xf] %vm2245, %v2176
        %2260 = vst.msk [vmem:[#allocation3 + $0x38] sm:$0xf] %vm2245, %v2178
        %2261 = vst.msk [vmem:[#allocation3 + $0x3c] sm:$0xf] %vm2245, %v2180
        %2262 = vst.msk [vmem:[#allocation3 + $0x40] sm:$0xf] %vm2245, %v2182
        %2263 = vst.msk [vmem:[#allocation3 + $0x44] sm:$0xf] %vm2245, %v2184
        %2264 = vst.msk [vmem:[#allocation3 + $0x48] sm:$0xf] %vm2245, %v2186
        %2265 = vst.msk [vmem:[#allocation3 + $0x4c] sm:$0xf] %vm2245, %v2188
        %2266 = vst.msk [vmem:[#allocation3 + $0x50] sm:$0xf] %vm2245, %v2190
        %2267 = vst.msk [vmem:[#allocation3 + $0x54] sm:$0xf] %vm2245, %v2192
        %2268 = vst.msk [vmem:[#allocation3 + $0x58] sm:$0xf] %vm2245, %v2194
        %2269 = vst.msk [vmem:[#allocation3 + $0x5c] sm:$0xf] %vm2245, %v2196
        %2270 = vst.msk [vmem:[#allocation3 + $0x60] sm:$0xf] %vm2245, %v2198
        %2271 = vst.msk [vmem:[#allocation3 + $0x64] sm:$0xf] %vm2245, %v2200
        %2272 = vst.msk [vmem:[#allocation3 + $0x68] sm:$0xf] %vm2245, %v2202
        %2273 = vst.msk [vmem:[#allocation3 + $0x6c] sm:$0xf] %vm2245, %v2204
        %2274 = vst.msk [vmem:[#allocation3 + $0x70] sm:$0xf] %vm2245, %v2206
        %2275 = vst.msk [vmem:[#allocation3 + $0x74] sm:$0xf] %vm2245, %v2208
        %2276 = vst.msk [vmem:[#allocation3 + $0x78] sm:$0xf] %vm2245, %v2210
        %2277 = vst.msk [vmem:[#allocation3 + $0x7c] sm:$0xf] %vm2245, %v2212
        %v2278 = vld [vmem:[%s1827 + $0x2] sm:$0xff]
        %v2279 = vld [vmem:[%s1827 + $0xa] sm:$0xff]
        %v2280 = vld [vmem:[%s1827 + $0x1a] sm:$0xff]
        %v2281 = vld [vmem:[%s1827 + $0x22] sm:$0xff]
        %v2282 = vld [vmem:[%s1827 + $0x32] sm:$0xff]
        %v2283 = vld [vmem:[%s1827 + $0x3a] sm:$0xff]
        %v2284 = vld [vmem:[%s1827 + $0x4a] sm:$0xff]
        %v2285 = vld [vmem:[%s1827 + $0x52] sm:$0xff]
        %v2286 = vld [vmem:[%s1827 + $0x62] sm:$0xff]
        %v2287 = vld [vmem:[%s1827 + $0x6a] sm:$0xff]
        %v2288 = vld [vmem:[%s1827 + $0x7a] sm:$0xff]
        %v2289 = vld [vmem:[%s1827 + $0x82] sm:$0xff]
        %v2290 = vld [vmem:[%s1827 + $0x92] sm:$0xff]
        %v2291 = vld [vmem:[%s1827 + $0x9a] sm:$0xff]
        %v2292 = vld [vmem:[%s1827 + $0xaa] sm:$0xff]
        %v2293 = vld [vmem:[%s1827 + $0xb2] sm:$0xff]
        %v2294 = vld [vmem:[%s1827 + $0xc2] sm:$0xff]
        %v2295 = vld [vmem:[%s1827 + $0xca] sm:$0xff]
        %v2296 = vld [vmem:[%s1827 + $0xda] sm:$0xff]
        %v2297 = vld [vmem:[%s1827 + $0xe2] sm:$0xff]
        %v2298 = vld [vmem:[%s1827 + $0xf2] sm:$0xff]
        %v2299 = vld [vmem:[%s1827 + $0xfa] sm:$0xff]
        %v2300 = vld [vmem:[%s1827 + $0x10a] sm:$0xff]
        %v2301 = vld [vmem:[%s1827 + $0x112] sm:$0xff]
        %v2302 = vld [vmem:[%s1827 + $0x122] sm:$0xff]
        %v2303 = vld [vmem:[%s1827 + $0x12a] sm:$0xff]
        %v2304 = vld [vmem:[%s1827 + $0x13a] sm:$0xff]
        %v2305 = vld [vmem:[%s1827 + $0x142] sm:$0xff]
        %v2306 = vld [vmem:[%s1827 + $0x152] sm:$0xff]
        %v2307 = vld [vmem:[%s1827 + $0x15a] sm:$0xff]
        %v2308 = vld [vmem:[%s1827 + $0x16a] sm:$0xff]
        %v2309 = vld [vmem:[%s1827 + $0x172] sm:$0xff]
        %v2310 = vpack.c.bf16 %v2278, %v2278
        %v2311 = vpack.c.bf16 %v2279, %v2279
        %v2312 = vpack.c.bf16 %v2280, %v2280
        %v2313 = vpack.c.bf16 %v2281, %v2281
        %v2314 = vpack.c.bf16 %v2282, %v2282
        %v2315 = vpack.c.bf16 %v2283, %v2283
        %v2316 = vpack.c.bf16 %v2284, %v2284
        %v2317 = vpack.c.bf16 %v2285, %v2285
        %v2318 = vpack.c.bf16 %v2286, %v2286
        %v2319 = vpack.c.bf16 %v2287, %v2287
        %v2320 = vpack.c.bf16 %v2288, %v2288
        %v2321 = vpack.c.bf16 %v2289, %v2289
        %v2322 = vpack.c.bf16 %v2290, %v2290
        %v2323 = vpack.c.bf16 %v2291, %v2291
        %v2324 = vpack.c.bf16 %v2292, %v2292
        %v2325 = vpack.c.bf16 %v2293, %v2293
        %v2326 = vpack.c.bf16 %v2294, %v2294
        %v2327 = vpack.c.bf16 %v2295, %v2295
        %v2328 = vpack.c.bf16 %v2296, %v2296
        %v2329 = vpack.c.bf16 %v2297, %v2297
        %v2330 = vpack.c.bf16 %v2298, %v2298
        %v2331 = vpack.c.bf16 %v2299, %v2299
        %v2332 = vpack.c.bf16 %v2300, %v2300
        %v2333 = vpack.c.bf16 %v2301, %v2301
        %v2334 = vpack.c.bf16 %v2302, %v2302
        %v2335 = vpack.c.bf16 %v2303, %v2303
        %v2336 = vpack.c.bf16 %v2304, %v2304
        %v2337 = vpack.c.bf16 %v2305, %v2305
        %v2338 = vpack.c.bf16 %v2306, %v2306
        %v2339 = vpack.c.bf16 %v2307, %v2307
        %v2340 = vpack.c.bf16 %v2308, %v2308
        %v2341 = vpack.c.bf16 %v2309, %v2309
        %2374 = vrot.lane.b32.xlu0 %v2310, 32
        %v2375 = vpop.permute.xlu0 %2374
        %2376 = vrot.lane.b32.xlu0 %v2311, 32
        %v2377 = vpop.permute.xlu0 %2376
        %2378 = vrot.lane.b32.xlu0 %v2312, 32
        %v2379 = vpop.permute.xlu0 %2378
        %2380 = vrot.lane.b32.xlu0 %v2313, 32
        %v2381 = vpop.permute.xlu0 %2380
        %2382 = vrot.lane.b32.xlu0 %v2314, 32
        %v2383 = vpop.permute.xlu0 %2382
        %2384 = vrot.lane.b32.xlu0 %v2315, 32
        %v2385 = vpop.permute.xlu0 %2384
        %2386 = vrot.lane.b32.xlu0 %v2316, 32
        %v2387 = vpop.permute.xlu0 %2386
        %2388 = vrot.lane.b32.xlu0 %v2317, 32
        %v2389 = vpop.permute.xlu0 %2388
        %2390 = vrot.lane.b32.xlu0 %v2318, 32
        %v2391 = vpop.permute.xlu0 %2390
        %2392 = vrot.lane.b32.xlu0 %v2319, 32
        %v2393 = vpop.permute.xlu0 %2392
        %2394 = vrot.lane.b32.xlu0 %v2320, 32
        %v2395 = vpop.permute.xlu0 %2394
        %2396 = vrot.lane.b32.xlu0 %v2321, 32
        %v2397 = vpop.permute.xlu0 %2396
        %2398 = vrot.lane.b32.xlu0 %v2322, 32
        %v2399 = vpop.permute.xlu0 %2398
        %2400 = vrot.lane.b32.xlu0 %v2323, 32
        %v2401 = vpop.permute.xlu0 %2400
        %2402 = vrot.lane.b32.xlu0 %v2324, 32
        %v2403 = vpop.permute.xlu0 %2402
        %2404 = vrot.lane.b32.xlu0 %v2325, 32
        %v2405 = vpop.permute.xlu0 %2404
        %2406 = vrot.lane.b32.xlu0 %v2326, 32
        %v2407 = vpop.permute.xlu0 %2406
        %2408 = vrot.lane.b32.xlu0 %v2327, 32
        %v2409 = vpop.permute.xlu0 %2408
        %2410 = vrot.lane.b32.xlu0 %v2328, 32
        %v2411 = vpop.permute.xlu0 %2410
        %2412 = vrot.lane.b32.xlu0 %v2329, 32
        %v2413 = vpop.permute.xlu0 %2412
        %2414 = vrot.lane.b32.xlu0 %v2330, 32
        %v2415 = vpop.permute.xlu0 %2414
        %2416 = vrot.lane.b32.xlu0 %v2331, 32
        %v2417 = vpop.permute.xlu0 %2416
        %2418 = vrot.lane.b32.xlu0 %v2332, 32
        %v2419 = vpop.permute.xlu0 %2418
        %2420 = vrot.lane.b32.xlu0 %v2333, 32
        %v2421 = vpop.permute.xlu0 %2420
        %2422 = vrot.lane.b32.xlu0 %v2334, 32
        %v2423 = vpop.permute.xlu0 %2422
        %2424 = vrot.lane.b32.xlu0 %v2335, 32
        %v2425 = vpop.permute.xlu0 %2424
        %2426 = vrot.lane.b32.xlu0 %v2336, 32
        %v2427 = vpop.permute.xlu0 %2426
        %2428 = vrot.lane.b32.xlu0 %v2337, 32
        %v2429 = vpop.permute.xlu0 %2428
        %2430 = vrot.lane.b32.xlu0 %v2338, 32
        %v2431 = vpop.permute.xlu0 %2430
        %2432 = vrot.lane.b32.xlu0 %v2339, 32
        %v2433 = vpop.permute.xlu0 %2432
        %2434 = vrot.lane.b32.xlu0 %v2340, 32
        %v2435 = vpop.permute.xlu0 %2434
        %2436 = vrot.lane.b32.xlu0 %v2341, 32
        %v2437 = vpop.permute.xlu0 %2436
        %vm2470 = vcmask 290048
        %2471 = vst.msk [vmem:[#allocation3] sm:$0xf] %vm2470, %v2375
        %2472 = vst.msk [vmem:[#allocation3 + $0x4] sm:$0xf] %vm2470, %v2377
        %2473 = vst.msk [vmem:[#allocation3 + $0x8] sm:$0xf] %vm2470, %v2379
        %2474 = vst.msk [vmem:[#allocation3 + $0xc] sm:$0xf] %vm2470, %v2381
        %2475 = vst.msk [vmem:[#allocation3 + $0x10] sm:$0xf] %vm2470, %v2383
        %2476 = vst.msk [vmem:[#allocation3 + $0x14] sm:$0xf] %vm2470, %v2385
        %2477 = vst.msk [vmem:[#allocation3 + $0x18] sm:$0xf] %vm2470, %v2387
        %2478 = vst.msk [vmem:[#allocation3 + $0x1c] sm:$0xf] %vm2470, %v2389
        %2479 = vst.msk [vmem:[#allocation3 + $0x20] sm:$0xf] %vm2470, %v2391
        %2480 = vst.msk [vmem:[#allocation3 + $0x24] sm:$0xf] %vm2470, %v2393
        %2481 = vst.msk [vmem:[#allocation3 + $0x28] sm:$0xf] %vm2470, %v2395
        %2482 = vst.msk [vmem:[#allocation3 + $0x2c] sm:$0xf] %vm2470, %v2397
        %2483 = vst.msk [vmem:[#allocation3 + $0x30] sm:$0xf] %vm2470, %v2399
        %2484 = vst.msk [vmem:[#allocation3 + $0x34] sm:$0xf] %vm2470, %v2401
        %2485 = vst.msk [vmem:[#allocation3 + $0x38] sm:$0xf] %vm2470, %v2403
        %2486 = vst.msk [vmem:[#allocation3 + $0x3c] sm:$0xf] %vm2470, %v2405
        %2487 = vst.msk [vmem:[#allocation3 + $0x40] sm:$0xf] %vm2470, %v2407
        %2488 = vst.msk [vmem:[#allocation3 + $0x44] sm:$0xf] %vm2470, %v2409
        %2489 = vst.msk [vmem:[#allocation3 + $0x48] sm:$0xf] %vm2470, %v2411
        %2490 = vst.msk [vmem:[#allocation3 + $0x4c] sm:$0xf] %vm2470, %v2413
        %2491 = vst.msk [vmem:[#allocation3 + $0x50] sm:$0xf] %vm2470, %v2415
        %2492 = vst.msk [vmem:[#allocation3 + $0x54] sm:$0xf] %vm2470, %v2417
        %2493 = vst.msk [vmem:[#allocation3 + $0x58] sm:$0xf] %vm2470, %v2419
        %2494 = vst.msk [vmem:[#allocation3 + $0x5c] sm:$0xf] %vm2470, %v2421
        %2495 = vst.msk [vmem:[#allocation3 + $0x60] sm:$0xf] %vm2470, %v2423
        %2496 = vst.msk [vmem:[#allocation3 + $0x64] sm:$0xf] %vm2470, %v2425
        %2497 = vst.msk [vmem:[#allocation3 + $0x68] sm:$0xf] %vm2470, %v2427
        %2498 = vst.msk [vmem:[#allocation3 + $0x6c] sm:$0xf] %vm2470, %v2429
        %2499 = vst.msk [vmem:[#allocation3 + $0x70] sm:$0xf] %vm2470, %v2431
        %2500 = vst.msk [vmem:[#allocation3 + $0x74] sm:$0xf] %vm2470, %v2433
        %2501 = vst.msk [vmem:[#allocation3 + $0x78] sm:$0xf] %vm2470, %v2435
        %2502 = vst.msk [vmem:[#allocation3 + $0x7c] sm:$0xf] %vm2470, %v2437
        %v2503 = vld [vmem:[#allocation3] sm:$0xf]
        %v2504 = vld [vmem:[#allocation3 + $0x4] sm:$0xf]
        %v2505 = vld [vmem:[#allocation3 + $0x8] sm:$0xf]
        %v2506 = vld [vmem:[#allocation3 + $0xc] sm:$0xf]
        %v2507 = vld [vmem:[#allocation3 + $0x10] sm:$0xf]
        %v2508 = vld [vmem:[#allocation3 + $0x14] sm:$0xf]
        %v2509 = vld [vmem:[#allocation3 + $0x18] sm:$0xf]
        %v2510 = vld [vmem:[#allocation3 + $0x1c] sm:$0xf]
        %v2511 = vld [vmem:[#allocation3 + $0x20] sm:$0xf]
        %v2512 = vld [vmem:[#allocation3 + $0x24] sm:$0xf]
        %v2513 = vld [vmem:[#allocation3 + $0x28] sm:$0xf]
        %v2514 = vld [vmem:[#allocation3 + $0x2c] sm:$0xf]
        %v2515 = vld [vmem:[#allocation3 + $0x30] sm:$0xf]
        %v2516 = vld [vmem:[#allocation3 + $0x34] sm:$0xf]
        %v2517 = vld [vmem:[#allocation3 + $0x38] sm:$0xf]
        %v2518 = vld [vmem:[#allocation3 + $0x3c] sm:$0xf]
        %v2519 = vld [vmem:[#allocation3 + $0x40] sm:$0xf]
        %v2520 = vld [vmem:[#allocation3 + $0x44] sm:$0xf]
        %v2521 = vld [vmem:[#allocation3 + $0x48] sm:$0xf]
        %v2522 = vld [vmem:[#allocation3 + $0x4c] sm:$0xf]
        %v2523 = vld [vmem:[#allocation3 + $0x50] sm:$0xf]
        %v2524 = vld [vmem:[#allocation3 + $0x54] sm:$0xf]
        %v2525 = vld [vmem:[#allocation3 + $0x58] sm:$0xf]
        %v2526 = vld [vmem:[#allocation3 + $0x5c] sm:$0xf]
        %v2527 = vld [vmem:[#allocation3 + $0x60] sm:$0xf]
        %v2528 = vld [vmem:[#allocation3 + $0x64] sm:$0xf]
        %v2529 = vld [vmem:[#allocation3 + $0x68] sm:$0xf]
        %v2530 = vld [vmem:[#allocation3 + $0x6c] sm:$0xf]
        %v2531 = vld [vmem:[#allocation3 + $0x70] sm:$0xf]
        %v2532 = vld [vmem:[#allocation3 + $0x74] sm:$0xf]
        %v2533 = vld [vmem:[#allocation3 + $0x78] sm:$0xf]
        %v2534 = vld [vmem:[#allocation3 + $0x7c] sm:$0xf]
        %v2535 = vld [vmem:[%s3] sm:$0xf]
        %v2536 = vld [vmem:[%s3 + $0x4] sm:$0xf]
        %v2537 = vld [vmem:[%s3 + $0x8] sm:$0xf]
        %v2538 = vld [vmem:[%s3 + $0xc] sm:$0xf]
        %v2539 = vld [vmem:[%s3 + $0x10] sm:$0x3]
        %v2540 = vld [vmem:[%s4] sm:$0x1]
        %v2542 = vperm.slane %v2540, 0
        %v2576 = vunpack.c.l.b16 %v2503
        %v2577 = vunpack.c.l.b16 %v2504
        %v2578 = vunpack.c.l.b16 %v2505
        %v2579 = vunpack.c.l.b16 %v2506
        %v2580 = vunpack.c.l.b16 %v2507
        %v2581 = vunpack.c.l.b16 %v2508
        %v2582 = vunpack.c.l.b16 %v2509
        %v2583 = vunpack.c.l.b16 %v2510
        %v2584 = vunpack.c.l.b16 %v2511
        %v2585 = vunpack.c.l.b16 %v2512
        %v2586 = vunpack.c.l.b16 %v2513
        %v2587 = vunpack.c.l.b16 %v2514
        %v2588 = vunpack.c.l.b16 %v2515
        %v2589 = vunpack.c.l.b16 %v2516
        %v2590 = vunpack.c.l.b16 %v2517
        %v2591 = vunpack.c.l.b16 %v2518
        %v2592 = vunpack.c.l.b16 %v2519
        %v2593 = vunpack.c.l.b16 %v2520
        %v2594 = vunpack.c.l.b16 %v2521
        %v2595 = vunpack.c.l.b16 %v2522
        %v2596 = vunpack.c.l.b16 %v2523
        %v2597 = vunpack.c.l.b16 %v2524
        %v2598 = vunpack.c.l.b16 %v2525
        %v2599 = vunpack.c.l.b16 %v2526
        %v2600 = vunpack.c.l.b16 %v2527
        %v2601 = vunpack.c.l.b16 %v2528
        %v2602 = vunpack.c.l.b16 %v2529
        %v2603 = vunpack.c.l.b16 %v2530
        %v2604 = vunpack.c.l.b16 %v2531
        %v2605 = vunpack.c.l.b16 %v2532
        %v2606 = vunpack.c.l.b16 %v2533
        %v2607 = vunpack.c.l.b16 %v2534
        %v2608 = vpack.c.b16 %v2577, %v2576
        %v2609 = vpack.c.b16 %v2579, %v2578
        %v2610 = vpack.c.b16 %v2581, %v2580
        %v2611 = vpack.c.b16 %v2583, %v2582
        %v2612 = vpack.c.b16 %v2585, %v2584
        %v2613 = vpack.c.b16 %v2587, %v2586
        %v2614 = vpack.c.b16 %v2589, %v2588
        %v2615 = vpack.c.b16 %v2591, %v2590
        %v2616 = vpack.c.b16 %v2593, %v2592
        %v2617 = vpack.c.b16 %v2595, %v2594
        %v2618 = vpack.c.b16 %v2597, %v2596
        %v2619 = vpack.c.b16 %v2599, %v2598
        %v2620 = vpack.c.b16 %v2601, %v2600
        %v2621 = vpack.c.b16 %v2603, %v2602
        %v2622 = vpack.c.b16 %v2605, %v2604
        %v2623 = vpack.c.b16 %v2607, %v2606
        %v2629 = vunpack.c.l.b16 %v2535
        %v2630 = vunpack.c.l.b16 %v2536
        %v2631 = vunpack.c.l.b16 %v2537
        %v2632 = vunpack.c.l.b16 %v2538
        %v2633 = vunpack.c.l.b16 %v2539
        %v2634 = vpack.c.b16 %v2630, %v2629
        %v2635 = vpack.c.b16 %v2632, %v2631
        %v2636 = vpack.c.b16 %v2633, %v2633
        %vm2639 = vcmask 293888
        %v2641 = vsel %vm2639, %v2608, 0
        %v2644 = vsel %vm2639, %v2609, 0
        %v2647 = vsel %vm2639, %v2610, 0
        %v2650 = vsel %vm2639, %v2611, 0
        %v2653 = vsel %vm2639, %v2612, 0
        %v2656 = vsel %vm2639, %v2613, 0
        %v2659 = vsel %vm2639, %v2614, 0
        %v2662 = vsel %vm2639, %v2615, 0
        %v2665 = vsel %vm2639, %v2616, 0
        %v2668 = vsel %vm2639, %v2617, 0
        %v2671 = vsel %vm2639, %v2618, 0
        %v2674 = vsel %vm2639, %v2619, 0
        %v2677 = vsel %vm2639, %v2620, 0
        %v2680 = vsel %vm2639, %v2621, 0
        %v2683 = vsel %vm2639, %v2622, 0
        %v2686 = vsel %vm2639, %v2623, 0
        %vm2688 = vcmask 1041408
        %v2690 = vsel %vm2688, %v2636, 0
        %2692 = vmatpush.bf16.msra.mxu0 0
        %2693 = vmatpush.bf16.msra.mxu0 0
        %2694 = vmatpush.bf16.msra.mxu0 0
        %2695 = vmatpush.bf16.msra.mxu0 0
        %2696 = vmatpush.bf16.msra.mxu0 0
        %2697 = vmatpush.bf16.msra.mxu0 %v2690
        %2698 = vmatpush.bf16.msra.mxu0 %v2635
        %2699 = vmatpush.bf16.msra.mxu0 %v2634
        %2700 = vmatmul.bf16.gmra.mxu0 %v2641
        %v2701 = vpop.f32.mrf.mxu0
        %v2702 = vadd.f32 %v2542, %v2701
        %v2703 = vpop.f32.mrf.mxu0
        %v2704 = vadd.f32 %v2542, %v2703
        %2705 = vmatmul.bf16.gmra.mxu0 %v2644
        %v2706 = vpop.f32.mrf.mxu0
        %v2707 = vadd.f32 %v2542, %v2706
        %v2708 = vpop.f32.mrf.mxu0
        %v2709 = vadd.f32 %v2542, %v2708
        %2710 = vmatmul.bf16.gmra.mxu0 %v2647
        %v2711 = vpop.f32.mrf.mxu0
        %v2712 = vadd.f32 %v2542, %v2711
        %v2713 = vpop.f32.mrf.mxu0
        %v2714 = vadd.f32 %v2542, %v2713
        %2715 = vmatmul.bf16.gmra.mxu0 %v2650
        %v2716 = vpop.f32.mrf.mxu0
        %v2717 = vadd.f32 %v2542, %v2716
        %v2718 = vpop.f32.mrf.mxu0
        %v2719 = vadd.f32 %v2542, %v2718
        %2720 = vmatmul.bf16.gmra.mxu0 %v2653
        %v2721 = vpop.f32.mrf.mxu0
        %v2722 = vadd.f32 %v2542, %v2721
        %v2723 = vpop.f32.mrf.mxu0
        %v2724 = vadd.f32 %v2542, %v2723
        %2725 = vmatmul.bf16.gmra.mxu0 %v2656
        %v2726 = vpop.f32.mrf.mxu0
        %v2727 = vadd.f32 %v2542, %v2726
        %v2728 = vpop.f32.mrf.mxu0
        %v2729 = vadd.f32 %v2542, %v2728
        %2730 = vmatmul.bf16.gmra.mxu0 %v2659
        %v2731 = vpop.f32.mrf.mxu0
        %v2732 = vadd.f32 %v2542, %v2731
        %v2733 = vpop.f32.mrf.mxu0
        %v2734 = vadd.f32 %v2542, %v2733
        %2735 = vmatmul.bf16.gmra.mxu0 %v2662
        %v2736 = vpop.f32.mrf.mxu0
        %v2737 = vadd.f32 %v2542, %v2736
        %v2738 = vpop.f32.mrf.mxu0
        %v2739 = vadd.f32 %v2542, %v2738
        %2740 = vmatmul.bf16.gmra.mxu0 %v2665
        %v2741 = vpop.f32.mrf.mxu0
        %v2742 = vadd.f32 %v2542, %v2741
        %v2743 = vpop.f32.mrf.mxu0
        %v2744 = vadd.f32 %v2542, %v2743
        %2745 = vmatmul.bf16.gmra.mxu0 %v2668
        %v2746 = vpop.f32.mrf.mxu0
        %v2747 = vadd.f32 %v2542, %v2746
        %v2748 = vpop.f32.mrf.mxu0
        %v2749 = vadd.f32 %v2542, %v2748
        %2750 = vmatmul.bf16.gmra.mxu0 %v2671
        %v2751 = vpop.f32.mrf.mxu0
        %v2752 = vadd.f32 %v2542, %v2751
        %v2753 = vpop.f32.mrf.mxu0
        %v2754 = vadd.f32 %v2542, %v2753
        %2755 = vmatmul.bf16.gmra.mxu0 %v2674
        %v2756 = vpop.f32.mrf.mxu0
        %v2757 = vadd.f32 %v2542, %v2756
        %v2758 = vpop.f32.mrf.mxu0
        %v2759 = vadd.f32 %v2542, %v2758
        %2760 = vmatmul.bf16.gmra.mxu0 %v2677
        %v2761 = vpop.f32.mrf.mxu0
        %v2762 = vadd.f32 %v2542, %v2761
        %v2763 = vpop.f32.mrf.mxu0
        %v2764 = vadd.f32 %v2542, %v2763
        %2765 = vmatmul.bf16.gmra.mxu0 %v2680
        %v2766 = vpop.f32.mrf.mxu0
        %v2767 = vadd.f32 %v2542, %v2766
        %v2768 = vpop.f32.mrf.mxu0
        %v2769 = vadd.f32 %v2542, %v2768
        %2770 = vmatmul.bf16.gmra.mxu0 %v2683
        %v2771 = vpop.f32.mrf.mxu0
        %v2772 = vadd.f32 %v2542, %v2771
        %v2773 = vpop.f32.mrf.mxu0
        %v2774 = vadd.f32 %v2542, %v2773
        %2775 = vmatmul.bf16.gmra.mxu0 %v2686
        %v2776 = vpop.f32.mrf.mxu0
        %v2777 = vadd.f32 %v2542, %v2776
        %v2778 = vpop.f32.mrf.mxu0
        %v2779 = vadd.f32 %v2542, %v2778
        %2780 = vdwg.mxu0
        %v2781 = vmax.f32 %v2702, 0.0
        %v2782 = vmax.f32 %v2704, 0.0
        %v2783 = vmax.f32 %v2707, 0.0
        %v2784 = vmax.f32 %v2709, 0.0
        %v2785 = vmax.f32 %v2712, 0.0
        %v2786 = vmax.f32 %v2714, 0.0
        %v2787 = vmax.f32 %v2717, 0.0
        %v2788 = vmax.f32 %v2719, 0.0
        %v2789 = vmax.f32 %v2722, 0.0
        %v2790 = vmax.f32 %v2724, 0.0
        %v2791 = vmax.f32 %v2727, 0.0
        %v2792 = vmax.f32 %v2729, 0.0
        %v2793 = vmax.f32 %v2732, 0.0
        %v2794 = vmax.f32 %v2734, 0.0
        %v2795 = vmax.f32 %v2737, 0.0
        %v2796 = vmax.f32 %v2739, 0.0
        %v2797 = vmax.f32 %v2742, 0.0
        %v2798 = vmax.f32 %v2744, 0.0
        %v2799 = vmax.f32 %v2747, 0.0
        %v2800 = vmax.f32 %v2749, 0.0
        %v2801 = vmax.f32 %v2752, 0.0
        %v2802 = vmax.f32 %v2754, 0.0
        %v2803 = vmax.f32 %v2757, 0.0
        %v2804 = vmax.f32 %v2759, 0.0
        %v2805 = vmax.f32 %v2762, 0.0
        %v2806 = vmax.f32 %v2764, 0.0
        %v2807 = vmax.f32 %v2767, 0.0
        %v2808 = vmax.f32 %v2769, 0.0
        %v2809 = vmax.f32 %v2772, 0.0
        %v2810 = vmax.f32 %v2774, 0.0
        %v2811 = vmax.f32 %v2777, 0.0
        %v2812 = vmax.f32 %v2779, 0.0
        %v2813 = vpack.c.bf16 %v2782, %v2781
        %v2814 = vpack.c.bf16 %v2784, %v2783
        %v2815 = vpack.c.bf16 %v2786, %v2785
        %v2816 = vpack.c.bf16 %v2788, %v2787
        %v2817 = vpack.c.bf16 %v2790, %v2789
        %v2818 = vpack.c.bf16 %v2792, %v2791
        %v2819 = vpack.c.bf16 %v2794, %v2793
        %v2820 = vpack.c.bf16 %v2796, %v2795
        %v2821 = vpack.c.bf16 %v2798, %v2797
        %v2822 = vpack.c.bf16 %v2800, %v2799
        %v2823 = vpack.c.bf16 %v2802, %v2801
        %v2824 = vpack.c.bf16 %v2804, %v2803
        %v2825 = vpack.c.bf16 %v2806, %v2805
        %v2826 = vpack.c.bf16 %v2808, %v2807
        %v2827 = vpack.c.bf16 %v2810, %v2809
        %v2828 = vpack.c.bf16 %v2812, %v2811
        %v2829 = vld [vmem:[%s5] sm:$0x3]
        %v2830 = vld [vmem:[%s6] sm:$0x1]
        %v2832 = vperm.slane %v2830, 0
        %v2835 = vsel %vm530, %v2813, 0
        %v2838 = vsel %vm530, %v2814, 0
        %v2841 = vsel %vm530, %v2815, 0
        %v2844 = vsel %vm530, %v2816, 0
        %v2847 = vsel %vm530, %v2817, 0
        %v2850 = vsel %vm530, %v2818, 0
        %v2853 = vsel %vm530, %v2819, 0
        %v2856 = vsel %vm530, %v2820, 0
        %v2859 = vsel %vm530, %v2821, 0
        %v2862 = vsel %vm530, %v2822, 0
        %v2865 = vsel %vm530, %v2823, 0
        %v2868 = vsel %vm530, %v2824, 0
        %v2871 = vsel %vm530, %v2825, 0
        %v2874 = vsel %vm530, %v2826, 0
        %v2877 = vsel %vm530, %v2827, 0
        %v2880 = vsel %vm530, %v2828, 0
        %v2883 = vsel %vm2688, %v2829, 0
        %2885 = vmatpush.bf16.msra.mxu0 0
        %2886 = vmatpush.bf16.msra.mxu0 0
        %2887 = vmatpush.bf16.msra.mxu0 0
        %2888 = vmatpush.bf16.msra.mxu0 0
        %2889 = vmatpush.bf16.msra.mxu0 0
        %2890 = vmatpush.bf16.msra.mxu0 0
        %2891 = vmatpush.bf16.msra.mxu0 0
        %2892 = vmatpush.bf16.msra.mxu0 %v2883
        %2893 = vmatmul.bf16.gmra.mxu0 %v2835
        %v2894 = vpop.f32.mrf.mxu0
        %v2895 = vadd.f32 %v2832, %v2894
        %v2896 = vpop.f32.mrf.mxu0
        %v2897 = vadd.f32 %v2832, %v2896
        %2898 = vmatmul.bf16.gmra.mxu0 %v2838
        %v2899 = vpop.f32.mrf.mxu0
        %v2900 = vadd.f32 %v2832, %v2899
        %v2901 = vpop.f32.mrf.mxu0
        %v2902 = vadd.f32 %v2832, %v2901
        %2903 = vmatmul.bf16.gmra.mxu0 %v2841
        %v2904 = vpop.f32.mrf.mxu0
        %v2905 = vadd.f32 %v2832, %v2904
        %v2906 = vpop.f32.mrf.mxu0
        %v2907 = vadd.f32 %v2832, %v2906
        %2908 = vmatmul.bf16.gmra.mxu0 %v2844
        %v2909 = vpop.f32.mrf.mxu0
        %v2910 = vadd.f32 %v2832, %v2909
        %v2911 = vpop.f32.mrf.mxu0
        %v2912 = vadd.f32 %v2832, %v2911
        %2913 = vmatmul.bf16.gmra.mxu0 %v2847
        %v2914 = vpop.f32.mrf.mxu0
        %v2915 = vadd.f32 %v2832, %v2914
        %v2916 = vpop.f32.mrf.mxu0
        %v2917 = vadd.f32 %v2832, %v2916
        %2918 = vmatmul.bf16.gmra.mxu0 %v2850
        %v2919 = vpop.f32.mrf.mxu0
        %v2920 = vadd.f32 %v2832, %v2919
        %v2921 = vpop.f32.mrf.mxu0
        %v2922 = vadd.f32 %v2832, %v2921
        %2923 = vmatmul.bf16.gmra.mxu0 %v2853
        %v2924 = vpop.f32.mrf.mxu0
        %v2925 = vadd.f32 %v2832, %v2924
        %v2926 = vpop.f32.mrf.mxu0
        %v2927 = vadd.f32 %v2832, %v2926
        %2928 = vmatmul.bf16.gmra.mxu0 %v2856
        %v2929 = vpop.f32.mrf.mxu0
        %v2930 = vadd.f32 %v2832, %v2929
        %v2931 = vpop.f32.mrf.mxu0
        %v2932 = vadd.f32 %v2832, %v2931
        %2933 = vmatmul.bf16.gmra.mxu0 %v2859
        %v2934 = vpop.f32.mrf.mxu0
        %v2935 = vadd.f32 %v2832, %v2934
        %v2936 = vpop.f32.mrf.mxu0
        %v2937 = vadd.f32 %v2832, %v2936
        %2938 = vmatmul.bf16.gmra.mxu0 %v2862
        %v2939 = vpop.f32.mrf.mxu0
        %v2940 = vadd.f32 %v2832, %v2939
        %v2941 = vpop.f32.mrf.mxu0
        %v2942 = vadd.f32 %v2832, %v2941
        %2943 = vmatmul.bf16.gmra.mxu0 %v2865
        %v2944 = vpop.f32.mrf.mxu0
        %v2945 = vadd.f32 %v2832, %v2944
        %v2946 = vpop.f32.mrf.mxu0
        %v2947 = vadd.f32 %v2832, %v2946
        %2948 = vmatmul.bf16.gmra.mxu0 %v2868
        %v2949 = vpop.f32.mrf.mxu0
        %v2950 = vadd.f32 %v2832, %v2949
        %v2951 = vpop.f32.mrf.mxu0
        %v2952 = vadd.f32 %v2832, %v2951
        %2953 = vmatmul.bf16.gmra.mxu0 %v2871
        %v2954 = vpop.f32.mrf.mxu0
        %v2955 = vadd.f32 %v2832, %v2954
        %v2956 = vpop.f32.mrf.mxu0
        %v2957 = vadd.f32 %v2832, %v2956
        %2958 = vmatmul.bf16.gmra.mxu0 %v2874
        %v2959 = vpop.f32.mrf.mxu0
        %v2960 = vadd.f32 %v2832, %v2959
        %v2961 = vpop.f32.mrf.mxu0
        %v2962 = vadd.f32 %v2832, %v2961
        %2963 = vmatmul.bf16.gmra.mxu0 %v2877
        %v2964 = vpop.f32.mrf.mxu0
        %v2965 = vadd.f32 %v2832, %v2964
        %v2966 = vpop.f32.mrf.mxu0
        %v2967 = vadd.f32 %v2832, %v2966
        %2968 = vmatmul.bf16.gmra.mxu0 %v2880
        %v2969 = vpop.f32.mrf.mxu0
        %v2970 = vadd.f32 %v2832, %v2969
        %v2971 = vpop.f32.mrf.mxu0
        %v2972 = vadd.f32 %v2832, %v2971
        %2973 = vdwg.mxu0
        %v2974 = vld [vmem:[%s267] sm:$0xff]
        %v2975 = vld [vmem:[%s267 + $0x8] sm:$0xff]
        %v2976 = vld [vmem:[%s267 + $0x10] sm:$0xff]
        %v2977 = vld [vmem:[%s267 + $0x18] sm:$0xff]
        %v2978 = vld [vmem:[%s267 + $0x20] sm:$0xff]
        %v2979 = vld [vmem:[%s267 + $0x28] sm:$0xff]
        %v2980 = vld [vmem:[%s267 + $0x30] sm:$0xff]
        %v2981 = vld [vmem:[%s267 + $0x38] sm:$0xff]
        %v2982 = vld [vmem:[%s267 + $0x40] sm:$0xff]
        %v2983 = vld [vmem:[%s267 + $0x48] sm:$0xff]
        %v2984 = vld [vmem:[%s267 + $0x50] sm:$0xff]
        %v2985 = vld [vmem:[%s267 + $0x58] sm:$0xff]
        %v2986 = vld [vmem:[%s267 + $0x60] sm:$0xff]
        %v2987 = vld [vmem:[%s267 + $0x68] sm:$0xff]
        %v2988 = vld [vmem:[%s267 + $0x70] sm:$0xff]
        %v2989 = vld [vmem:[%s267 + $0x78] sm:$0xff]
        %v2990 = vld [vmem:[%s267 + $0x80] sm:$0xff]
        %v2991 = vld [vmem:[%s267 + $0x88] sm:$0xff]
        %v2992 = vld [vmem:[%s267 + $0x90] sm:$0xff]
        %v2993 = vld [vmem:[%s267 + $0x98] sm:$0xff]
        %v2994 = vld [vmem:[%s267 + $0xa0] sm:$0xff]
        %v2995 = vld [vmem:[%s267 + $0xa8] sm:$0xff]
        %v2996 = vld [vmem:[%s267 + $0xb0] sm:$0xff]
        %v2997 = vld [vmem:[%s267 + $0xb8] sm:$0xff]
        %v2998 = vld [vmem:[%s267 + $0xc0] sm:$0xff]
        %v2999 = vld [vmem:[%s267 + $0xc8] sm:$0xff]
        %v3000 = vld [vmem:[%s267 + $0xd0] sm:$0xff]
        %v3001 = vld [vmem:[%s267 + $0xd8] sm:$0xff]
        %v3002 = vld [vmem:[%s267 + $0xe0] sm:$0xff]
        %v3003 = vld [vmem:[%s267 + $0xe8] sm:$0xff]
        %v3004 = vld [vmem:[%s267 + $0xf0] sm:$0xff]
        %v3005 = vld [vmem:[%s267 + $0xf8] sm:$0xff]
        %v3006 = vadd.f32 %v2895, %v2974
        %v3007 = vadd.f32 %v2897, %v2975
        %v3008 = vadd.f32 %v2900, %v2976
        %v3009 = vadd.f32 %v2902, %v2977
        %v3010 = vadd.f32 %v2905, %v2978
        %v3011 = vadd.f32 %v2907, %v2979
        %v3012 = vadd.f32 %v2910, %v2980
        %v3013 = vadd.f32 %v2912, %v2981
        %v3014 = vadd.f32 %v2915, %v2982
        %v3015 = vadd.f32 %v2917, %v2983
        %v3016 = vadd.f32 %v2920, %v2984
        %v3017 = vadd.f32 %v2922, %v2985
        %v3018 = vadd.f32 %v2925, %v2986
        %v3019 = vadd.f32 %v2927, %v2987
        %v3020 = vadd.f32 %v2930, %v2988
        %v3021 = vadd.f32 %v2932, %v2989
        %v3022 = vadd.f32 %v2935, %v2990
        %v3023 = vadd.f32 %v2937, %v2991
        %v3024 = vadd.f32 %v2940, %v2992
        %v3025 = vadd.f32 %v2942, %v2993
        %v3026 = vadd.f32 %v2945, %v2994
        %v3027 = vadd.f32 %v2947, %v2995
        %v3028 = vadd.f32 %v2950, %v2996
        %v3029 = vadd.f32 %v2952, %v2997
        %v3030 = vadd.f32 %v2955, %v2998
        %v3031 = vadd.f32 %v2957, %v2999
        %v3032 = vadd.f32 %v2960, %v3000
        %v3033 = vadd.f32 %v2962, %v3001
        %v3034 = vadd.f32 %v2965, %v3002
        %v3035 = vadd.f32 %v2967, %v3003
        %v3036 = vadd.f32 %v2970, %v3004
        %v3037 = vadd.f32 %v2972, %v3005
        %v3038 = vmax.f32 %v3006, 0.0
        %v3039 = vmax.f32 %v3007, 0.0
        %v3040 = vmax.f32 %v3008, 0.0
        %v3041 = vmax.f32 %v3009, 0.0
        %v3042 = vmax.f32 %v3010, 0.0
        %v3043 = vmax.f32 %v3011, 0.0
        %v3044 = vmax.f32 %v3012, 0.0
        %v3045 = vmax.f32 %v3013, 0.0
        %v3046 = vmax.f32 %v3014, 0.0
        %v3047 = vmax.f32 %v3015, 0.0
        %v3048 = vmax.f32 %v3016, 0.0
        %v3049 = vmax.f32 %v3017, 0.0
        %v3050 = vmax.f32 %v3018, 0.0
        %v3051 = vmax.f32 %v3019, 0.0
        %v3052 = vmax.f32 %v3020, 0.0
        %v3053 = vmax.f32 %v3021, 0.0
        %v3054 = vmax.f32 %v3022, 0.0
        %v3055 = vmax.f32 %v3023, 0.0
        %v3056 = vmax.f32 %v3024, 0.0
        %v3057 = vmax.f32 %v3025, 0.0
        %v3058 = vmax.f32 %v3026, 0.0
        %v3059 = vmax.f32 %v3027, 0.0
        %v3060 = vmax.f32 %v3028, 0.0
        %v3061 = vmax.f32 %v3029, 0.0
        %v3062 = vmax.f32 %v3030, 0.0
        %v3063 = vmax.f32 %v3031, 0.0
        %v3064 = vmax.f32 %v3032, 0.0
        %v3065 = vmax.f32 %v3033, 0.0
        %v3066 = vmax.f32 %v3034, 0.0
        %v3067 = vmax.f32 %v3035, 0.0
        %v3068 = vmax.f32 %v3036, 0.0
        %v3069 = vmax.f32 %v3037, 0.0
        %3070 = vst.msk [vmem:[%s298] sm:$0xff] %vm360, %v3038
        %3071 = vst.msk [vmem:[%s298 + $0x8] sm:$0xff] %vm360, %v3039
        %3072 = vst.msk [vmem:[%s298 + $0x10] sm:$0xff] %vm360, %v3040
        %3073 = vst.msk [vmem:[%s298 + $0x18] sm:$0xff] %vm360, %v3041
        %3074 = vst.msk [vmem:[%s298 + $0x20] sm:$0xff] %vm360, %v3042
        %3075 = vst.msk [vmem:[%s298 + $0x28] sm:$0xff] %vm360, %v3043
        %3076 = vst.msk [vmem:[%s298 + $0x30] sm:$0xff] %vm360, %v3044
        %3077 = vst.msk [vmem:[%s298 + $0x38] sm:$0xff] %vm360, %v3045
        %3078 = vst.msk [vmem:[%s298 + $0x40] sm:$0xff] %vm360, %v3046
        %3079 = vst.msk [vmem:[%s298 + $0x48] sm:$0xff] %vm360, %v3047
        %3080 = vst.msk [vmem:[%s298 + $0x50] sm:$0xff] %vm360, %v3048
        %3081 = vst.msk [vmem:[%s298 + $0x58] sm:$0xff] %vm360, %v3049
        %3082 = vst.msk [vmem:[%s298 + $0x60] sm:$0xff] %vm360, %v3050
        %3083 = vst.msk [vmem:[%s298 + $0x68] sm:$0xff] %vm360, %v3051
        %3084 = vst.msk [vmem:[%s298 + $0x70] sm:$0xff] %vm360, %v3052
        %3085 = vst.msk [vmem:[%s298 + $0x78] sm:$0xff] %vm360, %v3053
        %3086 = vst.msk [vmem:[%s298 + $0x80] sm:$0xff] %vm360, %v3054
        %3087 = vst.msk [vmem:[%s298 + $0x88] sm:$0xff] %vm360, %v3055
        %3088 = vst.msk [vmem:[%s298 + $0x90] sm:$0xff] %vm360, %v3056
        %3089 = vst.msk [vmem:[%s298 + $0x98] sm:$0xff] %vm360, %v3057
        %3090 = vst.msk [vmem:[%s298 + $0xa0] sm:$0xff] %vm360, %v3058
        %3091 = vst.msk [vmem:[%s298 + $0xa8] sm:$0xff] %vm360, %v3059
        %3092 = vst.msk [vmem:[%s298 + $0xb0] sm:$0xff] %vm360, %v3060
        %3093 = vst.msk [vmem:[%s298 + $0xb8] sm:$0xff] %vm360, %v3061
        %3094 = vst.msk [vmem:[%s298 + $0xc0] sm:$0xff] %vm360, %v3062
        %3095 = vst.msk [vmem:[%s298 + $0xc8] sm:$0xff] %vm360, %v3063
        %3096 = vst.msk [vmem:[%s298 + $0xd0] sm:$0xff] %vm360, %v3064
        %3097 = vst.msk [vmem:[%s298 + $0xd8] sm:$0xff] %vm360, %v3065
        %3098 = vst.msk [vmem:[%s298 + $0xe0] sm:$0xff] %vm360, %v3066
        %3099 = vst.msk [vmem:[%s298 + $0xe8] sm:$0xff] %vm360, %v3067
        %3100 = vst.msk [vmem:[%s298 + $0xf0] sm:$0xff] %vm360, %v3068
        %3101 = vst.msk [vmem:[%s298 + $0xf8] sm:$0xff] %vm360, %v3069
        %s3102 = sand.u32 %s184, 1
        %s3103 = scalar_lea.sflag [#allocation6], %s3102
        %s3104 = sand.u32 %s184, 1
        %s3105 = smul.addr %s3104, 256
        %s3106 = scalar_lea.vmem [#allocation7], %s3105
        // Predicated region
        $region53: #{tpu_custom_call.1} parent=47 // pred_check
          %p3107 = pneg %p194
        $region54: #{tpu_custom_call.1} parent=47 // pred_check_branch
          %3109 = sbr.rel (%p3107) target = $region56
        $region55: #{tpu_custom_call.1} parent=47 // pred_region
          %3111 = vsyncadd %s3103, 0
          %s3112 = smul.addr %s24, 32
          %s3113 = smul.addr %s3112, 8
          %s3114 = scalar_lea.hbm %s7, %s3113
          %s3115 = sshll.u32 %s3106, 4
          %s3116 = int_to_ptr.vmem [resolvable:$true] %s3115
          %s3117 = sshll.u32 %s3114, 4
          %s3118 = int_to_ptr.hbm [resolvable:$true] %s3117
          %3123 = dma.vmem_to_hbm [thread:$0]  %s3116, 4096, %s3118, %s3103, 128, 128, 8
        $region56: #{tpu_custom_call.1} parent=47 // pred_fallthru
          _
      $region48: #{tpu_custom_call.1} parent=5 // pred_fallthru
        _
      %p3124 = scmp.le.s32.totalorder 2, %s19
      // Predicated region
      $region57: #{tpu_custom_call.1} parent=5 // pred_check
        %p3125 = pneg %p3124
      $region58: #{tpu_custom_call.1} parent=5 // pred_check_branch
        %3127 = sbr.rel (%p3125) target = $region60
      $region59: #{tpu_custom_call.1} parent=5 // pred_region
        %s3128 = ssub.s32 %s19, 2
        // Predicated region
        $region61: #{tpu_custom_call.1} parent=59 // pred_check
          %p3129 = pneg %p200
        $region62: #{tpu_custom_call.1} parent=59 // pred_check_branch
          %3131 = sbr.rel (%p3129) target = $region64
        $region63: #{tpu_custom_call.1} parent=59 // pred_region
          %s3132 = sand.u32 %s185, 1
          %s3133 = scalar_lea.sflag [#allocation6], %s3132
          %s3134 = sand.u32 %s185, 1
          %s3135 = smul.addr %s3134, 256
          %s3136 = scalar_lea.vmem [#allocation7], %s3135
          %3138 = dma.done %s3133, 4096
        $region64: #{tpu_custom_call.1} parent=59 // pred_fallthru
          _
      $region60: #{tpu_custom_call.1} parent=5 // pred_fallthru
        _
    $region6: #{tpu_custom_call.1} parent=1 // loop_footer
      %s23 = sadd.s32 1, %s19
    $region7: #{tpu_custom_call.1} parent=1 // loop_footer_branch
      %18 = sbr.rel target = $region3
    $region8: #{tpu_custom_call.1} parent=1 // loop_exit
      _
    %3139 = vsyncpa [#allocation5], 1
    %s3140 = scalar_lea.sflag [#allocation5], 1
    %3141 = vsyncpa %s3140, 1
    %3142 = vsyncpa [#allocation6], 1
    %s3143 = scalar_lea.sflag [#allocation6], 1
    %3144 = vsyncpa %s3143, 1

</llo_original>
